<compile_context>
chip_gen: v7x
topology: tpu7x:2x2x1
jax: 0.10.0
libtpu: 0.0.40
codegen_flags: <defaults>
</compile_context>

<pallas_src>
import functools

import jax
import jax.numpy as jnp
from jax.experimental import pallas as pl
from jax.experimental.pallas import tpu as pltpu


def _round_up(x, m):
    return (x + m - 1) // m * m


# ----------------------------- Pallas kernels ------------------------------

def _matmul_bias_act_kernel(a_ref, w_ref, b_ref, o_ref, *, relu):
    """o = act(a @ w + b): bf16 operands, f32 MXU accumulate, f32 epilogue."""
    acc = jnp.dot(a_ref[...], w_ref[...], preferred_element_type=jnp.float32)
    acc = acc + b_ref[...]                     # (1, N) f32 bias, VPU broadcast
    if relu:
        acc = jnp.maximum(acc, 0.0)
    o_ref[...] = acc.astype(o_ref.dtype)


def matmul_bias_act(a, w, b, *, relu, out_dtype, tile_m=512):
    """act(a @ w + b) tiled over M (rows = B*Ho*Wo).

    a: (M, K) bf16, w: (K, N) bf16, b: (N,) f32.
    K and N stay whole per block (K<=2048, N<=256 for this model); only M is
    tiled so BlockSpec double-buffering overlaps the A-tile DMA with the MXU
    and v7x's two TensorCores split the grid.
    """
    M, K = a.shape
    K2, N = w.shape
    assert K == K2
    tm = min(tile_m, _round_up(M, 8))
    M_pad = _round_up(M, tm)
    if M_pad != M:
        a = jnp.pad(a, ((0, M_pad - M), (0, 0)))
    out = pl.pallas_call(
        functools.partial(_matmul_bias_act_kernel, relu=relu),
        out_shape=jax.ShapeDtypeStruct((M_pad, N), out_dtype),
        grid=(M_pad // tm,),
        in_specs=[
            pl.BlockSpec((tm, K), lambda i: (i, 0)),
            pl.BlockSpec((K, N), lambda i: (0, 0)),
            pl.BlockSpec((1, N), lambda i: (0, 0)),
        ],
        out_specs=pl.BlockSpec((tm, N), lambda i: (i, 0)),
        compiler_params=pltpu.CompilerParams(
            dimension_semantics=("parallel",),
            vmem_limit_bytes=32 * 1024 * 1024),
    )(a, w, b.reshape(1, N))
    return out[:M] if M_pad != M else out


def _head_kernel(x_ref, w_ref, b_ref, eps_ref, mu_ref, sig_ref, lat_ref, *,
                 latent):
    """Fused linear_mu+linear_sigma (single concatenated matmul) + reparam."""
    y = jnp.dot(x_ref[...], w_ref[...], preferred_element_type=jnp.float32)
    y = y + b_ref[...]
    mu = y[:, :latent]
    sig = y[:, latent:]
    lat = mu + eps_ref[...] * jnp.exp(0.5 * sig)
    mu_ref[...] = mu.astype(mu_ref.dtype)
    sig_ref[...] = sig.astype(sig_ref.dtype)
    lat_ref[...] = lat.astype(lat_ref.dtype)


def vae_head(x, w_head, b_head, eps, *, tile_b=256):
    """x: (B,F) bf16, w_head: (F, 2L) bf16, b_head: (2L,) f32, eps: (B,L) f32."""
    B, F = x.shape
    F2, N2 = w_head.shape
    assert F == F2
    L = N2 // 2
    tb = min(tile_b, _round_up(B, 8))
    B_pad = _round_up(B, tb)
    if B_pad != B:
        x = jnp.pad(x, ((0, B_pad - B), (0, 0)))
        eps = jnp.pad(eps, ((0, B_pad - B), (0, 0)))
    out_sds = jax.ShapeDtypeStruct((B_pad, L), jnp.float32)
    mu, sig, lat = pl.pallas_call(
        functools.partial(_head_kernel, latent=L),
        out_shape=(out_sds, out_sds, out_sds),
        grid=(B_pad // tb,),
        in_specs=[
            pl.BlockSpec((tb, F), lambda i: (i, 0)),
            pl.BlockSpec((F, N2), lambda i: (0, 0)),
            pl.BlockSpec((1, N2), lambda i: (0, 0)),
            pl.BlockSpec((tb, L), lambda i: (i, 0)),
        ],
        out_specs=(
            pl.BlockSpec((tb, L), lambda i: (i, 0)),
            pl.BlockSpec((tb, L), lambda i: (i, 0)),
            pl.BlockSpec((tb, L), lambda i: (i, 0)),
        ),
        compiler_params=pltpu.CompilerParams(
            dimension_semantics=("parallel",),
            vmem_limit_bytes=32 * 1024 * 1024),
    )(x, w_head, b_head.reshape(1, N2), eps)
    if B_pad != B:
        mu, sig, lat = mu[:B], sig[:B], lat[:B]
    return mu, sig, lat


# ------------------------------- JAX glue -----------------------------------

def im2col_nhwc(x, k=4, s=2):
    """x: (B,H,W,C) NHWC -> (B*Ho*Wo, k*k*C), feature order (kh, kw, c)."""
    B, H, W, C = x.shape
    Ho = (H - k) // s + 1
    Wo = (W - k) // s + 1
    cols = []
    for i in range(k):
        for j in range(k):
            cols.append(x[:, i:i + s * Ho:s, j:j + s * Wo:s, :])  # (B,Ho,Wo,C)
    p = jnp.concatenate(cols, axis=-1)                # (B, Ho, Wo, k*k*C)
    return p.reshape(B * Ho * Wo, k * k * C), Ho, Wo


def init_params(key, input_channel=3, content_latent_size=32,
                flatten_size=1024):
    """Parameters in PyTorch layout: conv (Cout,Cin,4,4), linear (out,in)."""
    keys = jax.random.split(key, 12)

    def conv_p(k1, k2, cin, cout):
        scale = 1.0 / jnp.sqrt(cin * 16.0)
        w = jax.random.uniform(k1, (cout, cin, 4, 4), jnp.float32, -scale, scale)
        b = jax.random.uniform(k2, (cout,), jnp.float32, -scale, scale)
        return w, b

    def lin_p(k1, k2, fin, fout):
        scale = 1.0 / jnp.sqrt(float(fin))
        w = jax.random.uniform(k1, (fout, fin), jnp.float32, -scale, scale)
        b = jax.random.uniform(k2, (fout,), jnp.float32, -scale, scale)
        return w, b

    return {
        "conv1": conv_p(keys[0], keys[1], input_channel, 32),
        "conv2": conv_p(keys[2], keys[3], 32, 64),
        "conv3": conv_p(keys[4], keys[5], 64, 128),
        "conv4": conv_p(keys[6], keys[7], 128, 256),
        "mu": lin_p(keys[8], keys[9], flatten_size, content_latent_size),
        "sigma": lin_p(keys[10], keys[11], flatten_size, content_latent_size),
    }


def prepare_params(params, *, final_hw=(2, 2)):
    """One-time (outside hot path) conversion from PyTorch layout:
      * conv weights -> (kh*kw*Cin, Cout), bf16, row order (kh, kw, cin)
        matching the NHWC im2col feature order.
      * head weights -> rows permuted from NCHW-flatten order (c,h,w) to
        NHWC-flatten order (h,w,c), mu/sigma concatenated into one (F, 2L)
        matrix, bf16.  Biases stay f32.
    """
    convs = []
    for name in ("conv1", "conv2", "conv3", "conv4"):
        w, b = params[name]
        cout, cin, kh, kw = w.shape
        wk = jnp.transpose(w, (2, 3, 1, 0)).reshape(kh * kw * cin, cout)
        convs.append((wk.astype(jnp.bfloat16), b.astype(jnp.float32)))

    hh, ww = final_hw

    def permute_head(w):                       # w: (L, F), PyTorch (out, in)
        L, F = w.shape
        c = F // (hh * ww)
        wt = w.T.reshape(c, hh, ww, L)         # rows were (c, h, w)
        return wt.transpose(1, 2, 0, 3).reshape(F, L)   # rows now (h, w, c)

    w_mu, b_mu = params["mu"]
    w_sig, b_sig = params["sigma"]
    w_head = jnp.concatenate([permute_head(w_mu), permute_head(w_sig)], axis=1)
    b_head = jnp.concatenate([b_mu, b_sig], axis=0)
    return {
        "convs": convs,
        "w_head": w_head.astype(jnp.bfloat16),
        "b_head": b_head.astype(jnp.float32),
    }


def encoder_forward(kparams, x_nchw, eps):
    # Single layout change at the module boundary (PyTorch input is NCHW);
    # everything downstream stays NHWC — no per-layer transposes.
    h = jnp.transpose(x_nchw, (0, 2, 3, 1)).astype(jnp.bfloat16)
    B = h.shape[0]
    for w, b in kparams["convs"]:
        p, Ho, Wo = im2col_nhwc(h, 4, 2)
        y = matmul_bias_act(p, w, b, relu=True, out_dtype=jnp.bfloat16)
        h = y.reshape(B, Ho, Wo, w.shape[1])
    x_flat = h.reshape(B, -1)   # NHWC flatten; head weight rows permuted to match
    # TODO(synk): torch.randn_like inside reparameterize is replaced by an
    # explicit deterministic eps input (could use pltpu.prng_random_bits).
    return vae_head(x_flat, kparams["w_head"], kparams["b_head"], eps)


# --------------------------------- main --------------------------------------

if __name__ == "__main__":
    key = jax.random.PRNGKey(0)
    kx, kp, keps = jax.random.split(key, 3)

    B, C, H, W = 2, 3, 64, 64          # 64x64 input -> flatten_size 1024
    content_latent_size = 32

    x = jax.random.normal(kx, (B, C, H, W), jnp.float32)
    params = init_params(kp, input_channel=C,
                         content_latent_size=content_latent_size,
                         flatten_size=1024)
    eps = jax.random.normal(keps, (B, content_latent_size), jnp.float32)

    kparams = prepare_params(params, final_hw=(2, 2))  # once, outside hot path

    fwd = jax.jit(encoder_forward)
    mu, sigma, latent = fwd(kparams, x, eps)
    jax.block_until_ready((mu, sigma, latent))

    assert mu.shape == (B, content_latent_size)
    assert sigma.shape == (B, content_latent_size)
    assert latent.shape == (B, content_latent_size)
    assert bool(jnp.all(jnp.isfinite(mu)))
    assert bool(jnp.all(jnp.isfinite(sigma)))
    assert bool(jnp.all(jnp.isfinite(latent)))
    print("KERNEL_OK")
</pallas_src>

<mosaic_0001>
module attributes {stable_mosaic.version = 11 : i64} {
  func.func @_matmul_bias_act_kernel(%arg0: i32, %arg1: memref<512x48xbf16, #tpu.memory_space<vmem>>, %arg2: memref<48x32xbf16, #tpu.memory_space<vmem>>, %arg3: memref<1x32xf32, #tpu.memory_space<vmem>>, %arg4: memref<512x32xbf16, #tpu.memory_space<vmem>>) attributes {dimension_semantics = [#tpu.dimension_semantics<parallel>], iteration_bounds = array<i64: 4>, scalar_prefetch = 0 : i64, scratch_operands = 0 : i64, tpu.core_type = #tpu.core_type<tc>, window_params = [{transform_indices = @transform_0, window_bounds = array<i64: 512, 48>}, {pipeline_mode = #tpu.pipeline_mode<synchronous>, transform_indices = @transform_1, window_bounds = array<i64: 48, 32>}, {pipeline_mode = #tpu.pipeline_mode<synchronous>, transform_indices = @transform_2, window_bounds = array<i64: 1, 32>}, {transform_indices = @transform_3, window_bounds = array<i64: 512, 32>}]} {
    %c0 = arith.constant 0 : index
    %c0_0 = arith.constant 0 : index
    %0 = vector.load %arg1[%c0, %c0_0] : memref<512x48xbf16, #tpu.memory_space<vmem>>, vector<512x48xbf16>
    %c0_1 = arith.constant 0 : index
    %c0_2 = arith.constant 0 : index
    %1 = vector.load %arg2[%c0_1, %c0_2] : memref<48x32xbf16, #tpu.memory_space<vmem>>, vector<48x32xbf16>
    %cst = arith.constant dense<0.000000e+00> : vector<512x32xf32>
    %2 = tpu.matmul %0, %1, %cst {dimension_numbers = #tpu.dot_dimension_numbers<[1], [0], [0], [1], [0, 0, 1, 1], [], []>} : vector<512x48xbf16>, vector<48x32xbf16>, vector<512x32xf32> -> vector<512x32xf32>
    %c0_3 = arith.constant 0 : index
    %c0_4 = arith.constant 0 : index
    %3 = vector.load %arg3[%c0_3, %c0_4] : memref<1x32xf32, #tpu.memory_space<vmem>>, vector<1x32xf32>
    %4 = vector.broadcast %3 : vector<1x32xf32> to vector<512x32xf32>
    %5 = arith.addf %2, %4 : vector<512x32xf32>
    %cst_5 = arith.constant 0.000000e+00 : f32
    %6 = vector.broadcast %cst_5 : f32 to vector<512x32xf32>
    %7 = arith.maximumf %5, %6 : vector<512x32xf32>
    %8 = arith.truncf %7 : vector<512x32xf32> to vector<512x32xbf16>
    %c0_6 = arith.constant 0 : index
    %c0_7 = arith.constant 0 : index
    %9 = vector.load %arg4[%c0_6, %c0_7] : memref<512x32xbf16, #tpu.memory_space<vmem>>, vector<512x32xbf16>
    tpu.vector_store %arg4[%c0_6, %c0_7], %8 {strides = array<i32>} : memref<512x32xbf16, #tpu.memory_space<vmem>>, vector<512x32xbf16>,
    return
  }
  func.func @transform_0(%arg0: i32) -> (i32, i32) {
    %c0_i32 = arith.constant 0 : i32
    %c0_i32_0 = arith.constant 0 : i32
    return %arg0, %c0_i32 : i32, i32
  }
  func.func @transform_1(%arg0: i32) -> (i32, i32) {
    %c0_i32 = arith.constant 0 : i32
    %c0_i32_0 = arith.constant 0 : i32
    %c0_i32_1 = arith.constant 0 : i32
    return %c0_i32, %c0_i32_0 : i32, i32
  }
  func.func @transform_2(%arg0: i32) -> (i32, i32) {
    %c0_i32 = arith.constant 0 : i32
    %c0_i32_0 = arith.constant 0 : i32
    %c0_i32_1 = arith.constant 0 : i32
    return %c0_i32, %c0_i32_0 : i32, i32
  }
  func.func @transform_3(%arg0: i32) -> (i32, i32) {
    %c0_i32 = arith.constant 0 : i32
    %c0_i32_0 = arith.constant 0 : i32
    return %arg0, %c0_i32 : i32, i32
  }
}

module attributes {stable_mosaic.version = 11 : i64} {
  func.func @_matmul_bias_act_kernel(%arg0: i32, %arg1: memref<392x512xbf16, #tpu.memory_space<vmem>>, %arg2: memref<512x64xbf16, #tpu.memory_space<vmem>>, %arg3: memref<1x64xf32, #tpu.memory_space<vmem>>, %arg4: memref<392x64xbf16, #tpu.memory_space<vmem>>) attributes {dimension_semantics = [#tpu.dimension_semantics<parallel>], iteration_bounds = array<i64: 1>, scalar_prefetch = 0 : i64, scratch_operands = 0 : i64, tpu.core_type = #tpu.core_type<tc>, window_params = [{transform_indices = @transform_0, window_bounds = array<i64: 392, 512>}, {pipeline_mode = #tpu.pipeline_mode<synchronous>, transform_indices = @transform_1, window_bounds = array<i64: 512, 64>}, {pipeline_mode = #tpu.pipeline_mode<synchronous>, transform_indices = @transform_2, window_bounds = array<i64: 1, 64>}, {transform_indices = @transform_3, window_bounds = array<i64: 392, 64>}]} {
    %c0 = arith.constant 0 : index
    %c0_0 = arith.constant 0 : index
    %0 = vector.load %arg1[%c0, %c0_0] : memref<392x512xbf16, #tpu.memory_space<vmem>>, vector<392x512xbf16>
    %c0_1 = arith.constant 0 : index
    %c0_2 = arith.constant 0 : index
    %1 = vector.load %arg2[%c0_1, %c0_2] : memref<512x64xbf16, #tpu.memory_space<vmem>>, vector<512x64xbf16>
    %cst = arith.constant dense<0.000000e+00> : vector<392x64xf32>
    %2 = tpu.matmul %0, %1, %cst {dimension_numbers = #tpu.dot_dimension_numbers<[1], [0], [0], [1], [0, 0, 1, 1], [], []>} : vector<392x512xbf16>, vector<512x64xbf16>, vector<392x64xf32> -> vector<392x64xf32>
    %c0_3 = arith.constant 0 : index
    %c0_4 = arith.constant 0 : index
    %3 = vector.load %arg3[%c0_3, %c0_4] : memref<1x64xf32, #tpu.memory_space<vmem>>, vector<1x64xf32>
    %4 = vector.broadcast %3 : vector<1x64xf32> to vector<392x64xf32>
    %5 = arith.addf %2, %4 : vector<392x64xf32>
    %cst_5 = arith.constant 0.000000e+00 : f32
    %6 = vector.broadcast %cst_5 : f32 to vector<392x64xf32>
    %7 = arith.maximumf %5, %6 : vector<392x64xf32>
    %8 = arith.truncf %7 : vector<392x64xf32> to vector<392x64xbf16>
    %c0_6 = arith.constant 0 : index
    %c0_7 = arith.constant 0 : index
    %9 = vector.load %arg4[%c0_6, %c0_7] : memref<392x64xbf16, #tpu.memory_space<vmem>>, vector<392x64xbf16>
    tpu.vector_store %arg4[%c0_6, %c0_7], %8 {strides = array<i32>} : memref<392x64xbf16, #tpu.memory_space<vmem>>, vector<392x64xbf16>,
    return
  }
  func.func @transform_0(%arg0: i32) -> (i32, i32) {
    %c0_i32 = arith.constant 0 : i32
    %c0_i32_0 = arith.constant 0 : i32
    return %arg0, %c0_i32 : i32, i32
  }
  func.func @transform_1(%arg0: i32) -> (i32, i32) {
    %c0_i32 = arith.constant 0 : i32
    %c0_i32_0 = arith.constant 0 : i32
    %c0_i32_1 = arith.constant 0 : i32
    return %c0_i32, %c0_i32_0 : i32, i32
  }
  func.func @transform_2(%arg0: i32) -> (i32, i32) {
    %c0_i32 = arith.constant 0 : i32
    %c0_i32_0 = arith.constant 0 : i32
    %c0_i32_1 = arith.constant 0 : i32
    return %c0_i32, %c0_i32_0 : i32, i32
  }
  func.func @transform_3(%arg0: i32) -> (i32, i32) {
    %c0_i32 = arith.constant 0 : i32
    %c0_i32_0 = arith.constant 0 : i32
    return %arg0, %c0_i32 : i32, i32
  }
}

module attributes {stable_mosaic.version = 11 : i64} {
  func.func @_matmul_bias_act_kernel(%arg0: i32, %arg1: memref<72x1024xbf16, #tpu.memory_space<vmem>>, %arg2: memref<1024x128xbf16, #tpu.memory_space<vmem>>, %arg3: memref<1x128xf32, #tpu.memory_space<vmem>>, %arg4: memref<72x128xbf16, #tpu.memory_space<vmem>>) attributes {dimension_semantics = [#tpu.dimension_semantics<parallel>], iteration_bounds = array<i64: 1>, scalar_prefetch = 0 : i64, scratch_operands = 0 : i64, tpu.core_type = #tpu.core_type<tc>, window_params = [{transform_indices = @transform_0, window_bounds = array<i64: 72, 1024>}, {pipeline_mode = #tpu.pipeline_mode<synchronous>, transform_indices = @transform_1, window_bounds = array<i64: 1024, 128>}, {pipeline_mode = #tpu.pipeline_mode<synchronous>, transform_indices = @transform_2, window_bounds = array<i64: 1, 128>}, {transform_indices = @transform_3, window_bounds = array<i64: 72, 128>}]} {
    %c0 = arith.constant 0 : index
    %c0_0 = arith.constant 0 : index
    %0 = vector.load %arg1[%c0, %c0_0] : memref<72x1024xbf16, #tpu.memory_space<vmem>>, vector<72x1024xbf16>
    %c0_1 = arith.constant 0 : index
    %c0_2 = arith.constant 0 : index
    %1 = vector.load %arg2[%c0_1, %c0_2] : memref<1024x128xbf16, #tpu.memory_space<vmem>>, vector<1024x128xbf16>
    %cst = arith.constant dense<0.000000e+00> : vector<72x128xf32>
    %2 = tpu.matmul %0, %1, %cst {dimension_numbers = #tpu.dot_dimension_numbers<[1], [0], [0], [1], [0, 0, 1, 1], [], []>} : vector<72x1024xbf16>, vector<1024x128xbf16>, vector<72x128xf32> -> vector<72x128xf32>
    %c0_3 = arith.constant 0 : index
    %c0_4 = arith.constant 0 : index
    %3 = vector.load %arg3[%c0_3, %c0_4] : memref<1x128xf32, #tpu.memory_space<vmem>>, vector<1x128xf32>
    %4 = vector.broadcast %3 : vector<1x128xf32> to vector<72x128xf32>
    %5 = arith.addf %2, %4 : vector<72x128xf32>
    %cst_5 = arith.constant 0.000000e+00 : f32
    %6 = vector.broadcast %cst_5 : f32 to vector<72x128xf32>
    %7 = arith.maximumf %5, %6 : vector<72x128xf32>
    %8 = arith.truncf %7 : vector<72x128xf32> to vector<72x128xbf16>
    %c0_6 = arith.constant 0 : index
    %c0_7 = arith.constant 0 : index
    %9 = vector.load %arg4[%c0_6, %c0_7] : memref<72x128xbf16, #tpu.memory_space<vmem>>, vector<72x128xbf16>
    tpu.vector_store %arg4[%c0_6, %c0_7], %8 {strides = array<i32>} : memref<72x128xbf16, #tpu.memory_space<vmem>>, vector<72x128xbf16>,
    return
  }
  func.func @transform_0(%arg0: i32) -> (i32, i32) {
    %c0_i32 = arith.constant 0 : i32
    %c0_i32_0 = arith.constant 0 : i32
    return %arg0, %c0_i32 : i32, i32
  }
  func.func @transform_1(%arg0: i32) -> (i32, i32) {
    %c0_i32 = arith.constant 0 : i32
    %c0_i32_0 = arith.constant 0 : i32
    %c0_i32_1 = arith.constant 0 : i32
    return %c0_i32, %c0_i32_0 : i32, i32
  }
  func.func @transform_2(%arg0: i32) -> (i32, i32) {
    %c0_i32 = arith.constant 0 : i32
    %c0_i32_0 = arith.constant 0 : i32
    %c0_i32_1 = arith.constant 0 : i32
    return %c0_i32, %c0_i32_0 : i32, i32
  }
  func.func @transform_3(%arg0: i32) -> (i32, i32) {
    %c0_i32 = arith.constant 0 : i32
    %c0_i32_0 = arith.constant 0 : i32
    return %arg0, %c0_i32 : i32, i32
  }
}

module attributes {stable_mosaic.version = 11 : i64} {
  func.func @_matmul_bias_act_kernel(%arg0: i32, %arg1: memref<8x2048xbf16, #tpu.memory_space<vmem>>, %arg2: memref<2048x256xbf16, #tpu.memory_space<vmem>>, %arg3: memref<1x256xf32, #tpu.memory_space<vmem>>, %arg4: memref<8x256xbf16, #tpu.memory_space<vmem>>) attributes {dimension_semantics = [#tpu.dimension_semantics<parallel>], iteration_bounds = array<i64: 1>, scalar_prefetch = 0 : i64, scratch_operands = 0 : i64, tpu.core_type = #tpu.core_type<tc>, window_params = [{transform_indices = @transform_0, window_bounds = array<i64: 8, 2048>}, {pipeline_mode = #tpu.pipeline_mode<synchronous>, transform_indices = @transform_1, window_bounds = array<i64: 2048, 256>}, {pipeline_mode = #tpu.pipeline_mode<synchronous>, transform_indices = @transform_2, window_bounds = array<i64: 1, 256>}, {transform_indices = @transform_3, window_bounds = array<i64: 8, 256>}]} {
    %c0 = arith.constant 0 : index
    %c0_0 = arith.constant 0 : index
    %0 = vector.load %arg1[%c0, %c0_0] : memref<8x2048xbf16, #tpu.memory_space<vmem>>, vector<8x2048xbf16>
    %c0_1 = arith.constant 0 : index
    %c0_2 = arith.constant 0 : index
    %1 = vector.load %arg2[%c0_1, %c0_2] : memref<2048x256xbf16, #tpu.memory_space<vmem>>, vector<2048x256xbf16>
    %cst = arith.constant dense<0.000000e+00> : vector<8x256xf32>
    %2 = tpu.matmul %0, %1, %cst {dimension_numbers = #tpu.dot_dimension_numbers<[1], [0], [0], [1], [0, 0, 1, 1], [], []>} : vector<8x2048xbf16>, vector<2048x256xbf16>, vector<8x256xf32> -> vector<8x256xf32>
    %c0_3 = arith.constant 0 : index
    %c0_4 = arith.constant 0 : index
    %3 = vector.load %arg3[%c0_3, %c0_4] : memref<1x256xf32, #tpu.memory_space<vmem>>, vector<1x256xf32>
    %4 = vector.broadcast %3 : vector<1x256xf32> to vector<8x256xf32>
    %5 = arith.addf %2, %4 : vector<8x256xf32>
    %cst_5 = arith.constant 0.000000e+00 : f32
    %6 = vector.broadcast %cst_5 : f32 to vector<8x256xf32>
    %7 = arith.maximumf %5, %6 : vector<8x256xf32>
    %8 = arith.truncf %7 : vector<8x256xf32> to vector<8x256xbf16>
    %c0_6 = arith.constant 0 : index
    %c0_7 = arith.constant 0 : index
    %9 = vector.load %arg4[%c0_6, %c0_7] : memref<8x256xbf16, #tpu.memory_space<vmem>>, vector<8x256xbf16>
    tpu.vector_store %arg4[%c0_6, %c0_7], %8 {strides = array<i32>} : memref<8x256xbf16, #tpu.memory_space<vmem>>, vector<8x256xbf16>,
    return
  }
  func.func @transform_0(%arg0: i32) -> (i32, i32) {
    %c0_i32 = arith.constant 0 : i32
    %c0_i32_0 = arith.constant 0 : i32
    return %arg0, %c0_i32 : i32, i32
  }
  func.func @transform_1(%arg0: i32) -> (i32, i32) {
    %c0_i32 = arith.constant 0 : i32
    %c0_i32_0 = arith.constant 0 : i32
    %c0_i32_1 = arith.constant 0 : i32
    return %c0_i32, %c0_i32_0 : i32, i32
  }
  func.func @transform_2(%arg0: i32) -> (i32, i32) {
    %c0_i32 = arith.constant 0 : i32
    %c0_i32_0 = arith.constant 0 : i32
    %c0_i32_1 = arith.constant 0 : i32
    return %c0_i32, %c0_i32_0 : i32, i32
  }
  func.func @transform_3(%arg0: i32) -> (i32, i32) {
    %c0_i32 = arith.constant 0 : i32
    %c0_i32_0 = arith.constant 0 : i32
    return %arg0, %c0_i32 : i32, i32
  }
}

module attributes {stable_mosaic.version = 11 : i64} {
  func.func @_head_kernel(%arg0: i32, %arg1: memref<8x1024xbf16, #tpu.memory_space<vmem>>, %arg2: memref<1024x64xbf16, #tpu.memory_space<vmem>>, %arg3: memref<1x64xf32, #tpu.memory_space<vmem>>, %arg4: memref<8x32xf32, #tpu.memory_space<vmem>>, %arg5: memref<8x32xf32, #tpu.memory_space<vmem>>, %arg6: memref<8x32xf32, #tpu.memory_space<vmem>>, %arg7: memref<8x32xf32, #tpu.memory_space<vmem>>) attributes {dimension_semantics = [#tpu.dimension_semantics<parallel>], iteration_bounds = array<i64: 1>, scalar_prefetch = 0 : i64, scratch_operands = 0 : i64, tpu.core_type = #tpu.core_type<tc>, window_params = [{transform_indices = @transform_0, window_bounds = array<i64: 8, 1024>}, {pipeline_mode = #tpu.pipeline_mode<synchronous>, transform_indices = @transform_1, window_bounds = array<i64: 1024, 64>}, {pipeline_mode = #tpu.pipeline_mode<synchronous>, transform_indices = @transform_2, window_bounds = array<i64: 1, 64>}, {transform_indices = @transform_3, window_bounds = array<i64: 8, 32>}, {transform_indices = @transform_4, window_bounds = array<i64: 8, 32>}, {transform_indices = @transform_5, window_bounds = array<i64: 8, 32>}, {transform_indices = @transform_6, window_bounds = array<i64: 8, 32>}]} {
    %c0 = arith.constant 0 : index
    %c0_0 = arith.constant 0 : index
    %0 = vector.load %arg1[%c0, %c0_0] : memref<8x1024xbf16, #tpu.memory_space<vmem>>, vector<8x1024xbf16>
    %c0_1 = arith.constant 0 : index
    %c0_2 = arith.constant 0 : index
    %1 = vector.load %arg2[%c0_1, %c0_2] : memref<1024x64xbf16, #tpu.memory_space<vmem>>, vector<1024x64xbf16>
    %cst = arith.constant dense<0.000000e+00> : vector<8x64xf32>
    %2 = tpu.matmul %0, %1, %cst {dimension_numbers = #tpu.dot_dimension_numbers<[1], [0], [0], [1], [0, 0, 1, 1], [], []>} : vector<8x1024xbf16>, vector<1024x64xbf16>, vector<8x64xf32> -> vector<8x64xf32>
    %c0_3 = arith.constant 0 : index
    %c0_4 = arith.constant 0 : index
    %3 = vector.load %arg3[%c0_3, %c0_4] : memref<1x64xf32, #tpu.memory_space<vmem>>, vector<1x64xf32>
    %4 = vector.broadcast %3 : vector<1x64xf32> to vector<8x64xf32>
    %5 = arith.addf %2, %4 : vector<8x64xf32>
    %6 = vector.extract_strided_slice %5 {offsets = [0, 0], sizes = [8, 32], strides = [1, 1]} : vector<8x64xf32> to vector<8x32xf32>
    %7 = vector.extract_strided_slice %5 {offsets = [0, 32], sizes = [8, 32], strides = [1, 1]} : vector<8x64xf32> to vector<8x32xf32>
    %c0_5 = arith.constant 0 : index
    %c0_6 = arith.constant 0 : index
    %8 = vector.load %arg4[%c0_5, %c0_6] : memref<8x32xf32, #tpu.memory_space<vmem>>, vector<8x32xf32>
    %cst_7 = arith.constant 5.000000e-01 : f32
    %9 = vector.broadcast %cst_7 : f32 to vector<8x32xf32>
    %10 = arith.mulf %9, %7 : vector<8x32xf32>
    %11 = math.exp %10 : vector<8x32xf32>
    %12 = arith.mulf %8, %11 : vector<8x32xf32>
    %13 = arith.addf %6, %12 : vector<8x32xf32>
    %c0_8 = arith.constant 0 : index
    %c0_9 = arith.constant 0 : index
    %14 = vector.load %arg5[%c0_8, %c0_9] : memref<8x32xf32, #tpu.memory_space<vmem>>, vector<8x32xf32>
    tpu.vector_store %arg5[%c0_8, %c0_9], %6 {strides = array<i32>} : memref<8x32xf32, #tpu.memory_space<vmem>>, vector<8x32xf32>,
    %c0_10 = arith.constant 0 : index
    %c0_11 = arith.constant 0 : index
    %15 = vector.load %arg6[%c0_10, %c0_11] : memref<8x32xf32, #tpu.memory_space<vmem>>, vector<8x32xf32>
    tpu.vector_store %arg6[%c0_10, %c0_11], %7 {strides = array<i32>} : memref<8x32xf32, #tpu.memory_space<vmem>>, vector<8x32xf32>,
    %c0_12 = arith.constant 0 : index
    %c0_13 = arith.constant 0 : index
    %16 = vector.load %arg7[%c0_12, %c0_13] : memref<8x32xf32, #tpu.memory_space<vmem>>, vector<8x32xf32>
    tpu.vector_store %arg7[%c0_12, %c0_13], %13 {strides = array<i32>} : memref<8x32xf32, #tpu.memory_space<vmem>>, vector<8x32xf32>,
    return
  }
  func.func @transform_0(%arg0: i32) -> (i32, i32) {
    %c0_i32 = arith.constant 0 : i32
    %c0_i32_0 = arith.constant 0 : i32
    return %arg0, %c0_i32 : i32, i32
  }
  func.func @transform_1(%arg0: i32) -> (i32, i32) {
    %c0_i32 = arith.constant 0 : i32
    %c0_i32_0 = arith.constant 0 : i32
    %c0_i32_1 = arith.constant 0 : i32
    return %c0_i32, %c0_i32_0 : i32, i32
  }
  func.func @transform_2(%arg0: i32) -> (i32, i32) {
    %c0_i32 = arith.constant 0 : i32
    %c0_i32_0 = arith.constant 0 : i32
    %c0_i32_1 = arith.constant 0 : i32
    return %c0_i32, %c0_i32_0 : i32, i32
  }
  func.func @transform_3(%arg0: i32) -> (i32, i32) {
    %c0_i32 = arith.constant 0 : i32
    %c0_i32_0 = arith.constant 0 : i32
    return %arg0, %c0_i32 : i32, i32
  }
  func.func @transform_4(%arg0: i32) -> (i32, i32) {
    %c0_i32 = arith.constant 0 : i32
    %c0_i32_0 = arith.constant 0 : i32
    return %arg0, %c0_i32 : i32, i32
  }
  func.func @transform_5(%arg0: i32) -> (i32, i32) {
    %c0_i32 = arith.constant 0 : i32
    %c0_i32_0 = arith.constant 0 : i32
    return %arg0, %c0_i32 : i32, i32
  }
  func.func @transform_6(%arg0: i32) -> (i32, i32) {
    %c0_i32 = arith.constant 0 : i32
    %c0_i32_0 = arith.constant 0 : i32
    return %arg0, %c0_i32 : i32, i32
  }
}

</mosaic_0001>

<llo_original>
// kernel: encoder_forward.5
$region0: #{encoder_forward.5}
  #allocation0 [shape = 'u32[]', space=smem, size = 0x4, offset = 0x4, fixed_abs, tag = 'smem constant byte address 0x4 - core index']
  #allocation1 [shape = 'u32[144,128]{1,0:T(1,128)}', space=vmem, size = 0x12000, scoped, tag = 'internal scratch']
  %s0 = inlined_call_operand.vmem [shape: bf16[2048,48], index: 0, kind: input, shape index: {}]
  %s1 = inlined_call_operand.vmem [shape: bf16[48,32], index: 1, kind: input, shape index: {}]
  %s2 = inlined_call_operand.vmem [shape: f32[1,32], index: 2, kind: input, shape index: {}]
  %s3 = inlined_call_operand.vmem [shape: bf16[2048,32], index: 3, kind: output, shape index: {}]
  %s4 = sld [smem:[#allocation0]]
  $region45: #{encoder_forward.5} parent=0
    _
  %s6 = ssub.s32 1, %s4
  %s7 = scalar_select 0, %s6, %s4
  loop: start=0, step=1, limit=6
  $region2: #{encoder_forward.5} parent=0 // loop_pre_header
    _
  $region3: #{encoder_forward.5} parent=0 // loop_header
    %s9 = sphi 0, %s13
    %p10 = scmp.ge.s32.totalorder %s9, 6
    %s19 = sphi 0, %s21
    %s22 = sphi 0, %s19
    %s23 = sphi 0, %s22
    %s39 = sphi 0, %s23
    %s43 = sphi 0, %s43
    %s45 = sphi 0, %s43
    %s46 = sphi 0, %s45
    %s60 = sphi 0, %s46
    %s64 = sphi 0, %s64
    %s66 = sphi 0, %s64
    %s67 = sphi 0, %s66
    %s81 = sphi 0, %s67
    %s87 = sphi 0, %s89
    %s90 = sphi 0, %s87
    %s91 = sphi 0, %s90
    %s107 = sphi 0, %s91
  $region4: #{encoder_forward.5} parent=0 // loop_header_branch
    %12 = sbr.rel (%p10) target = $region8
  $region5: #{encoder_forward.5} parent=0 // loop_body
    %s14 = ssub.s32 %s9, 1
    %s15 = ssub.s32 %s9, 2
    %s16 = sadd.s32 %s9, 1
    %s17 = ssub.s32 %s9, %s16
    %p18 = scmp.eq.s32.totalorder %s17, 0
    %s20 = sadd.s32 %s19, 1
    %s21 = scalar_select %p18, %s19, %s20
    %p24 = pneg %p18
    %p25 = scmp.eq.s32.totalorder %s9, 3
    %p26 = por %p24, %p25
    %p27 = scmp.ne.s32.totalorder %s19, %s22
    %p28 = scmp.eq.s32.totalorder %s9, 0
    %p29 = por %p27, %p28
    %p30 = scmp.ne.s32.totalorder %s19, %s22
    %p31 = scmp.eq.s32.totalorder %s14, 3
    %p32 = por %p30, %p31
    %p33 = scmp.ne.s32.totalorder %s22, %s23
    %p34 = scmp.eq.s32.totalorder %s14, 0
    %p35 = por %p33, %p34
    %p36 = scmp.ne.s32.totalorder %s22, %s23
    %p37 = scmp.eq.s32.totalorder %s15, 3
    %p38 = por %p36, %p37
    %p40 = scmp.ne.s32.totalorder %s23, %s39
    %p41 = scmp.eq.s32.totalorder %s15, 0
    %p42 = por %p40, %p41
    %s44 = sadd.s32 %s43, 1
    %p47 = scmp.eq.s32.totalorder %s9, 3
    %p48 = scmp.ne.s32.totalorder %s43, %s45
    %p49 = scmp.eq.s32.totalorder %s9, 0
    %p50 = por %p48, %p49
    %p51 = scmp.ne.s32.totalorder %s43, %s45
    %p52 = scmp.eq.s32.totalorder %s14, 3
    %p53 = por %p51, %p52
    %p54 = scmp.ne.s32.totalorder %s45, %s46
    %p55 = scmp.eq.s32.totalorder %s14, 0
    %p56 = por %p54, %p55
    %p57 = scmp.ne.s32.totalorder %s45, %s46
    %p58 = scmp.eq.s32.totalorder %s15, 3
    %p59 = por %p57, %p58
    %p61 = scmp.ne.s32.totalorder %s46, %s60
    %p62 = scmp.eq.s32.totalorder %s15, 0
    %p63 = por %p61, %p62
    %s65 = sadd.s32 %s64, 1
    %p68 = scmp.eq.s32.totalorder %s9, 3
    %p69 = scmp.ne.s32.totalorder %s64, %s66
    %p70 = scmp.eq.s32.totalorder %s9, 0
    %p71 = por %p69, %p70
    %p72 = scmp.ne.s32.totalorder %s64, %s66
    %p73 = scmp.eq.s32.totalorder %s14, 3
    %p74 = por %p72, %p73
    %p75 = scmp.ne.s32.totalorder %s66, %s67
    %p76 = scmp.eq.s32.totalorder %s14, 0
    %p77 = por %p75, %p76
    %p78 = scmp.ne.s32.totalorder %s66, %s67
    %p79 = scmp.eq.s32.totalorder %s15, 3
    %p80 = por %p78, %p79
    %p82 = scmp.ne.s32.totalorder %s67, %s81
    %p83 = scmp.eq.s32.totalorder %s15, 0
    %p84 = por %p82, %p83
    %s85 = ssub.s32 %s9, %s16
    %p86 = scmp.eq.s32.totalorder %s85, 0
    %s88 = sadd.s32 %s87, 1
    %s89 = scalar_select %p86, %s87, %s88
    %p92 = pneg %p86
    %p93 = scmp.eq.s32.totalorder %s9, 3
    %p94 = por %p92, %p93
    %p95 = scmp.ne.s32.totalorder %s87, %s90
    %p96 = scmp.eq.s32.totalorder %s9, 0
    %p97 = por %p95, %p96
    %p98 = scmp.ne.s32.totalorder %s87, %s90
    %p99 = scmp.eq.s32.totalorder %s14, 3
    %p100 = por %p98, %p99
    %p101 = scmp.ne.s32.totalorder %s90, %s91
    %p102 = scmp.eq.s32.totalorder %s14, 0
    %p103 = por %p101, %p102
    %p104 = scmp.ne.s32.totalorder %s90, %s91
    %p105 = scmp.eq.s32.totalorder %s15, 3
    %p106 = por %p104, %p105
    %p108 = scmp.ne.s32.totalorder %s91, %s107
    %p109 = scmp.eq.s32.totalorder %s15, 0
    %p110 = por %p108, %p109
    %p111 = scmp.le.s32.totalorder 1, %s9
    %p112 = scmp.lt.s32.totalorder %s9, 5
    %p113 = pnand %p111, %p112
    %p114 = pneg %p113
    // Predicated region
    $region9: #{encoder_forward.5} parent=5 // pred_check
      _
    $region10: #{encoder_forward.5} parent=5 // pred_check_branch
      %116 = sbr.rel (%p113) target = $region12
    $region11: #{encoder_forward.5} parent=5 // pred_region
      %s117 = ssub.s32 %s9, 1
      // Predicated region
      $region13: #{encoder_forward.5} parent=11 // pred_check
        %p118 = pneg %p56
      $region14: #{encoder_forward.5} parent=11 // pred_check_branch
        %120 = sbr.rel (%p118) target = $region16
      $region15: #{encoder_forward.5} parent=11 // pred_region
        _
      $region16: #{encoder_forward.5} parent=11 // pred_fallthru
        _
      // Predicated region
      $region17: #{encoder_forward.5} parent=11 // pred_check
        %p121 = pneg %p77
      $region18: #{encoder_forward.5} parent=11 // pred_check_branch
        %123 = sbr.rel (%p121) target = $region20
      $region19: #{encoder_forward.5} parent=11 // pred_region
        _
      $region20: #{encoder_forward.5} parent=11 // pred_fallthru
        _
    $region12: #{encoder_forward.5} parent=5 // pred_fallthru
      _
    %p124 = scmp.lt.s32.totalorder %s9, 4
    // Predicated region
    $region21: #{encoder_forward.5} parent=5 // pred_check
      %p125 = pneg %p124
    $region22: #{encoder_forward.5} parent=5 // pred_check_branch
      %127 = sbr.rel (%p125) target = $region24
    $region23: #{encoder_forward.5} parent=5 // pred_region
      // Predicated region
      $region25: #{encoder_forward.5} parent=23 // pred_check
        %p128 = pneg %p29
      $region26: #{encoder_forward.5} parent=23 // pred_check_branch
        %130 = sbr.rel (%p128) target = $region28
      $region27: #{encoder_forward.5} parent=23 // pred_region
        %s131 = smul.u32 64, %s9
        %p132 = scmp.lt.s32.totalorder %s131, 255
        %s133 = scalar_select %p132, %s131, 255
        %s134 = smul.addr %s133, 4
        %s135 = scalar_lea.vmem %s0, %s134
        %s136 = smul.u32 64, %s9
      $region28: #{encoder_forward.5} parent=23 // pred_fallthru
        _
    $region24: #{encoder_forward.5} parent=5 // pred_fallthru
      _
    %p137 = scmp.le.s32.totalorder 1, %s9
    %p138 = scmp.lt.s32.totalorder %s9, 5
    %p139 = pnand %p137, %p138
    %p140 = pneg %p139
    // Predicated region
    $region29: #{encoder_forward.5} parent=5 // pred_check
      _
    $region30: #{encoder_forward.5} parent=5 // pred_check_branch
      %142 = sbr.rel (%p139) target = $region32
    $region31: #{encoder_forward.5} parent=5 // pred_region
      %s143 = ssub.s32 %s9, 1
      %s144 = smul.u32 64, %s14
      %p145 = scmp.lt.s32.totalorder %s144, 255
      %s146 = scalar_select %p145, %s144, 255
      %s147 = smul.addr %s146, 4
      %s148 = scalar_lea.vmem %s0, %s147
      %p149 = pneg %p35
      %p150 = pneg %p32
      %p151 = pneg %p56
      %p152 = pneg %p53
      %p153 = pneg %p77
      %p154 = pneg %p74
      %p155 = pneg %p103
      %p156 = pneg %p100
      %s157 = smul.u32 64, %s14
      %p158 = scmp.lt.s32.totalorder %s157, 255
      %s159 = scalar_select %p158, %s157, 255
      %s160 = smul.addr %s159, 4
      %s161 = scalar_lea.vmem %s3, %s160
      %s162 = smul.u32 64, %s14
      %p163 = scmp.lt.s32.totalorder %s162, 255
      %s164 = scalar_select %p163, %s162, 255
      %s165 = smul.addr %s164, 4
      %s166 = scalar_lea.vmem %s0, %s165
      %s167 = smul.u32 64, %s14
      %s168 = smul.u32 64, %s14
      %p169 = scmp.lt.s32.totalorder %s168, 255
      %s170 = scalar_select %p169, %s168, 255
      %s171 = smul.addr %s170, 4
      %s172 = scalar_lea.vmem %s3, %s171
      %s173 = smul.u32 64, %s14
      %v175 = vld [vmem:[%s166] sm:$0xf]
      %v176 = vld [vmem:[%s166 + $0x4] sm:$0xf]
      %v177 = vld [vmem:[%s166 + $0x8] sm:$0xf]
      %v178 = vld [vmem:[%s166 + $0xc] sm:$0xf]
      %v179 = vld [vmem:[%s166 + $0x10] sm:$0xf]
      %v180 = vld [vmem:[%s166 + $0x14] sm:$0xf]
      %v181 = vld [vmem:[%s166 + $0x18] sm:$0xf]
      %v182 = vld [vmem:[%s166 + $0x1c] sm:$0xf]
      %v183 = vld [vmem:[%s166 + $0x20] sm:$0xf]
      %v184 = vld [vmem:[%s166 + $0x24] sm:$0xf]
      %v185 = vld [vmem:[%s166 + $0x28] sm:$0xf]
      %v186 = vld [vmem:[%s166 + $0x2c] sm:$0xf]
      %v187 = vld [vmem:[%s166 + $0x30] sm:$0xf]
      %v188 = vld [vmem:[%s166 + $0x34] sm:$0xf]
      %v189 = vld [vmem:[%s166 + $0x38] sm:$0xf]
      %v190 = vld [vmem:[%s166 + $0x3c] sm:$0xf]
      %v191 = vld [vmem:[%s166 + $0x40] sm:$0xf]
      %v192 = vld [vmem:[%s166 + $0x44] sm:$0xf]
      %v193 = vld [vmem:[%s166 + $0x48] sm:$0xf]
      %v194 = vld [vmem:[%s166 + $0x4c] sm:$0xf]
      %v195 = vld [vmem:[%s166 + $0x50] sm:$0xf]
      %v196 = vld [vmem:[%s166 + $0x54] sm:$0xf]
      %v197 = vld [vmem:[%s166 + $0x58] sm:$0xf]
      %v198 = vld [vmem:[%s166 + $0x5c] sm:$0xf]
      %v199 = vld [vmem:[%s166 + $0x60] sm:$0xf]
      %v200 = vld [vmem:[%s166 + $0x64] sm:$0xf]
      %v201 = vld [vmem:[%s166 + $0x68] sm:$0xf]
      %v202 = vld [vmem:[%s166 + $0x6c] sm:$0xf]
      %v203 = vld [vmem:[%s166 + $0x70] sm:$0xf]
      %v204 = vld [vmem:[%s166 + $0x74] sm:$0xf]
      %v205 = vld [vmem:[%s166 + $0x78] sm:$0xf]
      %v206 = vld [vmem:[%s166 + $0x7c] sm:$0xf]
      %v207 = vld [vmem:[%s166 + $0x80] sm:$0xf]
      %v208 = vld [vmem:[%s166 + $0x84] sm:$0xf]
      %v209 = vld [vmem:[%s166 + $0x88] sm:$0xf]
      %v210 = vld [vmem:[%s166 + $0x8c] sm:$0xf]
      %v211 = vld [vmem:[%s166 + $0x90] sm:$0xf]
      %v212 = vld [vmem:[%s166 + $0x94] sm:$0xf]
      %v213 = vld [vmem:[%s166 + $0x98] sm:$0xf]
      %v214 = vld [vmem:[%s166 + $0x9c] sm:$0xf]
      %v215 = vld [vmem:[%s166 + $0xa0] sm:$0xf]
      %v216 = vld [vmem:[%s166 + $0xa4] sm:$0xf]
      %v217 = vld [vmem:[%s166 + $0xa8] sm:$0xf]
      %v218 = vld [vmem:[%s166 + $0xac] sm:$0xf]
      %v219 = vld [vmem:[%s166 + $0xb0] sm:$0xf]
      %v220 = vld [vmem:[%s166 + $0xb4] sm:$0xf]
      %v221 = vld [vmem:[%s166 + $0xb8] sm:$0xf]
      %v222 = vld [vmem:[%s166 + $0xbc] sm:$0xf]
      %v223 = vld [vmem:[%s166 + $0xc0] sm:$0xf]
      %v224 = vld [vmem:[%s166 + $0xc4] sm:$0xf]
      %v225 = vld [vmem:[%s166 + $0xc8] sm:$0xf]
      %v226 = vld [vmem:[%s166 + $0xcc] sm:$0xf]
      %v227 = vld [vmem:[%s166 + $0xd0] sm:$0xf]
      %v228 = vld [vmem:[%s166 + $0xd4] sm:$0xf]
      %v229 = vld [vmem:[%s166 + $0xd8] sm:$0xf]
      %v230 = vld [vmem:[%s166 + $0xdc] sm:$0xf]
      %v231 = vld [vmem:[%s166 + $0xe0] sm:$0xf]
      %v232 = vld [vmem:[%s166 + $0xe4] sm:$0xf]
      %v233 = vld [vmem:[%s166 + $0xe8] sm:$0xf]
      %v234 = vld [vmem:[%s166 + $0xec] sm:$0xf]
      %v235 = vld [vmem:[%s166 + $0xf0] sm:$0xf]
      %v236 = vld [vmem:[%s166 + $0xf4] sm:$0xf]
      %v237 = vld [vmem:[%s166 + $0xf8] sm:$0xf]
      %v238 = vld [vmem:[%s166 + $0xfc] sm:$0xf]
      %v239 = vld [vmem:[%s1] sm:$0xf]
      %v240 = vld [vmem:[%s1 + $0x4] sm:$0xf]
      %v241 = vld [vmem:[%s1 + $0x8] sm:$0xf]
      %v242 = vld [vmem:[%s1 + $0xc] sm:$0xf]
      %v243 = vld [vmem:[%s1 + $0x10] sm:$0xf]
      %v244 = vld [vmem:[%s1 + $0x14] sm:$0xf]
      %v245 = vld [vmem:[%s2] sm:$0x1]
      %v247 = vlaneseq
      %v248 = vshrl.u32 %v247, 7
      %v249 = vsub.s32 0, %v248
      %v250 = vrot.slane %v245, %v249
      %v316 = vunpack.c.l.b16 %v175
      %v317 = vunpack.c.l.b16 %v176
      %v318 = vunpack.c.l.b16 %v177
      %v319 = vunpack.c.l.b16 %v178
      %v320 = vunpack.c.l.b16 %v179
      %v321 = vunpack.c.l.b16 %v180
      %v322 = vunpack.c.l.b16 %v181
      %v323 = vunpack.c.l.b16 %v182
      %v324 = vunpack.c.l.b16 %v183
      %v325 = vunpack.c.l.b16 %v184
      %v326 = vunpack.c.l.b16 %v185
      %v327 = vunpack.c.l.b16 %v186
      %v328 = vunpack.c.l.b16 %v187
      %v329 = vunpack.c.l.b16 %v188
      %v330 = vunpack.c.l.b16 %v189
      %v331 = vunpack.c.l.b16 %v190
      %v332 = vunpack.c.l.b16 %v191
      %v333 = vunpack.c.l.b16 %v192
      %v334 = vunpack.c.l.b16 %v193
      %v335 = vunpack.c.l.b16 %v194
      %v336 = vunpack.c.l.b16 %v195
      %v337 = vunpack.c.l.b16 %v196
      %v338 = vunpack.c.l.b16 %v197
      %v339 = vunpack.c.l.b16 %v198
      %v340 = vunpack.c.l.b16 %v199
      %v341 = vunpack.c.l.b16 %v200
      %v342 = vunpack.c.l.b16 %v201
      %v343 = vunpack.c.l.b16 %v202
      %v344 = vunpack.c.l.b16 %v203
      %v345 = vunpack.c.l.b16 %v204
      %v346 = vunpack.c.l.b16 %v205
      %v347 = vunpack.c.l.b16 %v206
      %v348 = vunpack.c.l.b16 %v207
      %v349 = vunpack.c.l.b16 %v208
      %v350 = vunpack.c.l.b16 %v209
      %v351 = vunpack.c.l.b16 %v210
      %v352 = vunpack.c.l.b16 %v211
      %v353 = vunpack.c.l.b16 %v212
      %v354 = vunpack.c.l.b16 %v213
      %v355 = vunpack.c.l.b16 %v214
      %v356 = vunpack.c.l.b16 %v215
      %v357 = vunpack.c.l.b16 %v216
      %v358 = vunpack.c.l.b16 %v217
      %v359 = vunpack.c.l.b16 %v218
      %v360 = vunpack.c.l.b16 %v219
      %v361 = vunpack.c.l.b16 %v220
      %v362 = vunpack.c.l.b16 %v221
      %v363 = vunpack.c.l.b16 %v222
      %v364 = vunpack.c.l.b16 %v223
      %v365 = vunpack.c.l.b16 %v224
      %v366 = vunpack.c.l.b16 %v225
      %v367 = vunpack.c.l.b16 %v226
      %v368 = vunpack.c.l.b16 %v227
      %v369 = vunpack.c.l.b16 %v228
      %v370 = vunpack.c.l.b16 %v229
      %v371 = vunpack.c.l.b16 %v230
      %v372 = vunpack.c.l.b16 %v231
      %v373 = vunpack.c.l.b16 %v232
      %v374 = vunpack.c.l.b16 %v233
      %v375 = vunpack.c.l.b16 %v234
      %v376 = vunpack.c.l.b16 %v235
      %v377 = vunpack.c.l.b16 %v236
      %v378 = vunpack.c.l.b16 %v237
      %v379 = vunpack.c.l.b16 %v238
      %v380 = vpack.c.b16 %v317, %v316
      %v381 = vpack.c.b16 %v319, %v318
      %v382 = vpack.c.b16 %v321, %v320
      %v383 = vpack.c.b16 %v323, %v322
      %v384 = vpack.c.b16 %v325, %v324
      %v385 = vpack.c.b16 %v327, %v326
      %v386 = vpack.c.b16 %v329, %v328
      %v387 = vpack.c.b16 %v331, %v330
      %v388 = vpack.c.b16 %v333, %v332
      %v389 = vpack.c.b16 %v335, %v334
      %v390 = vpack.c.b16 %v337, %v336
      %v391 = vpack.c.b16 %v339, %v338
      %v392 = vpack.c.b16 %v341, %v340
      %v393 = vpack.c.b16 %v343, %v342
      %v394 = vpack.c.b16 %v345, %v344
      %v395 = vpack.c.b16 %v347, %v346
      %v396 = vpack.c.b16 %v349, %v348
      %v397 = vpack.c.b16 %v351, %v350
      %v398 = vpack.c.b16 %v353, %v352
      %v399 = vpack.c.b16 %v355, %v354
      %v400 = vpack.c.b16 %v357, %v356
      %v401 = vpack.c.b16 %v359, %v358
      %v402 = vpack.c.b16 %v361, %v360
      %v403 = vpack.c.b16 %v363, %v362
      %v404 = vpack.c.b16 %v365, %v364
      %v405 = vpack.c.b16 %v367, %v366
      %v406 = vpack.c.b16 %v369, %v368
      %v407 = vpack.c.b16 %v371, %v370
      %v408 = vpack.c.b16 %v373, %v372
      %v409 = vpack.c.b16 %v375, %v374
      %v410 = vpack.c.b16 %v377, %v376
      %v411 = vpack.c.b16 %v379, %v378
      %v418 = vunpack.c.l.b16 %v239
      %v419 = vunpack.c.l.b16 %v240
      %v420 = vunpack.c.l.b16 %v241
      %v421 = vunpack.c.l.b16 %v242
      %v422 = vunpack.c.l.b16 %v243
      %v423 = vunpack.c.l.b16 %v244
      %v424 = vpack.c.b16 %v419, %v418
      %v425 = vpack.c.b16 %v421, %v420
      %v426 = vpack.c.b16 %v423, %v422
      %vm430 = vcmask 392192
      %v432 = vsel %vm430, %v380, 0
      %v435 = vsel %vm430, %v381, 0
      %v438 = vsel %vm430, %v382, 0
      %v441 = vsel %vm430, %v383, 0
      %v444 = vsel %vm430, %v384, 0
      %v447 = vsel %vm430, %v385, 0
      %v450 = vsel %vm430, %v386, 0
      %v453 = vsel %vm430, %v387, 0
      %v456 = vsel %vm430, %v388, 0
      %v459 = vsel %vm430, %v389, 0
      %v462 = vsel %vm430, %v390, 0
      %v465 = vsel %vm430, %v391, 0
      %v468 = vsel %vm430, %v392, 0
      %v471 = vsel %vm430, %v393, 0
      %v474 = vsel %vm430, %v394, 0
      %v477 = vsel %vm430, %v395, 0
      %v480 = vsel %vm430, %v396, 0
      %v483 = vsel %vm430, %v397, 0
      %v486 = vsel %vm430, %v398, 0
      %v489 = vsel %vm430, %v399, 0
      %v492 = vsel %vm430, %v400, 0
      %v495 = vsel %vm430, %v401, 0
      %v498 = vsel %vm430, %v402, 0
      %v501 = vsel %vm430, %v403, 0
      %v504 = vsel %vm430, %v404, 0
      %v507 = vsel %vm430, %v405, 0
      %v510 = vsel %vm430, %v406, 0
      %v513 = vsel %vm430, %v407, 0
      %v516 = vsel %vm430, %v408, 0
      %v519 = vsel %vm430, %v409, 0
      %v522 = vsel %vm430, %v410, 0
      %v525 = vsel %vm430, %v411, 0
      %527 = vmatprep.subr.bf16.mxu0 0
      %528 = vmatpush1.bf16.msra.mxu0 %v424
      %529 = vmatprep.subr.bf16.mxu0 0
      %530 = vmatpush1.bf16.msra.mxu0 %v425
      %531 = vmatprep.subr.bf16.mxu0 0
      %532 = vmatpush1.bf16.msra.mxu0 %v426
      %533 = vmatprep.subr.bf16.mxu0 0
      %534 = vmatpush1.bf16.msra.mxu0 0
      %535 = vmatprep.subr.bf16.mxu0 0
      %536 = vmatpush1.bf16.msra.mxu0 0
      %537 = vmatprep.subr.bf16.mxu0 0
      %538 = vmatpush1.bf16.msra.mxu0 0
      %539 = vmatprep.subr.bf16.mxu0 0
      %540 = vmatpush1.bf16.msra.mxu0 0
      %541 = vmatprep.subr.bf16.mxu0 0
      %542 = vmatpush1.bf16.msra.mxu0 0
      %543 = vmatprep.subr.bf16.mxu0 0
      %544 = vmatpush1.bf16.msra.mxu0 0
      %545 = vmatprep.subr.bf16.mxu0 0
      %546 = vmatpush1.bf16.msra.mxu0 0
      %547 = vmatprep.subr.bf16.mxu0 0
      %548 = vmatpush1.bf16.msra.mxu0 0
      %549 = vmatprep.subr.bf16.mxu0 0
      %550 = vmatpush1.bf16.msra.mxu0 0
      %551 = vmatprep.subr.bf16.mxu0 0
      %552 = vmatpush1.bf16.msra.mxu0 0
      %553 = vmatprep.subr.bf16.mxu0 0
      %554 = vmatpush1.bf16.msra.mxu0 0
      %555 = vmatprep.subr.bf16.mxu0 0
      %556 = vmatpush1.bf16.msra.mxu0 0
      %557 = vmatprep.subr.bf16.mxu0 0
      %558 = vmatpush1.bf16.msra.mxu0 0
      %559 = vmatprep.mubr.bf16.mxu0 0
      %560 = vmatmul.mubr.bf16.gmra.mrb[0].mxu0 %v432
      %v561 = vpop.f32.mrb[0].mxu0
      %v562 = vadd.f32 %v250, %v561
      %v563 = vpop.f32.mrb[0].mxu0
      %v564 = vpop.f32.mrb[0].mxu0
      %v565 = vadd.f32 %v250, %v564
      %v566 = vpop.f32.mrb[0].mxu0
      %567 = vmatprep.mubr.bf16.mxu0 0
      %568 = vmatmul.mubr.bf16.gmra.mrb[0].mxu0 %v435
      %v569 = vpop.f32.mrb[0].mxu0
      %v570 = vadd.f32 %v250, %v569
      %v571 = vpop.f32.mrb[0].mxu0
      %v572 = vpop.f32.mrb[0].mxu0
      %v573 = vadd.f32 %v250, %v572
      %v574 = vpop.f32.mrb[0].mxu0
      %575 = vmatprep.mubr.bf16.mxu0 0
      %576 = vmatmul.mubr.bf16.gmra.mrb[0].mxu0 %v438
      %v577 = vpop.f32.mrb[0].mxu0
      %v578 = vadd.f32 %v250, %v577
      %v579 = vpop.f32.mrb[0].mxu0
      %v580 = vpop.f32.mrb[0].mxu0
      %v581 = vadd.f32 %v250, %v580
      %v582 = vpop.f32.mrb[0].mxu0
      %583 = vmatprep.mubr.bf16.mxu0 0
      %584 = vmatmul.mubr.bf16.gmra.mrb[0].mxu0 %v441
      %v585 = vpop.f32.mrb[0].mxu0
      %v586 = vadd.f32 %v250, %v585
      %v587 = vpop.f32.mrb[0].mxu0
      %v588 = vpop.f32.mrb[0].mxu0
      %v589 = vadd.f32 %v250, %v588
      %v590 = vpop.f32.mrb[0].mxu0
      %591 = vmatprep.mubr.bf16.mxu0 0
      %592 = vmatmul.mubr.bf16.gmra.mrb[0].mxu0 %v444
      %v593 = vpop.f32.mrb[0].mxu0
      %v594 = vadd.f32 %v250, %v593
      %v595 = vpop.f32.mrb[0].mxu0
      %v596 = vpop.f32.mrb[0].mxu0
      %v597 = vadd.f32 %v250, %v596
      %v598 = vpop.f32.mrb[0].mxu0
      %599 = vmatprep.mubr.bf16.mxu0 0
      %600 = vmatmul.mubr.bf16.gmra.mrb[0].mxu0 %v447
      %v601 = vpop.f32.mrb[0].mxu0
      %v602 = vadd.f32 %v250, %v601
      %v603 = vpop.f32.mrb[0].mxu0
      %v604 = vpop.f32.mrb[0].mxu0
      %v605 = vadd.f32 %v250, %v604
      %v606 = vpop.f32.mrb[0].mxu0
      %607 = vmatprep.mubr.bf16.mxu0 0
      %608 = vmatmul.mubr.bf16.gmra.mrb[0].mxu0 %v450
      %v609 = vpop.f32.mrb[0].mxu0
      %v610 = vadd.f32 %v250, %v609
      %v611 = vpop.f32.mrb[0].mxu0
      %v612 = vpop.f32.mrb[0].mxu0
      %v613 = vadd.f32 %v250, %v612
      %v614 = vpop.f32.mrb[0].mxu0
      %615 = vmatprep.mubr.bf16.mxu0 0
      %616 = vmatmul.mubr.bf16.gmra.mrb[0].mxu0 %v453
      %v617 = vpop.f32.mrb[0].mxu0
      %v618 = vadd.f32 %v250, %v617
      %v619 = vpop.f32.mrb[0].mxu0
      %v620 = vpop.f32.mrb[0].mxu0
      %v621 = vadd.f32 %v250, %v620
      %v622 = vpop.f32.mrb[0].mxu0
      %623 = vmatprep.mubr.bf16.mxu0 0
      %624 = vmatmul.mubr.bf16.gmra.mrb[0].mxu0 %v456
      %v625 = vpop.f32.mrb[0].mxu0
      %v626 = vadd.f32 %v250, %v625
      %v627 = vpop.f32.mrb[0].mxu0
      %v628 = vpop.f32.mrb[0].mxu0
      %v629 = vadd.f32 %v250, %v628
      %v630 = vpop.f32.mrb[0].mxu0
      %631 = vmatprep.mubr.bf16.mxu0 0
      %632 = vmatmul.mubr.bf16.gmra.mrb[0].mxu0 %v459
      %v633 = vpop.f32.mrb[0].mxu0
      %v634 = vadd.f32 %v250, %v633
      %v635 = vpop.f32.mrb[0].mxu0
      %v636 = vpop.f32.mrb[0].mxu0
      %v637 = vadd.f32 %v250, %v636
      %v638 = vpop.f32.mrb[0].mxu0
      %639 = vmatprep.mubr.bf16.mxu0 0
      %640 = vmatmul.mubr.bf16.gmra.mrb[0].mxu0 %v462
      %v641 = vpop.f32.mrb[0].mxu0
      %v642 = vadd.f32 %v250, %v641
      %v643 = vpop.f32.mrb[0].mxu0
      %v644 = vpop.f32.mrb[0].mxu0
      %v645 = vadd.f32 %v250, %v644
      %v646 = vpop.f32.mrb[0].mxu0
      %647 = vmatprep.mubr.bf16.mxu0 0
      %648 = vmatmul.mubr.bf16.gmra.mrb[0].mxu0 %v465
      %v649 = vpop.f32.mrb[0].mxu0
      %v650 = vadd.f32 %v250, %v649
      %v651 = vpop.f32.mrb[0].mxu0
      %v652 = vpop.f32.mrb[0].mxu0
      %v653 = vadd.f32 %v250, %v652
      %v654 = vpop.f32.mrb[0].mxu0
      %655 = vmatprep.mubr.bf16.mxu0 0
      %656 = vmatmul.mubr.bf16.gmra.mrb[0].mxu0 %v468
      %v657 = vpop.f32.mrb[0].mxu0
      %v658 = vadd.f32 %v250, %v657
      %v659 = vpop.f32.mrb[0].mxu0
      %v660 = vpop.f32.mrb[0].mxu0
      %v661 = vadd.f32 %v250, %v660
      %v662 = vpop.f32.mrb[0].mxu0
      %663 = vmatprep.mubr.bf16.mxu0 0
      %664 = vmatmul.mubr.bf16.gmra.mrb[0].mxu0 %v471
      %v665 = vpop.f32.mrb[0].mxu0
      %v666 = vadd.f32 %v250, %v665
      %v667 = vpop.f32.mrb[0].mxu0
      %v668 = vpop.f32.mrb[0].mxu0
      %v669 = vadd.f32 %v250, %v668
      %v670 = vpop.f32.mrb[0].mxu0
      %671 = vmatprep.mubr.bf16.mxu0 0
      %672 = vmatmul.mubr.bf16.gmra.mrb[0].mxu0 %v474
      %v673 = vpop.f32.mrb[0].mxu0
      %v674 = vadd.f32 %v250, %v673
      %v675 = vpop.f32.mrb[0].mxu0
      %v676 = vpop.f32.mrb[0].mxu0
      %v677 = vadd.f32 %v250, %v676
      %v678 = vpop.f32.mrb[0].mxu0
      %679 = vmatprep.mubr.bf16.mxu0 0
      %680 = vmatmul.mubr.bf16.gmra.mrb[0].mxu0 %v477
      %v681 = vpop.f32.mrb[0].mxu0
      %v682 = vadd.f32 %v250, %v681
      %v683 = vpop.f32.mrb[0].mxu0
      %v684 = vpop.f32.mrb[0].mxu0
      %v685 = vadd.f32 %v250, %v684
      %v686 = vpop.f32.mrb[0].mxu0
      %687 = vmatprep.mubr.bf16.mxu0 0
      %688 = vmatmul.mubr.bf16.gmra.mrb[0].mxu0 %v480
      %v689 = vpop.f32.mrb[0].mxu0
      %v690 = vadd.f32 %v250, %v689
      %v691 = vpop.f32.mrb[0].mxu0
      %v692 = vpop.f32.mrb[0].mxu0
      %v693 = vadd.f32 %v250, %v692
      %v694 = vpop.f32.mrb[0].mxu0
      %695 = vmatprep.mubr.bf16.mxu0 0
      %696 = vmatmul.mubr.bf16.gmra.mrb[0].mxu0 %v483
      %v697 = vpop.f32.mrb[0].mxu0
      %v698 = vadd.f32 %v250, %v697
      %v699 = vpop.f32.mrb[0].mxu0
      %v700 = vpop.f32.mrb[0].mxu0
      %v701 = vadd.f32 %v250, %v700
      %v702 = vpop.f32.mrb[0].mxu0
      %703 = vmatprep.mubr.bf16.mxu0 0
      %704 = vmatmul.mubr.bf16.gmra.mrb[0].mxu0 %v486
      %v705 = vpop.f32.mrb[0].mxu0
      %v706 = vadd.f32 %v250, %v705
      %v707 = vpop.f32.mrb[0].mxu0
      %v708 = vpop.f32.mrb[0].mxu0
      %v709 = vadd.f32 %v250, %v708
      %v710 = vpop.f32.mrb[0].mxu0
      %711 = vmatprep.mubr.bf16.mxu0 0
      %712 = vmatmul.mubr.bf16.gmra.mrb[0].mxu0 %v489
      %v713 = vpop.f32.mrb[0].mxu0
      %v714 = vadd.f32 %v250, %v713
      %v715 = vpop.f32.mrb[0].mxu0
      %v716 = vpop.f32.mrb[0].mxu0
      %v717 = vadd.f32 %v250, %v716
      %v718 = vpop.f32.mrb[0].mxu0
      %719 = vmatprep.mubr.bf16.mxu0 0
      %720 = vmatmul.mubr.bf16.gmra.mrb[0].mxu0 %v492
      %v721 = vpop.f32.mrb[0].mxu0
      %v722 = vadd.f32 %v250, %v721
      %v723 = vpop.f32.mrb[0].mxu0
      %v724 = vpop.f32.mrb[0].mxu0
      %v725 = vadd.f32 %v250, %v724
      %v726 = vpop.f32.mrb[0].mxu0
      %727 = vmatprep.mubr.bf16.mxu0 0
      %728 = vmatmul.mubr.bf16.gmra.mrb[0].mxu0 %v495
      %v729 = vpop.f32.mrb[0].mxu0
      %v730 = vadd.f32 %v250, %v729
      %v731 = vpop.f32.mrb[0].mxu0
      %v732 = vpop.f32.mrb[0].mxu0
      %v733 = vadd.f32 %v250, %v732
      %v734 = vpop.f32.mrb[0].mxu0
      %735 = vmatprep.mubr.bf16.mxu0 0
      %736 = vmatmul.mubr.bf16.gmra.mrb[0].mxu0 %v498
      %v737 = vpop.f32.mrb[0].mxu0
      %v738 = vadd.f32 %v250, %v737
      %v739 = vpop.f32.mrb[0].mxu0
      %v740 = vpop.f32.mrb[0].mxu0
      %v741 = vadd.f32 %v250, %v740
      %v742 = vpop.f32.mrb[0].mxu0
      %743 = vmatprep.mubr.bf16.mxu0 0
      %744 = vmatmul.mubr.bf16.gmra.mrb[0].mxu0 %v501
      %v745 = vpop.f32.mrb[0].mxu0
      %v746 = vadd.f32 %v250, %v745
      %v747 = vpop.f32.mrb[0].mxu0
      %v748 = vpop.f32.mrb[0].mxu0
      %v749 = vadd.f32 %v250, %v748
      %v750 = vpop.f32.mrb[0].mxu0
      %751 = vmatprep.mubr.bf16.mxu0 0
      %752 = vmatmul.mubr.bf16.gmra.mrb[0].mxu0 %v504
      %v753 = vpop.f32.mrb[0].mxu0
      %v754 = vadd.f32 %v250, %v753
      %v755 = vpop.f32.mrb[0].mxu0
      %v756 = vpop.f32.mrb[0].mxu0
      %v757 = vadd.f32 %v250, %v756
      %v758 = vpop.f32.mrb[0].mxu0
      %759 = vmatprep.mubr.bf16.mxu0 0
      %760 = vmatmul.mubr.bf16.gmra.mrb[0].mxu0 %v507
      %v761 = vpop.f32.mrb[0].mxu0
      %v762 = vadd.f32 %v250, %v761
      %v763 = vpop.f32.mrb[0].mxu0
      %v764 = vpop.f32.mrb[0].mxu0
      %v765 = vadd.f32 %v250, %v764
      %v766 = vpop.f32.mrb[0].mxu0
      %767 = vmatprep.mubr.bf16.mxu0 0
      %768 = vmatmul.mubr.bf16.gmra.mrb[0].mxu0 %v510
      %v769 = vpop.f32.mrb[0].mxu0
      %v770 = vadd.f32 %v250, %v769
      %v771 = vpop.f32.mrb[0].mxu0
      %v772 = vpop.f32.mrb[0].mxu0
      %v773 = vadd.f32 %v250, %v772
      %v774 = vpop.f32.mrb[0].mxu0
      %775 = vmatprep.mubr.bf16.mxu0 0
      %776 = vmatmul.mubr.bf16.gmra.mrb[0].mxu0 %v513
      %v777 = vpop.f32.mrb[0].mxu0
      %v778 = vadd.f32 %v250, %v777
      %v779 = vpop.f32.mrb[0].mxu0
      %v780 = vpop.f32.mrb[0].mxu0
      %v781 = vadd.f32 %v250, %v780
      %v782 = vpop.f32.mrb[0].mxu0
      %783 = vmatprep.mubr.bf16.mxu0 0
      %784 = vmatmul.mubr.bf16.gmra.mrb[0].mxu0 %v516
      %v785 = vpop.f32.mrb[0].mxu0
      %v786 = vadd.f32 %v250, %v785
      %v787 = vpop.f32.mrb[0].mxu0
      %v788 = vpop.f32.mrb[0].mxu0
      %v789 = vadd.f32 %v250, %v788
      %v790 = vpop.f32.mrb[0].mxu0
      %791 = vmatprep.mubr.bf16.mxu0 0
      %792 = vmatmul.mubr.bf16.gmra.mrb[0].mxu0 %v519
      %v793 = vpop.f32.mrb[0].mxu0
      %v794 = vadd.f32 %v250, %v793
      %v795 = vpop.f32.mrb[0].mxu0
      %v796 = vpop.f32.mrb[0].mxu0
      %v797 = vadd.f32 %v250, %v796
      %v798 = vpop.f32.mrb[0].mxu0
      %799 = vmatprep.mubr.bf16.mxu0 0
      %800 = vmatmul.mubr.bf16.gmra.mrb[0].mxu0 %v522
      %v801 = vpop.f32.mrb[0].mxu0
      %v802 = vadd.f32 %v250, %v801
      %v803 = vpop.f32.mrb[0].mxu0
      %v804 = vpop.f32.mrb[0].mxu0
      %v805 = vadd.f32 %v250, %v804
      %v806 = vpop.f32.mrb[0].mxu0
      %807 = vmatprep.mubr.bf16.mxu0 0
      %808 = vmatmul.mubr.bf16.gmra.mrb[0].mxu0 %v525
      %v809 = vpop.f32.mrb[0].mxu0
      %v810 = vadd.f32 %v250, %v809
      %v811 = vpop.f32.mrb[0].mxu0
      %v812 = vpop.f32.mrb[0].mxu0
      %v813 = vadd.f32 %v250, %v812
      %v814 = vpop.f32.mrb[0].mxu0
      %815 = vdwg.mxu0
      %v816 = vmax.f32 %v562, 0.0
      %v817 = vmax.f32 %v565, 0.0
      %v818 = vmax.f32 %v570, 0.0
      %v819 = vmax.f32 %v573, 0.0
      %v820 = vmax.f32 %v578, 0.0
      %v821 = vmax.f32 %v581, 0.0
      %v822 = vmax.f32 %v586, 0.0
      %v823 = vmax.f32 %v589, 0.0
      %v824 = vmax.f32 %v594, 0.0
      %v825 = vmax.f32 %v597, 0.0
      %v826 = vmax.f32 %v602, 0.0
      %v827 = vmax.f32 %v605, 0.0
      %v828 = vmax.f32 %v610, 0.0
      %v829 = vmax.f32 %v613, 0.0
      %v830 = vmax.f32 %v618, 0.0
      %v831 = vmax.f32 %v621, 0.0
      %v832 = vmax.f32 %v626, 0.0
      %v833 = vmax.f32 %v629, 0.0
      %v834 = vmax.f32 %v634, 0.0
      %v835 = vmax.f32 %v637, 0.0
      %v836 = vmax.f32 %v642, 0.0
      %v837 = vmax.f32 %v645, 0.0
      %v838 = vmax.f32 %v650, 0.0
      %v839 = vmax.f32 %v653, 0.0
      %v840 = vmax.f32 %v658, 0.0
      %v841 = vmax.f32 %v661, 0.0
      %v842 = vmax.f32 %v666, 0.0
      %v843 = vmax.f32 %v669, 0.0
      %v844 = vmax.f32 %v674, 0.0
      %v845 = vmax.f32 %v677, 0.0
      %v846 = vmax.f32 %v682, 0.0
      %v847 = vmax.f32 %v685, 0.0
      %v848 = vmax.f32 %v690, 0.0
      %v849 = vmax.f32 %v693, 0.0
      %v850 = vmax.f32 %v698, 0.0
      %v851 = vmax.f32 %v701, 0.0
      %v852 = vmax.f32 %v706, 0.0
      %v853 = vmax.f32 %v709, 0.0
      %v854 = vmax.f32 %v714, 0.0
      %v855 = vmax.f32 %v717, 0.0
      %v856 = vmax.f32 %v722, 0.0
      %v857 = vmax.f32 %v725, 0.0
      %v858 = vmax.f32 %v730, 0.0
      %v859 = vmax.f32 %v733, 0.0
      %v860 = vmax.f32 %v738, 0.0
      %v861 = vmax.f32 %v741, 0.0
      %v862 = vmax.f32 %v746, 0.0
      %v863 = vmax.f32 %v749, 0.0
      %v864 = vmax.f32 %v754, 0.0
      %v865 = vmax.f32 %v757, 0.0
      %v866 = vmax.f32 %v762, 0.0
      %v867 = vmax.f32 %v765, 0.0
      %v868 = vmax.f32 %v770, 0.0
      %v869 = vmax.f32 %v773, 0.0
      %v870 = vmax.f32 %v778, 0.0
      %v871 = vmax.f32 %v781, 0.0
      %v872 = vmax.f32 %v786, 0.0
      %v873 = vmax.f32 %v789, 0.0
      %v874 = vmax.f32 %v794, 0.0
      %v875 = vmax.f32 %v797, 0.0
      %v876 = vmax.f32 %v802, 0.0
      %v877 = vmax.f32 %v805, 0.0
      %v878 = vmax.f32 %v810, 0.0
      %v879 = vmax.f32 %v813, 0.0
      %v880 = vpack.c.bf16 %v817, %v816
      %v881 = vpack.c.bf16 %v819, %v818
      %v882 = vpack.c.bf16 %v821, %v820
      %v883 = vpack.c.bf16 %v823, %v822
      %v884 = vpack.c.bf16 %v825, %v824
      %v885 = vpack.c.bf16 %v827, %v826
      %v886 = vpack.c.bf16 %v829, %v828
      %v887 = vpack.c.bf16 %v831, %v830
      %v888 = vpack.c.bf16 %v833, %v832
      %v889 = vpack.c.bf16 %v835, %v834
      %v890 = vpack.c.bf16 %v837, %v836
      %v891 = vpack.c.bf16 %v839, %v838
      %v892 = vpack.c.bf16 %v841, %v840
      %v893 = vpack.c.bf16 %v843, %v842
      %v894 = vpack.c.bf16 %v845, %v844
      %v895 = vpack.c.bf16 %v847, %v846
      %v896 = vpack.c.bf16 %v849, %v848
      %v897 = vpack.c.bf16 %v851, %v850
      %v898 = vpack.c.bf16 %v853, %v852
      %v899 = vpack.c.bf16 %v855, %v854
      %v900 = vpack.c.bf16 %v857, %v856
      %v901 = vpack.c.bf16 %v859, %v858
      %v902 = vpack.c.bf16 %v861, %v860
      %v903 = vpack.c.bf16 %v863, %v862
      %v904 = vpack.c.bf16 %v865, %v864
      %v905 = vpack.c.bf16 %v867, %v866
      %v906 = vpack.c.bf16 %v869, %v868
      %v907 = vpack.c.bf16 %v871, %v870
      %v908 = vpack.c.bf16 %v873, %v872
      %v909 = vpack.c.bf16 %v875, %v874
      %v910 = vpack.c.bf16 %v877, %v876
      %v911 = vpack.c.bf16 %v879, %v878
      %v944 = vunpack.c.l.b16 %v880
      %v945 = vunpack.c.h.b16 %v880
      %v946 = vunpack.c.l.b16 %v881
      %v947 = vunpack.c.h.b16 %v881
      %v948 = vunpack.c.l.b16 %v882
      %v949 = vunpack.c.h.b16 %v882
      %v950 = vunpack.c.l.b16 %v883
      %v951 = vunpack.c.h.b16 %v883
      %v952 = vunpack.c.l.b16 %v884
      %v953 = vunpack.c.h.b16 %v884
      %v954 = vunpack.c.l.b16 %v885
      %v955 = vunpack.c.h.b16 %v885
      %v956 = vunpack.c.l.b16 %v886
      %v957 = vunpack.c.h.b16 %v886
      %v958 = vunpack.c.l.b16 %v887
      %v959 = vunpack.c.h.b16 %v887
      %v960 = vunpack.c.l.b16 %v888
      %v961 = vunpack.c.h.b16 %v888
      %v962 = vunpack.c.l.b16 %v889
      %v963 = vunpack.c.h.b16 %v889
      %v964 = vunpack.c.l.b16 %v890
      %v965 = vunpack.c.h.b16 %v890
      %v966 = vunpack.c.l.b16 %v891
      %v967 = vunpack.c.h.b16 %v891
      %v968 = vunpack.c.l.b16 %v892
      %v969 = vunpack.c.h.b16 %v892
      %v970 = vunpack.c.l.b16 %v893
      %v971 = vunpack.c.h.b16 %v893
      %v972 = vunpack.c.l.b16 %v894
      %v973 = vunpack.c.h.b16 %v894
      %v974 = vunpack.c.l.b16 %v895
      %v975 = vunpack.c.h.b16 %v895
      %v976 = vunpack.c.l.b16 %v896
      %v977 = vunpack.c.h.b16 %v896
      %v978 = vunpack.c.l.b16 %v897
      %v979 = vunpack.c.h.b16 %v897
      %v980 = vunpack.c.l.b16 %v898
      %v981 = vunpack.c.h.b16 %v898
      %v982 = vunpack.c.l.b16 %v899
      %v983 = vunpack.c.h.b16 %v899
      %v984 = vunpack.c.l.b16 %v900
      %v985 = vunpack.c.h.b16 %v900
      %v986 = vunpack.c.l.b16 %v901
      %v987 = vunpack.c.h.b16 %v901
      %v988 = vunpack.c.l.b16 %v902
      %v989 = vunpack.c.h.b16 %v902
      %v990 = vunpack.c.l.b16 %v903
      %v991 = vunpack.c.h.b16 %v903
      %v992 = vunpack.c.l.b16 %v904
      %v993 = vunpack.c.h.b16 %v904
      %v994 = vunpack.c.l.b16 %v905
      %v995 = vunpack.c.h.b16 %v905
      %v996 = vunpack.c.l.b16 %v906
      %v997 = vunpack.c.h.b16 %v906
      %v998 = vunpack.c.l.b16 %v907
      %v999 = vunpack.c.h.b16 %v907
      %v1000 = vunpack.c.l.b16 %v908
      %v1001 = vunpack.c.h.b16 %v908
      %v1002 = vunpack.c.l.b16 %v909
      %v1003 = vunpack.c.h.b16 %v909
      %v1004 = vunpack.c.l.b16 %v910
      %v1005 = vunpack.c.h.b16 %v910
      %v1006 = vunpack.c.l.b16 %v911
      %v1007 = vunpack.c.h.b16 %v911
      %v1008 = vpack.c.b16 %v944, %v944
      %v1009 = vpack.c.b16 %v945, %v945
      %v1010 = vpack.c.b16 %v946, %v946
      %v1011 = vpack.c.b16 %v947, %v947
      %v1012 = vpack.c.b16 %v948, %v948
      %v1013 = vpack.c.b16 %v949, %v949
      %v1014 = vpack.c.b16 %v950, %v950
      %v1015 = vpack.c.b16 %v951, %v951
      %v1016 = vpack.c.b16 %v952, %v952
      %v1017 = vpack.c.b16 %v953, %v953
      %v1018 = vpack.c.b16 %v954, %v954
      %v1019 = vpack.c.b16 %v955, %v955
      %v1020 = vpack.c.b16 %v956, %v956
      %v1021 = vpack.c.b16 %v957, %v957
      %v1022 = vpack.c.b16 %v958, %v958
      %v1023 = vpack.c.b16 %v959, %v959
      %v1024 = vpack.c.b16 %v960, %v960
      %v1025 = vpack.c.b16 %v961, %v961
      %v1026 = vpack.c.b16 %v962, %v962
      %v1027 = vpack.c.b16 %v963, %v963
      %v1028 = vpack.c.b16 %v964, %v964
      %v1029 = vpack.c.b16 %v965, %v965
      %v1030 = vpack.c.b16 %v966, %v966
      %v1031 = vpack.c.b16 %v967, %v967
      %v1032 = vpack.c.b16 %v968, %v968
      %v1033 = vpack.c.b16 %v969, %v969
      %v1034 = vpack.c.b16 %v970, %v970
      %v1035 = vpack.c.b16 %v971, %v971
      %v1036 = vpack.c.b16 %v972, %v972
      %v1037 = vpack.c.b16 %v973, %v973
      %v1038 = vpack.c.b16 %v974, %v974
      %v1039 = vpack.c.b16 %v975, %v975
      %v1040 = vpack.c.b16 %v976, %v976
      %v1041 = vpack.c.b16 %v977, %v977
      %v1042 = vpack.c.b16 %v978, %v978
      %v1043 = vpack.c.b16 %v979, %v979
      %v1044 = vpack.c.b16 %v980, %v980
      %v1045 = vpack.c.b16 %v981, %v981
      %v1046 = vpack.c.b16 %v982, %v982
      %v1047 = vpack.c.b16 %v983, %v983
      %v1048 = vpack.c.b16 %v984, %v984
      %v1049 = vpack.c.b16 %v985, %v985
      %v1050 = vpack.c.b16 %v986, %v986
      %v1051 = vpack.c.b16 %v987, %v987
      %v1052 = vpack.c.b16 %v988, %v988
      %v1053 = vpack.c.b16 %v989, %v989
      %v1054 = vpack.c.b16 %v990, %v990
      %v1055 = vpack.c.b16 %v991, %v991
      %v1056 = vpack.c.b16 %v992, %v992
      %v1057 = vpack.c.b16 %v993, %v993
      %v1058 = vpack.c.b16 %v994, %v994
      %v1059 = vpack.c.b16 %v995, %v995
      %v1060 = vpack.c.b16 %v996, %v996
      %v1061 = vpack.c.b16 %v997, %v997
      %v1062 = vpack.c.b16 %v998, %v998
      %v1063 = vpack.c.b16 %v999, %v999
      %v1064 = vpack.c.b16 %v1000, %v1000
      %v1065 = vpack.c.b16 %v1001, %v1001
      %v1066 = vpack.c.b16 %v1002, %v1002
      %v1067 = vpack.c.b16 %v1003, %v1003
      %v1068 = vpack.c.b16 %v1004, %v1004
      %v1069 = vpack.c.b16 %v1005, %v1005
      %v1070 = vpack.c.b16 %v1006, %v1006
      %v1071 = vpack.c.b16 %v1007, %v1007
      %vm1136 = vcmask 257024
      %1137 = vst.msk [vmem:[%s172] sm:$0xf] %vm1136, %v1008
      %1138 = vst.msk [vmem:[%s172 + $0x4] sm:$0xf] %vm1136, %v1009
      %1139 = vst.msk [vmem:[%s172 + $0x8] sm:$0xf] %vm1136, %v1010
      %1140 = vst.msk [vmem:[%s172 + $0xc] sm:$0xf] %vm1136, %v1011
      %1141 = vst.msk [vmem:[%s172 + $0x10] sm:$0xf] %vm1136, %v1012
      %1142 = vst.msk [vmem:[%s172 + $0x14] sm:$0xf] %vm1136, %v1013
      %1143 = vst.msk [vmem:[%s172 + $0x18] sm:$0xf] %vm1136, %v1014
      %1144 = vst.msk [vmem:[%s172 + $0x1c] sm:$0xf] %vm1136, %v1015
      %1145 = vst.msk [vmem:[%s172 + $0x20] sm:$0xf] %vm1136, %v1016
      %1146 = vst.msk [vmem:[%s172 + $0x24] sm:$0xf] %vm1136, %v1017
      %1147 = vst.msk [vmem:[%s172 + $0x28] sm:$0xf] %vm1136, %v1018
      %1148 = vst.msk [vmem:[%s172 + $0x2c] sm:$0xf] %vm1136, %v1019
      %1149 = vst.msk [vmem:[%s172 + $0x30] sm:$0xf] %vm1136, %v1020
      %1150 = vst.msk [vmem:[%s172 + $0x34] sm:$0xf] %vm1136, %v1021
      %1151 = vst.msk [vmem:[%s172 + $0x38] sm:$0xf] %vm1136, %v1022
      %1152 = vst.msk [vmem:[%s172 + $0x3c] sm:$0xf] %vm1136, %v1023
      %1153 = vst.msk [vmem:[%s172 + $0x40] sm:$0xf] %vm1136, %v1024
      %1154 = vst.msk [vmem:[%s172 + $0x44] sm:$0xf] %vm1136, %v1025
      %1155 = vst.msk [vmem:[%s172 + $0x48] sm:$0xf] %vm1136, %v1026
      %1156 = vst.msk [vmem:[%s172 + $0x4c] sm:$0xf] %vm1136, %v1027
      %1157 = vst.msk [vmem:[%s172 + $0x50] sm:$0xf] %vm1136, %v1028
      %1158 = vst.msk [vmem:[%s172 + $0x54] sm:$0xf] %vm1136, %v1029
      %1159 = vst.msk [vmem:[%s172 + $0x58] sm:$0xf] %vm1136, %v1030
      %1160 = vst.msk [vmem:[%s172 + $0x5c] sm:$0xf] %vm1136, %v1031
      %1161 = vst.msk [vmem:[%s172 + $0x60] sm:$0xf] %vm1136, %v1032
      %1162 = vst.msk [vmem:[%s172 + $0x64] sm:$0xf] %vm1136, %v1033
      %1163 = vst.msk [vmem:[%s172 + $0x68] sm:$0xf] %vm1136, %v1034
      %1164 = vst.msk [vmem:[%s172 + $0x6c] sm:$0xf] %vm1136, %v1035
      %1165 = vst.msk [vmem:[%s172 + $0x70] sm:$0xf] %vm1136, %v1036
      %1166 = vst.msk [vmem:[%s172 + $0x74] sm:$0xf] %vm1136, %v1037
      %1167 = vst.msk [vmem:[%s172 + $0x78] sm:$0xf] %vm1136, %v1038
      %1168 = vst.msk [vmem:[%s172 + $0x7c] sm:$0xf] %vm1136, %v1039
      %1169 = vst.msk [vmem:[%s172 + $0x80] sm:$0xf] %vm1136, %v1040
      %1170 = vst.msk [vmem:[%s172 + $0x84] sm:$0xf] %vm1136, %v1041
      %1171 = vst.msk [vmem:[%s172 + $0x88] sm:$0xf] %vm1136, %v1042
      %1172 = vst.msk [vmem:[%s172 + $0x8c] sm:$0xf] %vm1136, %v1043
      %1173 = vst.msk [vmem:[%s172 + $0x90] sm:$0xf] %vm1136, %v1044
      %1174 = vst.msk [vmem:[%s172 + $0x94] sm:$0xf] %vm1136, %v1045
      %1175 = vst.msk [vmem:[%s172 + $0x98] sm:$0xf] %vm1136, %v1046
      %1176 = vst.msk [vmem:[%s172 + $0x9c] sm:$0xf] %vm1136, %v1047
      %1177 = vst.msk [vmem:[%s172 + $0xa0] sm:$0xf] %vm1136, %v1048
      %1178 = vst.msk [vmem:[%s172 + $0xa4] sm:$0xf] %vm1136, %v1049
      %1179 = vst.msk [vmem:[%s172 + $0xa8] sm:$0xf] %vm1136, %v1050
      %1180 = vst.msk [vmem:[%s172 + $0xac] sm:$0xf] %vm1136, %v1051
      %1181 = vst.msk [vmem:[%s172 + $0xb0] sm:$0xf] %vm1136, %v1052
      %1182 = vst.msk [vmem:[%s172 + $0xb4] sm:$0xf] %vm1136, %v1053
      %1183 = vst.msk [vmem:[%s172 + $0xb8] sm:$0xf] %vm1136, %v1054
      %1184 = vst.msk [vmem:[%s172 + $0xbc] sm:$0xf] %vm1136, %v1055
      %1185 = vst.msk [vmem:[%s172 + $0xc0] sm:$0xf] %vm1136, %v1056
      %1186 = vst.msk [vmem:[%s172 + $0xc4] sm:$0xf] %vm1136, %v1057
      %1187 = vst.msk [vmem:[%s172 + $0xc8] sm:$0xf] %vm1136, %v1058
      %1188 = vst.msk [vmem:[%s172 + $0xcc] sm:$0xf] %vm1136, %v1059
      %1189 = vst.msk [vmem:[%s172 + $0xd0] sm:$0xf] %vm1136, %v1060
      %1190 = vst.msk [vmem:[%s172 + $0xd4] sm:$0xf] %vm1136, %v1061
      %1191 = vst.msk [vmem:[%s172 + $0xd8] sm:$0xf] %vm1136, %v1062
      %1192 = vst.msk [vmem:[%s172 + $0xdc] sm:$0xf] %vm1136, %v1063
      %1193 = vst.msk [vmem:[%s172 + $0xe0] sm:$0xf] %vm1136, %v1064
      %1194 = vst.msk [vmem:[%s172 + $0xe4] sm:$0xf] %vm1136, %v1065
      %1195 = vst.msk [vmem:[%s172 + $0xe8] sm:$0xf] %vm1136, %v1066
      %1196 = vst.msk [vmem:[%s172 + $0xec] sm:$0xf] %vm1136, %v1067
      %1197 = vst.msk [vmem:[%s172 + $0xf0] sm:$0xf] %vm1136, %v1068
      %1198 = vst.msk [vmem:[%s172 + $0xf4] sm:$0xf] %vm1136, %v1069
      %1199 = vst.msk [vmem:[%s172 + $0xf8] sm:$0xf] %vm1136, %v1070
      %1200 = vst.msk [vmem:[%s172 + $0xfc] sm:$0xf] %vm1136, %v1071
      %s1201 = smul.u32 64, %s14
      %p1202 = scmp.lt.s32.totalorder %s1201, 255
      %s1203 = scalar_select %p1202, %s1201, 255
      %s1204 = smul.addr %s1203, 4
      %s1205 = scalar_lea.vmem %s3, %s1204
      // Predicated region
      $region33: #{encoder_forward.5} parent=31 // pred_check
        %p1206 = pneg %p100
      $region34: #{encoder_forward.5} parent=31 // pred_check_branch
        %1208 = sbr.rel (%p1206) target = $region36
      $region35: #{encoder_forward.5} parent=31 // pred_region
        %s1209 = smul.u32 64, %s14
      $region36: #{encoder_forward.5} parent=31 // pred_fallthru
        _
    $region32: #{encoder_forward.5} parent=5 // pred_fallthru
      _
    %p1210 = scmp.le.s32.totalorder 2, %s9
    // Predicated region
    $region37: #{encoder_forward.5} parent=5 // pred_check
      %p1211 = pneg %p1210
    $region38: #{encoder_forward.5} parent=5 // pred_check_branch
      %1213 = sbr.rel (%p1211) target = $region40
    $region39: #{encoder_forward.5} parent=5 // pred_region
      %s1214 = ssub.s32 %s9, 2
      // Predicated region
      $region41: #{encoder_forward.5} parent=39 // pred_check
        %p1215 = pneg %p106
      $region42: #{encoder_forward.5} parent=39 // pred_check_branch
        %1217 = sbr.rel (%p1215) target = $region44
      $region43: #{encoder_forward.5} parent=39 // pred_region
        %s1218 = smul.u32 64, %s15
        %p1219 = scmp.lt.s32.totalorder %s1218, 255
        %s1220 = scalar_select %p1219, %s1218, 255
        %s1221 = smul.addr %s1220, 4
        %s1222 = scalar_lea.vmem %s3, %s1221
      $region44: #{encoder_forward.5} parent=39 // pred_fallthru
        _
    $region40: #{encoder_forward.5} parent=5 // pred_fallthru
      _
  $region6: #{encoder_forward.5} parent=0 // loop_footer
    %s13 = sadd.s32 1, %s9
  $region7: #{encoder_forward.5} parent=0 // loop_footer_branch
    %8 = sbr.rel target = $region3
  $region8: #{encoder_forward.5} parent=0 // loop_exit
    _

// kernel: encoder_forward.6
$region0: #{encoder_forward.6}
  #allocation0 [shape = 'u32[]', space=smem, size = 0x4, offset = 0x4, fixed_abs, tag = 'smem constant byte address 0x4 - core index']
  #allocation1 [shape = 'u32[144,128]{1,0:T(1,128)}', space=vmem, size = 0x12000, scoped, tag = 'internal scratch']
  %s0 = inlined_call_operand.vmem [shape: bf16[392,512], index: 0, kind: input, shape index: {}]
  %s1 = inlined_call_operand.vmem [shape: bf16[512,64], index: 1, kind: input, shape index: {}]
  %s2 = inlined_call_operand.vmem [shape: f32[1,64], index: 2, kind: input, shape index: {}]
  %s3 = inlined_call_operand.vmem [shape: bf16[392,64], index: 3, kind: output, shape index: {}]
  %s4 = sld [smem:[#allocation0]]
  $region22: #{encoder_forward.6} parent=0
    _
  %s6 = ssub.s32 1, %s4
  %s7 = scalar_select 0, %s6, %s4
  // Predicated region
  $region2: #{encoder_forward.6} parent=0 // pred_check
    _
  $region3: #{encoder_forward.6} parent=0 // pred_check_branch
    %9 = sbr.rel (0) target = $region5
  $region4: #{encoder_forward.6} parent=0 // pred_region
    _
  $region5: #{encoder_forward.6} parent=0 // pred_fallthru
    _
  // Predicated region
  $region6: #{encoder_forward.6} parent=0 // pred_check
    _
  $region7: #{encoder_forward.6} parent=0 // pred_check_branch
    %11 = sbr.rel (0) target = $region9
  $region8: #{encoder_forward.6} parent=0 // pred_region
    _
  $region9: #{encoder_forward.6} parent=0 // pred_fallthru
    _
  // Predicated region
  $region10: #{encoder_forward.6} parent=0 // pred_check
    _
  $region11: #{encoder_forward.6} parent=0 // pred_check_branch
    %13 = sbr.rel (0) target = $region13
  $region12: #{encoder_forward.6} parent=0 // pred_region
    _
  $region13: #{encoder_forward.6} parent=0 // pred_fallthru
    _
  %v15 = vld [vmem:[%s0] sm:$0xff]
  %v16 = vld [vmem:[%s0 + $0x8] sm:$0xff]
  %v17 = vld [vmem:[%s0 + $0x10] sm:$0xff]
  %v18 = vld [vmem:[%s0 + $0x18] sm:$0xff]
  %v19 = vld [vmem:[%s0 + $0x20] sm:$0xff]
  %v20 = vld [vmem:[%s0 + $0x28] sm:$0xff]
  %v21 = vld [vmem:[%s0 + $0x30] sm:$0xff]
  %v22 = vld [vmem:[%s0 + $0x38] sm:$0xff]
  %v23 = vld [vmem:[%s0 + $0x40] sm:$0xff]
  %v24 = vld [vmem:[%s0 + $0x48] sm:$0xff]
  %v25 = vld [vmem:[%s0 + $0x50] sm:$0xff]
  %v26 = vld [vmem:[%s0 + $0x58] sm:$0xff]
  %v27 = vld [vmem:[%s0 + $0x60] sm:$0xff]
  %v28 = vld [vmem:[%s0 + $0x68] sm:$0xff]
  %v29 = vld [vmem:[%s0 + $0x70] sm:$0xff]
  %v30 = vld [vmem:[%s0 + $0x78] sm:$0xff]
  %v31 = vld [vmem:[%s0 + $0x80] sm:$0xff]
  %v32 = vld [vmem:[%s0 + $0x88] sm:$0xff]
  %v33 = vld [vmem:[%s0 + $0x90] sm:$0xff]
  %v34 = vld [vmem:[%s0 + $0x98] sm:$0xff]
  %v35 = vld [vmem:[%s0 + $0xa0] sm:$0xff]
  %v36 = vld [vmem:[%s0 + $0xa8] sm:$0xff]
  %v37 = vld [vmem:[%s0 + $0xb0] sm:$0xff]
  %v38 = vld [vmem:[%s0 + $0xb8] sm:$0xff]
  %v39 = vld [vmem:[%s0 + $0xc0] sm:$0xff]
  %v40 = vld [vmem:[%s0 + $0xc8] sm:$0xff]
  %v41 = vld [vmem:[%s0 + $0xd0] sm:$0xff]
  %v42 = vld [vmem:[%s0 + $0xd8] sm:$0xff]
  %v43 = vld [vmem:[%s0 + $0xe0] sm:$0xff]
  %v44 = vld [vmem:[%s0 + $0xe8] sm:$0xff]
  %v45 = vld [vmem:[%s0 + $0xf0] sm:$0xff]
  %v46 = vld [vmem:[%s0 + $0xf8] sm:$0xff]
  %v47 = vld [vmem:[%s0 + $0x100] sm:$0xff]
  %v48 = vld [vmem:[%s0 + $0x108] sm:$0xff]
  %v49 = vld [vmem:[%s0 + $0x110] sm:$0xff]
  %v50 = vld [vmem:[%s0 + $0x118] sm:$0xff]
  %v51 = vld [vmem:[%s0 + $0x120] sm:$0xff]
  %v52 = vld [vmem:[%s0 + $0x128] sm:$0xff]
  %v53 = vld [vmem:[%s0 + $0x130] sm:$0xff]
  %v54 = vld [vmem:[%s0 + $0x138] sm:$0xff]
  %v55 = vld [vmem:[%s0 + $0x140] sm:$0xff]
  %v56 = vld [vmem:[%s0 + $0x148] sm:$0xff]
  %v57 = vld [vmem:[%s0 + $0x150] sm:$0xff]
  %v58 = vld [vmem:[%s0 + $0x158] sm:$0xff]
  %v59 = vld [vmem:[%s0 + $0x160] sm:$0xff]
  %v60 = vld [vmem:[%s0 + $0x168] sm:$0xff]
  %v61 = vld [vmem:[%s0 + $0x170] sm:$0xff]
  %v62 = vld [vmem:[%s0 + $0x178] sm:$0xff]
  %v63 = vld [vmem:[%s0 + $0x180] sm:$0xff]
  %v64 = vld [vmem:[%s0 + $0x188] sm:$0xff]
  %v65 = vld [vmem:[%s0 + $0x190] sm:$0xff]
  %v66 = vld [vmem:[%s0 + $0x198] sm:$0xff]
  %v67 = vld [vmem:[%s0 + $0x1a0] sm:$0xff]
  %v68 = vld [vmem:[%s0 + $0x1a8] sm:$0xff]
  %v69 = vld [vmem:[%s0 + $0x1b0] sm:$0xff]
  %v70 = vld [vmem:[%s0 + $0x1b8] sm:$0xff]
  %v71 = vld [vmem:[%s0 + $0x1c0] sm:$0xff]
  %v72 = vld [vmem:[%s0 + $0x1c8] sm:$0xff]
  %v73 = vld [vmem:[%s0 + $0x1d0] sm:$0xff]
  %v74 = vld [vmem:[%s0 + $0x1d8] sm:$0xff]
  %v75 = vld [vmem:[%s0 + $0x1e0] sm:$0xff]
  %v76 = vld [vmem:[%s0 + $0x1e8] sm:$0xff]
  %v77 = vld [vmem:[%s0 + $0x1f0] sm:$0xff]
  %v78 = vld [vmem:[%s0 + $0x1f8] sm:$0xff]
  %v79 = vld [vmem:[%s0 + $0x200] sm:$0xff]
  %v80 = vld [vmem:[%s0 + $0x208] sm:$0xff]
  %v81 = vld [vmem:[%s0 + $0x210] sm:$0xff]
  %v82 = vld [vmem:[%s0 + $0x218] sm:$0xff]
  %v83 = vld [vmem:[%s0 + $0x220] sm:$0xff]
  %v84 = vld [vmem:[%s0 + $0x228] sm:$0xff]
  %v85 = vld [vmem:[%s0 + $0x230] sm:$0xff]
  %v86 = vld [vmem:[%s0 + $0x238] sm:$0xff]
  %v87 = vld [vmem:[%s0 + $0x240] sm:$0xff]
  %v88 = vld [vmem:[%s0 + $0x248] sm:$0xff]
  %v89 = vld [vmem:[%s0 + $0x250] sm:$0xff]
  %v90 = vld [vmem:[%s0 + $0x258] sm:$0xff]
  %v91 = vld [vmem:[%s0 + $0x260] sm:$0xff]
  %v92 = vld [vmem:[%s0 + $0x268] sm:$0xff]
  %v93 = vld [vmem:[%s0 + $0x270] sm:$0xff]
  %v94 = vld [vmem:[%s0 + $0x278] sm:$0xff]
  %v95 = vld [vmem:[%s0 + $0x280] sm:$0xff]
  %v96 = vld [vmem:[%s0 + $0x288] sm:$0xff]
  %v97 = vld [vmem:[%s0 + $0x290] sm:$0xff]
  %v98 = vld [vmem:[%s0 + $0x298] sm:$0xff]
  %v99 = vld [vmem:[%s0 + $0x2a0] sm:$0xff]
  %v100 = vld [vmem:[%s0 + $0x2a8] sm:$0xff]
  %v101 = vld [vmem:[%s0 + $0x2b0] sm:$0xff]
  %v102 = vld [vmem:[%s0 + $0x2b8] sm:$0xff]
  %v103 = vld [vmem:[%s0 + $0x2c0] sm:$0xff]
  %v104 = vld [vmem:[%s0 + $0x2c8] sm:$0xff]
  %v105 = vld [vmem:[%s0 + $0x2d0] sm:$0xff]
  %v106 = vld [vmem:[%s0 + $0x2d8] sm:$0xff]
  %v107 = vld [vmem:[%s0 + $0x2e0] sm:$0xff]
  %v108 = vld [vmem:[%s0 + $0x2e8] sm:$0xff]
  %v109 = vld [vmem:[%s0 + $0x2f0] sm:$0xff]
  %v110 = vld [vmem:[%s0 + $0x2f8] sm:$0xff]
  %v111 = vld [vmem:[%s0 + $0x300] sm:$0xff]
  %v112 = vld [vmem:[%s0 + $0x308] sm:$0xff]
  %v113 = vld [vmem:[%s1] sm:$0xf]
  %v114 = vld [vmem:[%s1 + $0x4] sm:$0xf]
  %v115 = vld [vmem:[%s1 + $0x8] sm:$0xf]
  %v116 = vld [vmem:[%s1 + $0xc] sm:$0xf]
  %v117 = vld [vmem:[%s1 + $0x10] sm:$0xf]
  %v118 = vld [vmem:[%s1 + $0x14] sm:$0xf]
  %v119 = vld [vmem:[%s1 + $0x18] sm:$0xf]
  %v120 = vld [vmem:[%s1 + $0x1c] sm:$0xf]
  %v121 = vld [vmem:[%s1 + $0x20] sm:$0xf]
  %v122 = vld [vmem:[%s1 + $0x24] sm:$0xf]
  %v123 = vld [vmem:[%s1 + $0x28] sm:$0xf]
  %v124 = vld [vmem:[%s1 + $0x2c] sm:$0xf]
  %v125 = vld [vmem:[%s1 + $0x30] sm:$0xf]
  %v126 = vld [vmem:[%s1 + $0x34] sm:$0xf]
  %v127 = vld [vmem:[%s1 + $0x38] sm:$0xf]
  %v128 = vld [vmem:[%s1 + $0x3c] sm:$0xf]
  %v129 = vld [vmem:[%s1 + $0x40] sm:$0xf]
  %v130 = vld [vmem:[%s1 + $0x44] sm:$0xf]
  %v131 = vld [vmem:[%s1 + $0x48] sm:$0xf]
  %v132 = vld [vmem:[%s1 + $0x4c] sm:$0xf]
  %v133 = vld [vmem:[%s1 + $0x50] sm:$0xf]
  %v134 = vld [vmem:[%s1 + $0x54] sm:$0xf]
  %v135 = vld [vmem:[%s1 + $0x58] sm:$0xf]
  %v136 = vld [vmem:[%s1 + $0x5c] sm:$0xf]
  %v137 = vld [vmem:[%s1 + $0x60] sm:$0xf]
  %v138 = vld [vmem:[%s1 + $0x64] sm:$0xf]
  %v139 = vld [vmem:[%s1 + $0x68] sm:$0xf]
  %v140 = vld [vmem:[%s1 + $0x6c] sm:$0xf]
  %v141 = vld [vmem:[%s1 + $0x70] sm:$0xf]
  %v142 = vld [vmem:[%s1 + $0x74] sm:$0xf]
  %v143 = vld [vmem:[%s1 + $0x78] sm:$0xf]
  %v144 = vld [vmem:[%s1 + $0x7c] sm:$0xf]
  %v145 = vld [vmem:[%s1 + $0x80] sm:$0xf]
  %v146 = vld [vmem:[%s1 + $0x84] sm:$0xf]
  %v147 = vld [vmem:[%s1 + $0x88] sm:$0xf]
  %v148 = vld [vmem:[%s1 + $0x8c] sm:$0xf]
  %v149 = vld [vmem:[%s1 + $0x90] sm:$0xf]
  %v150 = vld [vmem:[%s1 + $0x94] sm:$0xf]
  %v151 = vld [vmem:[%s1 + $0x98] sm:$0xf]
  %v152 = vld [vmem:[%s1 + $0x9c] sm:$0xf]
  %v153 = vld [vmem:[%s1 + $0xa0] sm:$0xf]
  %v154 = vld [vmem:[%s1 + $0xa4] sm:$0xf]
  %v155 = vld [vmem:[%s1 + $0xa8] sm:$0xf]
  %v156 = vld [vmem:[%s1 + $0xac] sm:$0xf]
  %v157 = vld [vmem:[%s1 + $0xb0] sm:$0xf]
  %v158 = vld [vmem:[%s1 + $0xb4] sm:$0xf]
  %v159 = vld [vmem:[%s1 + $0xb8] sm:$0xf]
  %v160 = vld [vmem:[%s1 + $0xbc] sm:$0xf]
  %v161 = vld [vmem:[%s1 + $0xc0] sm:$0xf]
  %v162 = vld [vmem:[%s1 + $0xc4] sm:$0xf]
  %v163 = vld [vmem:[%s1 + $0xc8] sm:$0xf]
  %v164 = vld [vmem:[%s1 + $0xcc] sm:$0xf]
  %v165 = vld [vmem:[%s1 + $0xd0] sm:$0xf]
  %v166 = vld [vmem:[%s1 + $0xd4] sm:$0xf]
  %v167 = vld [vmem:[%s1 + $0xd8] sm:$0xf]
  %v168 = vld [vmem:[%s1 + $0xdc] sm:$0xf]
  %v169 = vld [vmem:[%s1 + $0xe0] sm:$0xf]
  %v170 = vld [vmem:[%s1 + $0xe4] sm:$0xf]
  %v171 = vld [vmem:[%s1 + $0xe8] sm:$0xf]
  %v172 = vld [vmem:[%s1 + $0xec] sm:$0xf]
  %v173 = vld [vmem:[%s1 + $0xf0] sm:$0xf]
  %v174 = vld [vmem:[%s1 + $0xf4] sm:$0xf]
  %v175 = vld [vmem:[%s1 + $0xf8] sm:$0xf]
  %v176 = vld [vmem:[%s1 + $0xfc] sm:$0xf]
  %v177 = vld [vmem:[%s2] sm:$0x1]
  %v179 = vlaneseq
  %v180 = vshrl.u32 %v179, 7
  %v181 = vsub.s32 0, %v180
  %v182 = vrot.slane %v177, %v181
  %v282 = vunpack.c.l.b16 %v15
  %v283 = vunpack.c.h.b16 %v15
  %v284 = vunpack.c.l.b16 %v16
  %v285 = vunpack.c.h.b16 %v16
  %v286 = vunpack.c.l.b16 %v17
  %v287 = vunpack.c.h.b16 %v17
  %v288 = vunpack.c.l.b16 %v18
  %v289 = vunpack.c.h.b16 %v18
  %v290 = vunpack.c.l.b16 %v19
  %v291 = vunpack.c.h.b16 %v19
  %v292 = vunpack.c.l.b16 %v20
  %v293 = vunpack.c.h.b16 %v20
  %v294 = vunpack.c.l.b16 %v21
  %v295 = vunpack.c.h.b16 %v21
  %v296 = vunpack.c.l.b16 %v22
  %v297 = vunpack.c.h.b16 %v22
  %v298 = vunpack.c.l.b16 %v23
  %v299 = vunpack.c.h.b16 %v23
  %v300 = vunpack.c.l.b16 %v24
  %v301 = vunpack.c.h.b16 %v24
  %v302 = vunpack.c.l.b16 %v25
  %v303 = vunpack.c.h.b16 %v25
  %v304 = vunpack.c.l.b16 %v26
  %v305 = vunpack.c.h.b16 %v26
  %v306 = vunpack.c.l.b16 %v27
  %v307 = vunpack.c.h.b16 %v27
  %v308 = vunpack.c.l.b16 %v28
  %v309 = vunpack.c.h.b16 %v28
  %v310 = vunpack.c.l.b16 %v29
  %v311 = vunpack.c.h.b16 %v29
  %v312 = vunpack.c.l.b16 %v30
  %v313 = vunpack.c.h.b16 %v30
  %v314 = vunpack.c.l.b16 %v31
  %v315 = vunpack.c.h.b16 %v31
  %v316 = vunpack.c.l.b16 %v32
  %v317 = vunpack.c.h.b16 %v32
  %v318 = vunpack.c.l.b16 %v33
  %v319 = vunpack.c.h.b16 %v33
  %v320 = vunpack.c.l.b16 %v34
  %v321 = vunpack.c.h.b16 %v34
  %v322 = vunpack.c.l.b16 %v35
  %v323 = vunpack.c.h.b16 %v35
  %v324 = vunpack.c.l.b16 %v36
  %v325 = vunpack.c.h.b16 %v36
  %v326 = vunpack.c.l.b16 %v37
  %v327 = vunpack.c.h.b16 %v37
  %v328 = vunpack.c.l.b16 %v38
  %v329 = vunpack.c.h.b16 %v38
  %v330 = vunpack.c.l.b16 %v39
  %v331 = vunpack.c.h.b16 %v39
  %v332 = vunpack.c.l.b16 %v40
  %v333 = vunpack.c.h.b16 %v40
  %v334 = vunpack.c.l.b16 %v41
  %v335 = vunpack.c.h.b16 %v41
  %v336 = vunpack.c.l.b16 %v42
  %v337 = vunpack.c.h.b16 %v42
  %v338 = vunpack.c.l.b16 %v43
  %v339 = vunpack.c.h.b16 %v43
  %v340 = vunpack.c.l.b16 %v44
  %v341 = vunpack.c.h.b16 %v44
  %v342 = vunpack.c.l.b16 %v45
  %v343 = vunpack.c.h.b16 %v45
  %v344 = vunpack.c.l.b16 %v46
  %v345 = vunpack.c.h.b16 %v46
  %v346 = vunpack.c.l.b16 %v47
  %v347 = vunpack.c.h.b16 %v47
  %v348 = vunpack.c.l.b16 %v48
  %v349 = vunpack.c.h.b16 %v48
  %v350 = vunpack.c.l.b16 %v49
  %v351 = vunpack.c.h.b16 %v49
  %v352 = vunpack.c.l.b16 %v50
  %v353 = vunpack.c.h.b16 %v50
  %v354 = vunpack.c.l.b16 %v51
  %v355 = vunpack.c.h.b16 %v51
  %v356 = vunpack.c.l.b16 %v52
  %v357 = vunpack.c.h.b16 %v52
  %v358 = vunpack.c.l.b16 %v53
  %v359 = vunpack.c.h.b16 %v53
  %v360 = vunpack.c.l.b16 %v54
  %v361 = vunpack.c.h.b16 %v54
  %v362 = vunpack.c.l.b16 %v55
  %v363 = vunpack.c.h.b16 %v55
  %v364 = vunpack.c.l.b16 %v56
  %v365 = vunpack.c.h.b16 %v56
  %v366 = vunpack.c.l.b16 %v57
  %v367 = vunpack.c.h.b16 %v57
  %v368 = vunpack.c.l.b16 %v58
  %v369 = vunpack.c.h.b16 %v58
  %v370 = vunpack.c.l.b16 %v59
  %v371 = vunpack.c.h.b16 %v59
  %v372 = vunpack.c.l.b16 %v60
  %v373 = vunpack.c.h.b16 %v60
  %v374 = vunpack.c.l.b16 %v61
  %v375 = vunpack.c.h.b16 %v61
  %v376 = vunpack.c.l.b16 %v62
  %v377 = vunpack.c.h.b16 %v62
  %v378 = vunpack.c.l.b16 %v63
  %v379 = vunpack.c.h.b16 %v63
  %v380 = vunpack.c.l.b16 %v64
  %v381 = vunpack.c.h.b16 %v64
  %v382 = vunpack.c.l.b16 %v65
  %v383 = vunpack.c.h.b16 %v65
  %v384 = vunpack.c.l.b16 %v66
  %v385 = vunpack.c.h.b16 %v66
  %v386 = vunpack.c.l.b16 %v67
  %v387 = vunpack.c.h.b16 %v67
  %v388 = vunpack.c.l.b16 %v68
  %v389 = vunpack.c.h.b16 %v68
  %v390 = vunpack.c.l.b16 %v69
  %v391 = vunpack.c.h.b16 %v69
  %v392 = vunpack.c.l.b16 %v70
  %v393 = vunpack.c.h.b16 %v70
  %v394 = vunpack.c.l.b16 %v71
  %v395 = vunpack.c.h.b16 %v71
  %v396 = vunpack.c.l.b16 %v72
  %v397 = vunpack.c.h.b16 %v72
  %v398 = vunpack.c.l.b16 %v73
  %v399 = vunpack.c.h.b16 %v73
  %v400 = vunpack.c.l.b16 %v74
  %v401 = vunpack.c.h.b16 %v74
  %v402 = vunpack.c.l.b16 %v75
  %v403 = vunpack.c.h.b16 %v75
  %v404 = vunpack.c.l.b16 %v76
  %v405 = vunpack.c.h.b16 %v76
  %v406 = vunpack.c.l.b16 %v77
  %v407 = vunpack.c.h.b16 %v77
  %v408 = vunpack.c.l.b16 %v78
  %v409 = vunpack.c.h.b16 %v78
  %v410 = vunpack.c.l.b16 %v79
  %v411 = vunpack.c.h.b16 %v79
  %v412 = vunpack.c.l.b16 %v80
  %v413 = vunpack.c.h.b16 %v80
  %v414 = vunpack.c.l.b16 %v81
  %v415 = vunpack.c.h.b16 %v81
  %v416 = vunpack.c.l.b16 %v82
  %v417 = vunpack.c.h.b16 %v82
  %v418 = vunpack.c.l.b16 %v83
  %v419 = vunpack.c.h.b16 %v83
  %v420 = vunpack.c.l.b16 %v84
  %v421 = vunpack.c.h.b16 %v84
  %v422 = vunpack.c.l.b16 %v85
  %v423 = vunpack.c.h.b16 %v85
  %v424 = vunpack.c.l.b16 %v86
  %v425 = vunpack.c.h.b16 %v86
  %v426 = vunpack.c.l.b16 %v87
  %v427 = vunpack.c.h.b16 %v87
  %v428 = vunpack.c.l.b16 %v88
  %v429 = vunpack.c.h.b16 %v88
  %v430 = vunpack.c.l.b16 %v89
  %v431 = vunpack.c.h.b16 %v89
  %v432 = vunpack.c.l.b16 %v90
  %v433 = vunpack.c.h.b16 %v90
  %v434 = vunpack.c.l.b16 %v91
  %v435 = vunpack.c.h.b16 %v91
  %v436 = vunpack.c.l.b16 %v92
  %v437 = vunpack.c.h.b16 %v92
  %v438 = vunpack.c.l.b16 %v93
  %v439 = vunpack.c.h.b16 %v93
  %v440 = vunpack.c.l.b16 %v94
  %v441 = vunpack.c.h.b16 %v94
  %v442 = vunpack.c.l.b16 %v95
  %v443 = vunpack.c.h.b16 %v95
  %v444 = vunpack.c.l.b16 %v96
  %v445 = vunpack.c.h.b16 %v96
  %v446 = vunpack.c.l.b16 %v97
  %v447 = vunpack.c.h.b16 %v97
  %v448 = vunpack.c.l.b16 %v98
  %v449 = vunpack.c.h.b16 %v98
  %v450 = vunpack.c.l.b16 %v99
  %v451 = vunpack.c.h.b16 %v99
  %v452 = vunpack.c.l.b16 %v100
  %v453 = vunpack.c.h.b16 %v100
  %v454 = vunpack.c.l.b16 %v101
  %v455 = vunpack.c.h.b16 %v101
  %v456 = vunpack.c.l.b16 %v102
  %v457 = vunpack.c.h.b16 %v102
  %v458 = vunpack.c.l.b16 %v103
  %v459 = vunpack.c.h.b16 %v103
  %v460 = vunpack.c.l.b16 %v104
  %v461 = vunpack.c.h.b16 %v104
  %v462 = vunpack.c.l.b16 %v105
  %v463 = vunpack.c.h.b16 %v105
  %v464 = vunpack.c.l.b16 %v106
  %v465 = vunpack.c.h.b16 %v106
  %v466 = vunpack.c.l.b16 %v107
  %v467 = vunpack.c.h.b16 %v107
  %v468 = vunpack.c.l.b16 %v108
  %v469 = vunpack.c.h.b16 %v108
  %v470 = vunpack.c.l.b16 %v109
  %v471 = vunpack.c.h.b16 %v109
  %v472 = vunpack.c.l.b16 %v110
  %v473 = vunpack.c.h.b16 %v110
  %v474 = vunpack.c.l.b16 %v111
  %v475 = vunpack.c.h.b16 %v111
  %v476 = vunpack.c.l.b16 %v112
  %v477 = vunpack.c.h.b16 %v112
  %v478 = vpack.c.b16 %v286, %v282
  %v479 = vpack.c.b16 %v287, %v283
  %v480 = vpack.c.b16 %v288, %v284
  %v481 = vpack.c.b16 %v289, %v285
  %v482 = vpack.c.b16 %v294, %v290
  %v483 = vpack.c.b16 %v295, %v291
  %v484 = vpack.c.b16 %v296, %v292
  %v485 = vpack.c.b16 %v297, %v293
  %v486 = vpack.c.b16 %v302, %v298
  %v487 = vpack.c.b16 %v303, %v299
  %v488 = vpack.c.b16 %v304, %v300
  %v489 = vpack.c.b16 %v305, %v301
  %v490 = vpack.c.b16 %v310, %v306
  %v491 = vpack.c.b16 %v311, %v307
  %v492 = vpack.c.b16 %v312, %v308
  %v493 = vpack.c.b16 %v313, %v309
  %v494 = vpack.c.b16 %v318, %v314
  %v495 = vpack.c.b16 %v319, %v315
  %v496 = vpack.c.b16 %v320, %v316
  %v497 = vpack.c.b16 %v321, %v317
  %v498 = vpack.c.b16 %v326, %v322
  %v499 = vpack.c.b16 %v327, %v323
  %v500 = vpack.c.b16 %v328, %v324
  %v501 = vpack.c.b16 %v329, %v325
  %v502 = vpack.c.b16 %v334, %v330
  %v503 = vpack.c.b16 %v335, %v331
  %v504 = vpack.c.b16 %v336, %v332
  %v505 = vpack.c.b16 %v337, %v333
  %v506 = vpack.c.b16 %v342, %v338
  %v507 = vpack.c.b16 %v343, %v339
  %v508 = vpack.c.b16 %v344, %v340
  %v509 = vpack.c.b16 %v345, %v341
  %v510 = vpack.c.b16 %v350, %v346
  %v511 = vpack.c.b16 %v351, %v347
  %v512 = vpack.c.b16 %v352, %v348
  %v513 = vpack.c.b16 %v353, %v349
  %v514 = vpack.c.b16 %v358, %v354
  %v515 = vpack.c.b16 %v359, %v355
  %v516 = vpack.c.b16 %v360, %v356
  %v517 = vpack.c.b16 %v361, %v357
  %v518 = vpack.c.b16 %v366, %v362
  %v519 = vpack.c.b16 %v367, %v363
  %v520 = vpack.c.b16 %v368, %v364
  %v521 = vpack.c.b16 %v369, %v365
  %v522 = vpack.c.b16 %v374, %v370
  %v523 = vpack.c.b16 %v375, %v371
  %v524 = vpack.c.b16 %v376, %v372
  %v525 = vpack.c.b16 %v377, %v373
  %v526 = vpack.c.b16 %v382, %v378
  %v527 = vpack.c.b16 %v383, %v379
  %v528 = vpack.c.b16 %v384, %v380
  %v529 = vpack.c.b16 %v385, %v381
  %v530 = vpack.c.b16 %v390, %v386
  %v531 = vpack.c.b16 %v391, %v387
  %v532 = vpack.c.b16 %v392, %v388
  %v533 = vpack.c.b16 %v393, %v389
  %v534 = vpack.c.b16 %v398, %v394
  %v535 = vpack.c.b16 %v399, %v395
  %v536 = vpack.c.b16 %v400, %v396
  %v537 = vpack.c.b16 %v401, %v397
  %v538 = vpack.c.b16 %v406, %v402
  %v539 = vpack.c.b16 %v407, %v403
  %v540 = vpack.c.b16 %v408, %v404
  %v541 = vpack.c.b16 %v409, %v405
  %v542 = vpack.c.b16 %v414, %v410
  %v543 = vpack.c.b16 %v415, %v411
  %v544 = vpack.c.b16 %v416, %v412
  %v545 = vpack.c.b16 %v417, %v413
  %v546 = vpack.c.b16 %v422, %v418
  %v547 = vpack.c.b16 %v423, %v419
  %v548 = vpack.c.b16 %v424, %v420
  %v549 = vpack.c.b16 %v425, %v421
  %v550 = vpack.c.b16 %v430, %v426
  %v551 = vpack.c.b16 %v431, %v427
  %v552 = vpack.c.b16 %v432, %v428
  %v553 = vpack.c.b16 %v433, %v429
  %v554 = vpack.c.b16 %v438, %v434
  %v555 = vpack.c.b16 %v439, %v435
  %v556 = vpack.c.b16 %v440, %v436
  %v557 = vpack.c.b16 %v441, %v437
  %v558 = vpack.c.b16 %v446, %v442
  %v559 = vpack.c.b16 %v447, %v443
  %v560 = vpack.c.b16 %v448, %v444
  %v561 = vpack.c.b16 %v449, %v445
  %v562 = vpack.c.b16 %v454, %v450
  %v563 = vpack.c.b16 %v455, %v451
  %v564 = vpack.c.b16 %v456, %v452
  %v565 = vpack.c.b16 %v457, %v453
  %v566 = vpack.c.b16 %v462, %v458
  %v567 = vpack.c.b16 %v463, %v459
  %v568 = vpack.c.b16 %v464, %v460
  %v569 = vpack.c.b16 %v465, %v461
  %v570 = vpack.c.b16 %v470, %v466
  %v571 = vpack.c.b16 %v471, %v467
  %v572 = vpack.c.b16 %v472, %v468
  %v573 = vpack.c.b16 %v473, %v469
  %v574 = vpack.c.b16 %v474, %v474
  %v575 = vpack.c.b16 %v475, %v475
  %v576 = vpack.c.b16 %v476, %v476
  %v577 = vpack.c.b16 %v477, %v477
  %v742 = vunpack.c.l.b16 %v113
  %v743 = vunpack.c.l.b16 %v114
  %v744 = vunpack.c.l.b16 %v115
  %v745 = vunpack.c.l.b16 %v116
  %v746 = vunpack.c.l.b16 %v117
  %v747 = vunpack.c.l.b16 %v118
  %v748 = vunpack.c.l.b16 %v119
  %v749 = vunpack.c.l.b16 %v120
  %v750 = vunpack.c.l.b16 %v121
  %v751 = vunpack.c.l.b16 %v122
  %v752 = vunpack.c.l.b16 %v123
  %v753 = vunpack.c.l.b16 %v124
  %v754 = vunpack.c.l.b16 %v125
  %v755 = vunpack.c.l.b16 %v126
  %v756 = vunpack.c.l.b16 %v127
  %v757 = vunpack.c.l.b16 %v128
  %v758 = vunpack.c.l.b16 %v129
  %v759 = vunpack.c.l.b16 %v130
  %v760 = vunpack.c.l.b16 %v131
  %v761 = vunpack.c.l.b16 %v132
  %v762 = vunpack.c.l.b16 %v133
  %v763 = vunpack.c.l.b16 %v134
  %v764 = vunpack.c.l.b16 %v135
  %v765 = vunpack.c.l.b16 %v136
  %v766 = vunpack.c.l.b16 %v137
  %v767 = vunpack.c.l.b16 %v138
  %v768 = vunpack.c.l.b16 %v139
  %v769 = vunpack.c.l.b16 %v140
  %v770 = vunpack.c.l.b16 %v141
  %v771 = vunpack.c.l.b16 %v142
  %v772 = vunpack.c.l.b16 %v143
  %v773 = vunpack.c.l.b16 %v144
  %v774 = vunpack.c.l.b16 %v145
  %v775 = vunpack.c.l.b16 %v146
  %v776 = vunpack.c.l.b16 %v147
  %v777 = vunpack.c.l.b16 %v148
  %v778 = vunpack.c.l.b16 %v149
  %v779 = vunpack.c.l.b16 %v150
  %v780 = vunpack.c.l.b16 %v151
  %v781 = vunpack.c.l.b16 %v152
  %v782 = vunpack.c.l.b16 %v153
  %v783 = vunpack.c.l.b16 %v154
  %v784 = vunpack.c.l.b16 %v155
  %v785 = vunpack.c.l.b16 %v156
  %v786 = vunpack.c.l.b16 %v157
  %v787 = vunpack.c.l.b16 %v158
  %v788 = vunpack.c.l.b16 %v159
  %v789 = vunpack.c.l.b16 %v160
  %v790 = vunpack.c.l.b16 %v161
  %v791 = vunpack.c.l.b16 %v162
  %v792 = vunpack.c.l.b16 %v163
  %v793 = vunpack.c.l.b16 %v164
  %v794 = vunpack.c.l.b16 %v165
  %v795 = vunpack.c.l.b16 %v166
  %v796 = vunpack.c.l.b16 %v167
  %v797 = vunpack.c.l.b16 %v168
  %v798 = vunpack.c.l.b16 %v169
  %v799 = vunpack.c.l.b16 %v170
  %v800 = vunpack.c.l.b16 %v171
  %v801 = vunpack.c.l.b16 %v172
  %v802 = vunpack.c.l.b16 %v173
  %v803 = vunpack.c.l.b16 %v174
  %v804 = vunpack.c.l.b16 %v175
  %v805 = vunpack.c.l.b16 %v176
  %v806 = vpack.c.b16 %v743, %v742
  %v807 = vpack.c.b16 %v745, %v744
  %v808 = vpack.c.b16 %v747, %v746
  %v809 = vpack.c.b16 %v749, %v748
  %v810 = vpack.c.b16 %v751, %v750
  %v811 = vpack.c.b16 %v753, %v752
  %v812 = vpack.c.b16 %v755, %v754
  %v813 = vpack.c.b16 %v757, %v756
  %v814 = vpack.c.b16 %v759, %v758
  %v815 = vpack.c.b16 %v761, %v760
  %v816 = vpack.c.b16 %v763, %v762
  %v817 = vpack.c.b16 %v765, %v764
  %v818 = vpack.c.b16 %v767, %v766
  %v819 = vpack.c.b16 %v769, %v768
  %v820 = vpack.c.b16 %v771, %v770
  %v821 = vpack.c.b16 %v773, %v772
  %v822 = vpack.c.b16 %v775, %v774
  %v823 = vpack.c.b16 %v777, %v776
  %v824 = vpack.c.b16 %v779, %v778
  %v825 = vpack.c.b16 %v781, %v780
  %v826 = vpack.c.b16 %v783, %v782
  %v827 = vpack.c.b16 %v785, %v784
  %v828 = vpack.c.b16 %v787, %v786
  %v829 = vpack.c.b16 %v789, %v788
  %v830 = vpack.c.b16 %v791, %v790
  %v831 = vpack.c.b16 %v793, %v792
  %v832 = vpack.c.b16 %v795, %v794
  %v833 = vpack.c.b16 %v797, %v796
  %v834 = vpack.c.b16 %v799, %v798
  %v835 = vpack.c.b16 %v801, %v800
  %v836 = vpack.c.b16 %v803, %v802
  %v837 = vpack.c.b16 %v805, %v804
  %870 = vmatprep.subr.bf16.mxu0 0
  %871 = vmatpush1.bf16.msra.mxu0 %v806
  %872 = vmatprep.subr.bf16.mxu0 0
  %873 = vmatpush1.bf16.msra.mxu0 %v807
  %874 = vmatprep.subr.bf16.mxu0 0
  %875 = vmatpush1.bf16.msra.mxu0 %v808
  %876 = vmatprep.subr.bf16.mxu0 0
  %877 = vmatpush1.bf16.msra.mxu0 %v809
  %878 = vmatprep.subr.bf16.mxu0 0
  %879 = vmatpush1.bf16.msra.mxu0 %v810
  %880 = vmatprep.subr.bf16.mxu0 0
  %881 = vmatpush1.bf16.msra.mxu0 %v811
  %882 = vmatprep.subr.bf16.mxu0 0
  %883 = vmatpush1.bf16.msra.mxu0 %v812
  %884 = vmatprep.subr.bf16.mxu0 0
  %885 = vmatpush1.bf16.msra.mxu0 %v813
  %886 = vmatprep.subr.bf16.mxu0 0
  %887 = vmatpush1.bf16.msra.mxu0 %v814
  %888 = vmatprep.subr.bf16.mxu0 0
  %889 = vmatpush1.bf16.msra.mxu0 %v815
  %890 = vmatprep.subr.bf16.mxu0 0
  %891 = vmatpush1.bf16.msra.mxu0 %v816
  %892 = vmatprep.subr.bf16.mxu0 0
  %893 = vmatpush1.bf16.msra.mxu0 %v817
  %894 = vmatprep.subr.bf16.mxu0 0
  %895 = vmatpush1.bf16.msra.mxu0 %v818
  %896 = vmatprep.subr.bf16.mxu0 0
  %897 = vmatpush1.bf16.msra.mxu0 %v819
  %898 = vmatprep.subr.bf16.mxu0 0
  %899 = vmatpush1.bf16.msra.mxu0 %v820
  %900 = vmatprep.subr.bf16.mxu0 0
  %901 = vmatpush1.bf16.msra.mxu0 %v821
  %902 = vmatprep.mubr.bf16.mxu0 %v479
  %903 = vmatmul.mubr.bf16.gmra.mrb[0].mxu0 %v478
  %v904 = vpop.f32.mrb[0].mxu0
  %v905 = vadd.f32 %v182, %v904
  %v906 = vpop.f32.mrb[0].mxu0
  %v907 = vpop.f32.mrb[0].mxu0
  %v908 = vadd.f32 %v182, %v907
  %v909 = vpop.f32.mrb[0].mxu0
  %910 = vmatprep.mubr.bf16.mxu0 %v483
  %911 = vmatmul.mubr.bf16.gmra.mrb[0].mxu0 %v482
  %v912 = vpop.f32.mrb[0].mxu0
  %v913 = vadd.f32 %v182, %v912
  %v914 = vpop.f32.mrb[0].mxu0
  %v915 = vpop.f32.mrb[0].mxu0
  %v916 = vadd.f32 %v182, %v915
  %v917 = vpop.f32.mrb[0].mxu0
  %918 = vmatprep.mubr.bf16.mxu0 %v487
  %919 = vmatmul.mubr.bf16.gmra.mrb[0].mxu0 %v486
  %v920 = vpop.f32.mrb[0].mxu0
  %v921 = vadd.f32 %v182, %v920
  %v922 = vpop.f32.mrb[0].mxu0
  %v923 = vpop.f32.mrb[0].mxu0
  %v924 = vadd.f32 %v182, %v923
  %v925 = vpop.f32.mrb[0].mxu0
  %926 = vmatprep.mubr.bf16.mxu0 %v491
  %927 = vmatmul.mubr.bf16.gmra.mrb[0].mxu0 %v490
  %v928 = vpop.f32.mrb[0].mxu0
  %v929 = vadd.f32 %v182, %v928
  %v930 = vpop.f32.mrb[0].mxu0
  %v931 = vpop.f32.mrb[0].mxu0
  %v932 = vadd.f32 %v182, %v931
  %v933 = vpop.f32.mrb[0].mxu0
  %934 = vmatprep.mubr.bf16.mxu0 %v495
  %935 = vmatmul.mubr.bf16.gmra.mrb[0].mxu0 %v494
  %v936 = vpop.f32.mrb[0].mxu0
  %v937 = vadd.f32 %v182, %v936
  %v938 = vpop.f32.mrb[0].mxu0
  %v939 = vpop.f32.mrb[0].mxu0
  %v940 = vadd.f32 %v182, %v939
  %v941 = vpop.f32.mrb[0].mxu0
  %942 = vmatprep.mubr.bf16.mxu0 %v499
  %943 = vmatmul.mubr.bf16.gmra.mrb[0].mxu0 %v498
  %v944 = vpop.f32.mrb[0].mxu0
  %v945 = vadd.f32 %v182, %v944
  %v946 = vpop.f32.mrb[0].mxu0
  %v947 = vpop.f32.mrb[0].mxu0
  %v948 = vadd.f32 %v182, %v947
  %v949 = vpop.f32.mrb[0].mxu0
  %950 = vmatprep.mubr.bf16.mxu0 %v503
  %951 = vmatmul.mubr.bf16.gmra.mrb[0].mxu0 %v502
  %v952 = vpop.f32.mrb[0].mxu0
  %v953 = vadd.f32 %v182, %v952
  %v954 = vpop.f32.mrb[0].mxu0
  %v955 = vpop.f32.mrb[0].mxu0
  %v956 = vadd.f32 %v182, %v955
  %v957 = vpop.f32.mrb[0].mxu0
  %958 = vmatprep.mubr.bf16.mxu0 %v507
  %959 = vmatmul.mubr.bf16.gmra.mrb[0].mxu0 %v506
  %v960 = vpop.f32.mrb[0].mxu0
  %v961 = vadd.f32 %v182, %v960
  %v962 = vpop.f32.mrb[0].mxu0
  %v963 = vpop.f32.mrb[0].mxu0
  %v964 = vadd.f32 %v182, %v963
  %v965 = vpop.f32.mrb[0].mxu0
  %966 = vmatprep.mubr.bf16.mxu0 %v511
  %967 = vmatmul.mubr.bf16.gmra.mrb[0].mxu0 %v510
  %v968 = vpop.f32.mrb[0].mxu0
  %v969 = vadd.f32 %v182, %v968
  %v970 = vpop.f32.mrb[0].mxu0
  %v971 = vpop.f32.mrb[0].mxu0
  %v972 = vadd.f32 %v182, %v971
  %v973 = vpop.f32.mrb[0].mxu0
  %974 = vmatprep.mubr.bf16.mxu0 %v515
  %975 = vmatmul.mubr.bf16.gmra.mrb[0].mxu0 %v514
  %v976 = vpop.f32.mrb[0].mxu0
  %v977 = vadd.f32 %v182, %v976
  %v978 = vpop.f32.mrb[0].mxu0
  %v979 = vpop.f32.mrb[0].mxu0
  %v980 = vadd.f32 %v182, %v979
  %v981 = vpop.f32.mrb[0].mxu0
  %982 = vmatprep.mubr.bf16.mxu0 %v519
  %983 = vmatmul.mubr.bf16.gmra.mrb[0].mxu0 %v518
  %v984 = vpop.f32.mrb[0].mxu0
  %v985 = vadd.f32 %v182, %v984
  %v986 = vpop.f32.mrb[0].mxu0
  %v987 = vpop.f32.mrb[0].mxu0
  %v988 = vadd.f32 %v182, %v987
  %v989 = vpop.f32.mrb[0].mxu0
  %990 = vmatprep.mubr.bf16.mxu0 %v523
  %991 = vmatmul.mubr.bf16.gmra.mrb[0].mxu0 %v522
  %v992 = vpop.f32.mrb[0].mxu0
  %v993 = vadd.f32 %v182, %v992
  %v994 = vpop.f32.mrb[0].mxu0
  %v995 = vpop.f32.mrb[0].mxu0
  %v996 = vadd.f32 %v182, %v995
  %v997 = vpop.f32.mrb[0].mxu0
  %998 = vmatprep.mubr.bf16.mxu0 %v527
  %999 = vmatmul.mubr.bf16.gmra.mrb[0].mxu0 %v526
  %v1000 = vpop.f32.mrb[0].mxu0
  %v1001 = vadd.f32 %v182, %v1000
  %v1002 = vpop.f32.mrb[0].mxu0
  %v1003 = vpop.f32.mrb[0].mxu0
  %v1004 = vadd.f32 %v182, %v1003
  %v1005 = vpop.f32.mrb[0].mxu0
  %1006 = vmatprep.mubr.bf16.mxu0 %v531
  %1007 = vmatmul.mubr.bf16.gmra.mrb[0].mxu0 %v530
  %v1008 = vpop.f32.mrb[0].mxu0
  %v1009 = vadd.f32 %v182, %v1008
  %v1010 = vpop.f32.mrb[0].mxu0
  %v1011 = vpop.f32.mrb[0].mxu0
  %v1012 = vadd.f32 %v182, %v1011
  %v1013 = vpop.f32.mrb[0].mxu0
  %1014 = vmatprep.mubr.bf16.mxu0 %v535
  %1015 = vmatmul.mubr.bf16.gmra.mrb[0].mxu0 %v534
  %v1016 = vpop.f32.mrb[0].mxu0
  %v1017 = vadd.f32 %v182, %v1016
  %v1018 = vpop.f32.mrb[0].mxu0
  %v1019 = vpop.f32.mrb[0].mxu0
  %v1020 = vadd.f32 %v182, %v1019
  %v1021 = vpop.f32.mrb[0].mxu0
  %1022 = vmatprep.mubr.bf16.mxu0 %v539
  %1023 = vmatmul.mubr.bf16.gmra.mrb[0].mxu0 %v538
  %v1024 = vpop.f32.mrb[0].mxu0
  %v1025 = vadd.f32 %v182, %v1024
  %v1026 = vpop.f32.mrb[0].mxu0
  %v1027 = vpop.f32.mrb[0].mxu0
  %v1028 = vadd.f32 %v182, %v1027
  %v1029 = vpop.f32.mrb[0].mxu0
  %1030 = vmatprep.mubr.bf16.mxu0 %v543
  %1031 = vmatmul.mubr.bf16.gmra.mrb[0].mxu0 %v542
  %v1032 = vpop.f32.mrb[0].mxu0
  %v1033 = vadd.f32 %v182, %v1032
  %v1034 = vpop.f32.mrb[0].mxu0
  %v1035 = vpop.f32.mrb[0].mxu0
  %v1036 = vadd.f32 %v182, %v1035
  %v1037 = vpop.f32.mrb[0].mxu0
  %1038 = vmatprep.mubr.bf16.mxu0 %v547
  %1039 = vmatmul.mubr.bf16.gmra.mrb[0].mxu0 %v546
  %v1040 = vpop.f32.mrb[0].mxu0
  %v1041 = vadd.f32 %v182, %v1040
  %v1042 = vpop.f32.mrb[0].mxu0
  %v1043 = vpop.f32.mrb[0].mxu0
  %v1044 = vadd.f32 %v182, %v1043
  %v1045 = vpop.f32.mrb[0].mxu0
  %1046 = vmatprep.mubr.bf16.mxu0 %v551
  %1047 = vmatmul.mubr.bf16.gmra.mrb[0].mxu0 %v550
  %v1048 = vpop.f32.mrb[0].mxu0
  %v1049 = vadd.f32 %v182, %v1048
  %v1050 = vpop.f32.mrb[0].mxu0
  %v1051 = vpop.f32.mrb[0].mxu0
  %v1052 = vadd.f32 %v182, %v1051
  %v1053 = vpop.f32.mrb[0].mxu0
  %1054 = vmatprep.mubr.bf16.mxu0 %v555
  %1055 = vmatmul.mubr.bf16.gmra.mrb[0].mxu0 %v554
  %v1056 = vpop.f32.mrb[0].mxu0
  %v1057 = vadd.f32 %v182, %v1056
  %v1058 = vpop.f32.mrb[0].mxu0
  %v1059 = vpop.f32.mrb[0].mxu0
  %v1060 = vadd.f32 %v182, %v1059
  %v1061 = vpop.f32.mrb[0].mxu0
  %1062 = vmatprep.mubr.bf16.mxu0 %v559
  %1063 = vmatmul.mubr.bf16.gmra.mrb[0].mxu0 %v558
  %v1064 = vpop.f32.mrb[0].mxu0
  %v1065 = vadd.f32 %v182, %v1064
  %v1066 = vpop.f32.mrb[0].mxu0
  %v1067 = vpop.f32.mrb[0].mxu0
  %v1068 = vadd.f32 %v182, %v1067
  %v1069 = vpop.f32.mrb[0].mxu0
  %1070 = vmatprep.mubr.bf16.mxu0 %v563
  %1071 = vmatmul.mubr.bf16.gmra.mrb[0].mxu0 %v562
  %v1072 = vpop.f32.mrb[0].mxu0
  %v1073 = vadd.f32 %v182, %v1072
  %v1074 = vpop.f32.mrb[0].mxu0
  %v1075 = vpop.f32.mrb[0].mxu0
  %v1076 = vadd.f32 %v182, %v1075
  %v1077 = vpop.f32.mrb[0].mxu0
  %1078 = vmatprep.mubr.bf16.mxu0 %v567
  %1079 = vmatmul.mubr.bf16.gmra.mrb[0].mxu0 %v566
  %v1080 = vpop.f32.mrb[0].mxu0
  %v1081 = vadd.f32 %v182, %v1080
  %v1082 = vpop.f32.mrb[0].mxu0
  %v1083 = vpop.f32.mrb[0].mxu0
  %v1084 = vadd.f32 %v182, %v1083
  %v1085 = vpop.f32.mrb[0].mxu0
  %1086 = vmatprep.mubr.bf16.mxu0 %v571
  %1087 = vmatmul.mubr.bf16.gmra.mrb[0].mxu0 %v570
  %v1088 = vpop.f32.mrb[0].mxu0
  %v1089 = vadd.f32 %v182, %v1088
  %v1090 = vpop.f32.mrb[0].mxu0
  %v1091 = vpop.f32.mrb[0].mxu0
  %v1092 = vadd.f32 %v182, %v1091
  %v1093 = vpop.f32.mrb[0].mxu0
  %1094 = vmatprep.mubr.bf16.mxu0 %v575
  %1095 = vmatmul.mubr.bf16.gmra.mrb[0].mxu0 %v574
  %v1096 = vpop.f32.mrb[0].mxu0
  %v1097 = vadd.f32 %v182, %v1096
  %v1098 = vpop.f32.mrb[0].mxu0
  %v1099 = vpop.f32.mrb[0].mxu0
  %v1100 = vpop.f32.mrb[0].mxu0
  %1101 = vdwg.mxu0
  %1102 = vmatprep.subr.bf16.mxu0 0
  %1103 = vmatpush1.bf16.msra.mxu0 %v822
  %1104 = vmatprep.subr.bf16.mxu0 0
  %1105 = vmatpush1.bf16.msra.mxu0 %v823
  %1106 = vmatprep.subr.bf16.mxu0 0
  %1107 = vmatpush1.bf16.msra.mxu0 %v824
  %1108 = vmatprep.subr.bf16.mxu0 0
  %1109 = vmatpush1.bf16.msra.mxu0 %v825
  %1110 = vmatprep.subr.bf16.mxu0 0
  %1111 = vmatpush1.bf16.msra.mxu0 %v826
  %1112 = vmatprep.subr.bf16.mxu0 0
  %1113 = vmatpush1.bf16.msra.mxu0 %v827
  %1114 = vmatprep.subr.bf16.mxu0 0
  %1115 = vmatpush1.bf16.msra.mxu0 %v828
  %1116 = vmatprep.subr.bf16.mxu0 0
  %1117 = vmatpush1.bf16.msra.mxu0 %v829
  %1118 = vmatprep.subr.bf16.mxu0 0
  %1119 = vmatpush1.bf16.msra.mxu0 %v830
  %1120 = vmatprep.subr.bf16.mxu0 0
  %1121 = vmatpush1.bf16.msra.mxu0 %v831
  %1122 = vmatprep.subr.bf16.mxu0 0
  %1123 = vmatpush1.bf16.msra.mxu0 %v832
  %1124 = vmatprep.subr.bf16.mxu0 0
  %1125 = vmatpush1.bf16.msra.mxu0 %v833
  %1126 = vmatprep.subr.bf16.mxu0 0
  %1127 = vmatpush1.bf16.msra.mxu0 %v834
  %1128 = vmatprep.subr.bf16.mxu0 0
  %1129 = vmatpush1.bf16.msra.mxu0 %v835
  %1130 = vmatprep.subr.bf16.mxu0 0
  %1131 = vmatpush1.bf16.msra.mxu0 %v836
  %1132 = vmatprep.subr.bf16.mxu0 0
  %1133 = vmatpush1.bf16.msra.mxu0 %v837
  %1134 = vmatprep.mubr.bf16.mxu0 %v481
  %1135 = vmatmul.mubr.bf16.gmra.mrb[0].mxu0 %v480
  %v1136 = vpop.f32.mrb[0].mxu0
  %v1137 = vadd.f32 %v905, %v1136
  %v1138 = vpop.f32.mrb[0].mxu0
  %v1139 = vpop.f32.mrb[0].mxu0
  %v1140 = vadd.f32 %v908, %v1139
  %v1141 = vpop.f32.mrb[0].mxu0
  %1142 = vmatprep.mubr.bf16.mxu0 %v485
  %1143 = vmatmul.mubr.bf16.gmra.mrb[0].mxu0 %v484
  %v1144 = vpop.f32.mrb[0].mxu0
  %v1145 = vadd.f32 %v913, %v1144
  %v1146 = vpop.f32.mrb[0].mxu0
  %v1147 = vpop.f32.mrb[0].mxu0
  %v1148 = vadd.f32 %v916, %v1147
  %v1149 = vpop.f32.mrb[0].mxu0
  %1150 = vmatprep.mubr.bf16.mxu0 %v489
  %1151 = vmatmul.mubr.bf16.gmra.mrb[0].mxu0 %v488
  %v1152 = vpop.f32.mrb[0].mxu0
  %v1153 = vadd.f32 %v921, %v1152
  %v1154 = vpop.f32.mrb[0].mxu0
  %v1155 = vpop.f32.mrb[0].mxu0
  %v1156 = vadd.f32 %v924, %v1155
  %v1157 = vpop.f32.mrb[0].mxu0
  %1158 = vmatprep.mubr.bf16.mxu0 %v493
  %1159 = vmatmul.mubr.bf16.gmra.mrb[0].mxu0 %v492
  %v1160 = vpop.f32.mrb[0].mxu0
  %v1161 = vadd.f32 %v929, %v1160
  %v1162 = vpop.f32.mrb[0].mxu0
  %v1163 = vpop.f32.mrb[0].mxu0
  %v1164 = vadd.f32 %v932, %v1163
  %v1165 = vpop.f32.mrb[0].mxu0
  %1166 = vmatprep.mubr.bf16.mxu0 %v497
  %1167 = vmatmul.mubr.bf16.gmra.mrb[0].mxu0 %v496
  %v1168 = vpop.f32.mrb[0].mxu0
  %v1169 = vadd.f32 %v937, %v1168
  %v1170 = vpop.f32.mrb[0].mxu0
  %v1171 = vpop.f32.mrb[0].mxu0
  %v1172 = vadd.f32 %v940, %v1171
  %v1173 = vpop.f32.mrb[0].mxu0
  %1174 = vmatprep.mubr.bf16.mxu0 %v501
  %1175 = vmatmul.mubr.bf16.gmra.mrb[0].mxu0 %v500
  %v1176 = vpop.f32.mrb[0].mxu0
  %v1177 = vadd.f32 %v945, %v1176
  %v1178 = vpop.f32.mrb[0].mxu0
  %v1179 = vpop.f32.mrb[0].mxu0
  %v1180 = vadd.f32 %v948, %v1179
  %v1181 = vpop.f32.mrb[0].mxu0
  %1182 = vmatprep.mubr.bf16.mxu0 %v505
  %1183 = vmatmul.mubr.bf16.gmra.mrb[0].mxu0 %v504
  %v1184 = vpop.f32.mrb[0].mxu0
  %v1185 = vadd.f32 %v953, %v1184
  %v1186 = vpop.f32.mrb[0].mxu0
  %v1187 = vpop.f32.mrb[0].mxu0
  %v1188 = vadd.f32 %v956, %v1187
  %v1189 = vpop.f32.mrb[0].mxu0
  %1190 = vmatprep.mubr.bf16.mxu0 %v509
  %1191 = vmatmul.mubr.bf16.gmra.mrb[0].mxu0 %v508
  %v1192 = vpop.f32.mrb[0].mxu0
  %v1193 = vadd.f32 %v961, %v1192
  %v1194 = vpop.f32.mrb[0].mxu0
  %v1195 = vpop.f32.mrb[0].mxu0
  %v1196 = vadd.f32 %v964, %v1195
  %v1197 = vpop.f32.mrb[0].mxu0
  %1198 = vmatprep.mubr.bf16.mxu0 %v513
  %1199 = vmatmul.mubr.bf16.gmra.mrb[0].mxu0 %v512
  %v1200 = vpop.f32.mrb[0].mxu0
  %v1201 = vadd.f32 %v969, %v1200
  %v1202 = vpop.f32.mrb[0].mxu0
  %v1203 = vpop.f32.mrb[0].mxu0
  %v1204 = vadd.f32 %v972, %v1203
  %v1205 = vpop.f32.mrb[0].mxu0
  %1206 = vmatprep.mubr.bf16.mxu0 %v517
  %1207 = vmatmul.mubr.bf16.gmra.mrb[0].mxu0 %v516
  %v1208 = vpop.f32.mrb[0].mxu0
  %v1209 = vadd.f32 %v977, %v1208
  %v1210 = vpop.f32.mrb[0].mxu0
  %v1211 = vpop.f32.mrb[0].mxu0
  %v1212 = vadd.f32 %v980, %v1211
  %v1213 = vpop.f32.mrb[0].mxu0
  %1214 = vmatprep.mubr.bf16.mxu0 %v521
  %1215 = vmatmul.mubr.bf16.gmra.mrb[0].mxu0 %v520
  %v1216 = vpop.f32.mrb[0].mxu0
  %v1217 = vadd.f32 %v985, %v1216
  %v1218 = vpop.f32.mrb[0].mxu0
  %v1219 = vpop.f32.mrb[0].mxu0
  %v1220 = vadd.f32 %v988, %v1219
  %v1221 = vpop.f32.mrb[0].mxu0
  %1222 = vmatprep.mubr.bf16.mxu0 %v525
  %1223 = vmatmul.mubr.bf16.gmra.mrb[0].mxu0 %v524
  %v1224 = vpop.f32.mrb[0].mxu0
  %v1225 = vadd.f32 %v993, %v1224
  %v1226 = vpop.f32.mrb[0].mxu0
  %v1227 = vpop.f32.mrb[0].mxu0
  %v1228 = vadd.f32 %v996, %v1227
  %v1229 = vpop.f32.mrb[0].mxu0
  %1230 = vmatprep.mubr.bf16.mxu0 %v529
  %1231 = vmatmul.mubr.bf16.gmra.mrb[0].mxu0 %v528
  %v1232 = vpop.f32.mrb[0].mxu0
  %v1233 = vadd.f32 %v1001, %v1232
  %v1234 = vpop.f32.mrb[0].mxu0
  %v1235 = vpop.f32.mrb[0].mxu0
  %v1236 = vadd.f32 %v1004, %v1235
  %v1237 = vpop.f32.mrb[0].mxu0
  %1238 = vmatprep.mubr.bf16.mxu0 %v533
  %1239 = vmatmul.mubr.bf16.gmra.mrb[0].mxu0 %v532
  %v1240 = vpop.f32.mrb[0].mxu0
  %v1241 = vadd.f32 %v1009, %v1240
  %v1242 = vpop.f32.mrb[0].mxu0
  %v1243 = vpop.f32.mrb[0].mxu0
  %v1244 = vadd.f32 %v1012, %v1243
  %v1245 = vpop.f32.mrb[0].mxu0
  %1246 = vmatprep.mubr.bf16.mxu0 %v537
  %1247 = vmatmul.mubr.bf16.gmra.mrb[0].mxu0 %v536
  %v1248 = vpop.f32.mrb[0].mxu0
  %v1249 = vadd.f32 %v1017, %v1248
  %v1250 = vpop.f32.mrb[0].mxu0
  %v1251 = vpop.f32.mrb[0].mxu0
  %v1252 = vadd.f32 %v1020, %v1251
  %v1253 = vpop.f32.mrb[0].mxu0
  %1254 = vmatprep.mubr.bf16.mxu0 %v541
  %1255 = vmatmul.mubr.bf16.gmra.mrb[0].mxu0 %v540
  %v1256 = vpop.f32.mrb[0].mxu0
  %v1257 = vadd.f32 %v1025, %v1256
  %v1258 = vpop.f32.mrb[0].mxu0
  %v1259 = vpop.f32.mrb[0].mxu0
  %v1260 = vadd.f32 %v1028, %v1259
  %v1261 = vpop.f32.mrb[0].mxu0
  %1262 = vmatprep.mubr.bf16.mxu0 %v545
  %1263 = vmatmul.mubr.bf16.gmra.mrb[0].mxu0 %v544
  %v1264 = vpop.f32.mrb[0].mxu0
  %v1265 = vadd.f32 %v1033, %v1264
  %v1266 = vpop.f32.mrb[0].mxu0
  %v1267 = vpop.f32.mrb[0].mxu0
  %v1268 = vadd.f32 %v1036, %v1267
  %v1269 = vpop.f32.mrb[0].mxu0
  %1270 = vmatprep.mubr.bf16.mxu0 %v549
  %1271 = vmatmul.mubr.bf16.gmra.mrb[0].mxu0 %v548
  %v1272 = vpop.f32.mrb[0].mxu0
  %v1273 = vadd.f32 %v1041, %v1272
  %v1274 = vpop.f32.mrb[0].mxu0
  %v1275 = vpop.f32.mrb[0].mxu0
  %v1276 = vadd.f32 %v1044, %v1275
  %v1277 = vpop.f32.mrb[0].mxu0
  %1278 = vmatprep.mubr.bf16.mxu0 %v553
  %1279 = vmatmul.mubr.bf16.gmra.mrb[0].mxu0 %v552
  %v1280 = vpop.f32.mrb[0].mxu0
  %v1281 = vadd.f32 %v1049, %v1280
  %v1282 = vpop.f32.mrb[0].mxu0
  %v1283 = vpop.f32.mrb[0].mxu0
  %v1284 = vadd.f32 %v1052, %v1283
  %v1285 = vpop.f32.mrb[0].mxu0
  %1286 = vmatprep.mubr.bf16.mxu0 %v557
  %1287 = vmatmul.mubr.bf16.gmra.mrb[0].mxu0 %v556
  %v1288 = vpop.f32.mrb[0].mxu0
  %v1289 = vadd.f32 %v1057, %v1288
  %v1290 = vpop.f32.mrb[0].mxu0
  %v1291 = vpop.f32.mrb[0].mxu0
  %v1292 = vadd.f32 %v1060, %v1291
  %v1293 = vpop.f32.mrb[0].mxu0
  %1294 = vmatprep.mubr.bf16.mxu0 %v561
  %1295 = vmatmul.mubr.bf16.gmra.mrb[0].mxu0 %v560
  %v1296 = vpop.f32.mrb[0].mxu0
  %v1297 = vadd.f32 %v1065, %v1296
  %v1298 = vpop.f32.mrb[0].mxu0
  %v1299 = vpop.f32.mrb[0].mxu0
  %v1300 = vadd.f32 %v1068, %v1299
  %v1301 = vpop.f32.mrb[0].mxu0
  %1302 = vmatprep.mubr.bf16.mxu0 %v565
  %1303 = vmatmul.mubr.bf16.gmra.mrb[0].mxu0 %v564
  %v1304 = vpop.f32.mrb[0].mxu0
  %v1305 = vadd.f32 %v1073, %v1304
  %v1306 = vpop.f32.mrb[0].mxu0
  %v1307 = vpop.f32.mrb[0].mxu0
  %v1308 = vadd.f32 %v1076, %v1307
  %v1309 = vpop.f32.mrb[0].mxu0
  %1310 = vmatprep.mubr.bf16.mxu0 %v569
  %1311 = vmatmul.mubr.bf16.gmra.mrb[0].mxu0 %v568
  %v1312 = vpop.f32.mrb[0].mxu0
  %v1313 = vadd.f32 %v1081, %v1312
  %v1314 = vpop.f32.mrb[0].mxu0
  %v1315 = vpop.f32.mrb[0].mxu0
  %v1316 = vadd.f32 %v1084, %v1315
  %v1317 = vpop.f32.mrb[0].mxu0
  %1318 = vmatprep.mubr.bf16.mxu0 %v573
  %1319 = vmatmul.mubr.bf16.gmra.mrb[0].mxu0 %v572
  %v1320 = vpop.f32.mrb[0].mxu0
  %v1321 = vadd.f32 %v1089, %v1320
  %v1322 = vpop.f32.mrb[0].mxu0
  %v1323 = vpop.f32.mrb[0].mxu0
  %v1324 = vadd.f32 %v1092, %v1323
  %v1325 = vpop.f32.mrb[0].mxu0
  %1326 = vmatprep.mubr.bf16.mxu0 %v577
  %1327 = vmatmul.mubr.bf16.gmra.mrb[0].mxu0 %v576
  %v1328 = vpop.f32.mrb[0].mxu0
  %v1329 = vadd.f32 %v1097, %v1328
  %v1330 = vpop.f32.mrb[0].mxu0
  %v1331 = vpop.f32.mrb[0].mxu0
  %v1332 = vpop.f32.mrb[0].mxu0
  %1333 = vdwg.mxu0
  %v1334 = vmax.f32 %v1137, 0.0
  %v1335 = vmax.f32 %v1140, 0.0
  %v1336 = vmax.f32 %v1145, 0.0
  %v1337 = vmax.f32 %v1148, 0.0
  %v1338 = vmax.f32 %v1153, 0.0
  %v1339 = vmax.f32 %v1156, 0.0
  %v1340 = vmax.f32 %v1161, 0.0
  %v1341 = vmax.f32 %v1164, 0.0
  %v1342 = vmax.f32 %v1169, 0.0
  %v1343 = vmax.f32 %v1172, 0.0
  %v1344 = vmax.f32 %v1177, 0.0
  %v1345 = vmax.f32 %v1180, 0.0
  %v1346 = vmax.f32 %v1185, 0.0
  %v1347 = vmax.f32 %v1188, 0.0
  %v1348 = vmax.f32 %v1193, 0.0
  %v1349 = vmax.f32 %v1196, 0.0
  %v1350 = vmax.f32 %v1201, 0.0
  %v1351 = vmax.f32 %v1204, 0.0
  %v1352 = vmax.f32 %v1209, 0.0
  %v1353 = vmax.f32 %v1212, 0.0
  %v1354 = vmax.f32 %v1217, 0.0
  %v1355 = vmax.f32 %v1220, 0.0
  %v1356 = vmax.f32 %v1225, 0.0
  %v1357 = vmax.f32 %v1228, 0.0
  %v1358 = vmax.f32 %v1233, 0.0
  %v1359 = vmax.f32 %v1236, 0.0
  %v1360 = vmax.f32 %v1241, 0.0
  %v1361 = vmax.f32 %v1244, 0.0
  %v1362 = vmax.f32 %v1249, 0.0
  %v1363 = vmax.f32 %v1252, 0.0
  %v1364 = vmax.f32 %v1257, 0.0
  %v1365 = vmax.f32 %v1260, 0.0
  %v1366 = vmax.f32 %v1265, 0.0
  %v1367 = vmax.f32 %v1268, 0.0
  %v1368 = vmax.f32 %v1273, 0.0
  %v1369 = vmax.f32 %v1276, 0.0
  %v1370 = vmax.f32 %v1281, 0.0
  %v1371 = vmax.f32 %v1284, 0.0
  %v1372 = vmax.f32 %v1289, 0.0
  %v1373 = vmax.f32 %v1292, 0.0
  %v1374 = vmax.f32 %v1297, 0.0
  %v1375 = vmax.f32 %v1300, 0.0
  %v1376 = vmax.f32 %v1305, 0.0
  %v1377 = vmax.f32 %v1308, 0.0
  %v1378 = vmax.f32 %v1313, 0.0
  %v1379 = vmax.f32 %v1316, 0.0
  %v1380 = vmax.f32 %v1321, 0.0
  %v1381 = vmax.f32 %v1324, 0.0
  %v1382 = vmax.f32 %v1329, 0.0
  %v1383 = vpack.c.bf16 %v1335, %v1334
  %v1384 = vpack.c.bf16 %v1337, %v1336
  %v1385 = vpack.c.bf16 %v1339, %v1338
  %v1386 = vpack.c.bf16 %v1341, %v1340
  %v1387 = vpack.c.bf16 %v1343, %v1342
  %v1388 = vpack.c.bf16 %v1345, %v1344
  %v1389 = vpack.c.bf16 %v1347, %v1346
  %v1390 = vpack.c.bf16 %v1349, %v1348
  %v1391 = vpack.c.bf16 %v1351, %v1350
  %v1392 = vpack.c.bf16 %v1353, %v1352
  %v1393 = vpack.c.bf16 %v1355, %v1354
  %v1394 = vpack.c.bf16 %v1357, %v1356
  %v1395 = vpack.c.bf16 %v1359, %v1358
  %v1396 = vpack.c.bf16 %v1361, %v1360
  %v1397 = vpack.c.bf16 %v1363, %v1362
  %v1398 = vpack.c.bf16 %v1365, %v1364
  %v1399 = vpack.c.bf16 %v1367, %v1366
  %v1400 = vpack.c.bf16 %v1369, %v1368
  %v1401 = vpack.c.bf16 %v1371, %v1370
  %v1402 = vpack.c.bf16 %v1373, %v1372
  %v1403 = vpack.c.bf16 %v1375, %v1374
  %v1404 = vpack.c.bf16 %v1377, %v1376
  %v1405 = vpack.c.bf16 %v1379, %v1378
  %v1406 = vpack.c.bf16 %v1381, %v1380
  %v1407 = vpack.c.bf16 %v1382, %v1382
  %v1433 = vunpack.c.l.b16 %v1383
  %v1434 = vunpack.c.h.b16 %v1383
  %v1435 = vunpack.c.l.b16 %v1384
  %v1436 = vunpack.c.h.b16 %v1384
  %v1437 = vunpack.c.l.b16 %v1385
  %v1438 = vunpack.c.h.b16 %v1385
  %v1439 = vunpack.c.l.b16 %v1386
  %v1440 = vunpack.c.h.b16 %v1386
  %v1441 = vunpack.c.l.b16 %v1387
  %v1442 = vunpack.c.h.b16 %v1387
  %v1443 = vunpack.c.l.b16 %v1388
  %v1444 = vunpack.c.h.b16 %v1388
  %v1445 = vunpack.c.l.b16 %v1389
  %v1446 = vunpack.c.h.b16 %v1389
  %v1447 = vunpack.c.l.b16 %v1390
  %v1448 = vunpack.c.h.b16 %v1390
  %v1449 = vunpack.c.l.b16 %v1391
  %v1450 = vunpack.c.h.b16 %v1391
  %v1451 = vunpack.c.l.b16 %v1392
  %v1452 = vunpack.c.h.b16 %v1392
  %v1453 = vunpack.c.l.b16 %v1393
  %v1454 = vunpack.c.h.b16 %v1393
  %v1455 = vunpack.c.l.b16 %v1394
  %v1456 = vunpack.c.h.b16 %v1394
  %v1457 = vunpack.c.l.b16 %v1395
  %v1458 = vunpack.c.h.b16 %v1395
  %v1459 = vunpack.c.l.b16 %v1396
  %v1460 = vunpack.c.h.b16 %v1396
  %v1461 = vunpack.c.l.b16 %v1397
  %v1462 = vunpack.c.h.b16 %v1397
  %v1463 = vunpack.c.l.b16 %v1398
  %v1464 = vunpack.c.h.b16 %v1398
  %v1465 = vunpack.c.l.b16 %v1399
  %v1466 = vunpack.c.h.b16 %v1399
  %v1467 = vunpack.c.l.b16 %v1400
  %v1468 = vunpack.c.h.b16 %v1400
  %v1469 = vunpack.c.l.b16 %v1401
  %v1470 = vunpack.c.h.b16 %v1401
  %v1471 = vunpack.c.l.b16 %v1402
  %v1472 = vunpack.c.h.b16 %v1402
  %v1473 = vunpack.c.l.b16 %v1403
  %v1474 = vunpack.c.h.b16 %v1403
  %v1475 = vunpack.c.l.b16 %v1404
  %v1476 = vunpack.c.h.b16 %v1404
  %v1477 = vunpack.c.l.b16 %v1405
  %v1478 = vunpack.c.h.b16 %v1405
  %v1479 = vunpack.c.l.b16 %v1406
  %v1480 = vunpack.c.h.b16 %v1406
  %v1481 = vunpack.c.l.b16 %v1407
  %v1482 = vpack.c.b16 %v1433, %v1433
  %v1483 = vpack.c.b16 %v1434, %v1434
  %v1484 = vpack.c.b16 %v1435, %v1435
  %v1485 = vpack.c.b16 %v1436, %v1436
  %v1486 = vpack.c.b16 %v1437, %v1437
  %v1487 = vpack.c.b16 %v1438, %v1438
  %v1488 = vpack.c.b16 %v1439, %v1439
  %v1489 = vpack.c.b16 %v1440, %v1440
  %v1490 = vpack.c.b16 %v1441, %v1441
  %v1491 = vpack.c.b16 %v1442, %v1442
  %v1492 = vpack.c.b16 %v1443, %v1443
  %v1493 = vpack.c.b16 %v1444, %v1444
  %v1494 = vpack.c.b16 %v1445, %v1445
  %v1495 = vpack.c.b16 %v1446, %v1446
  %v1496 = vpack.c.b16 %v1447, %v1447
  %v1497 = vpack.c.b16 %v1448, %v1448
  %v1498 = vpack.c.b16 %v1449, %v1449
  %v1499 = vpack.c.b16 %v1450, %v1450
  %v1500 = vpack.c.b16 %v1451, %v1451
  %v1501 = vpack.c.b16 %v1452, %v1452
  %v1502 = vpack.c.b16 %v1453, %v1453
  %v1503 = vpack.c.b16 %v1454, %v1454
  %v1504 = vpack.c.b16 %v1455, %v1455
  %v1505 = vpack.c.b16 %v1456, %v1456
  %v1506 = vpack.c.b16 %v1457, %v1457
  %v1507 = vpack.c.b16 %v1458, %v1458
  %v1508 = vpack.c.b16 %v1459, %v1459
  %v1509 = vpack.c.b16 %v1460, %v1460
  %v1510 = vpack.c.b16 %v1461, %v1461
  %v1511 = vpack.c.b16 %v1462, %v1462
  %v1512 = vpack.c.b16 %v1463, %v1463
  %v1513 = vpack.c.b16 %v1464, %v1464
  %v1514 = vpack.c.b16 %v1465, %v1465
  %v1515 = vpack.c.b16 %v1466, %v1466
  %v1516 = vpack.c.b16 %v1467, %v1467
  %v1517 = vpack.c.b16 %v1468, %v1468
  %v1518 = vpack.c.b16 %v1469, %v1469
  %v1519 = vpack.c.b16 %v1470, %v1470
  %v1520 = vpack.c.b16 %v1471, %v1471
  %v1521 = vpack.c.b16 %v1472, %v1472
  %v1522 = vpack.c.b16 %v1473, %v1473
  %v1523 = vpack.c.b16 %v1474, %v1474
  %v1524 = vpack.c.b16 %v1475, %v1475
  %v1525 = vpack.c.b16 %v1476, %v1476
  %v1526 = vpack.c.b16 %v1477, %v1477
  %v1527 = vpack.c.b16 %v1478, %v1478
  %v1528 = vpack.c.b16 %v1479, %v1479
  %v1529 = vpack.c.b16 %v1480, %v1480
  %v1530 = vpack.c.b16 %v1481, %v1481
  %vm1580 = vcmask 519168
  %1581 = vst.msk [vmem:[%s3] sm:$0xf] %vm1580, %v1482
  %1582 = vst.msk [vmem:[%s3 + $0x4] sm:$0xf] %vm1580, %v1483
  %1583 = vst.msk [vmem:[%s3 + $0x8] sm:$0xf] %vm1580, %v1484
  %1584 = vst.msk [vmem:[%s3 + $0xc] sm:$0xf] %vm1580, %v1485
  %1585 = vst.msk [vmem:[%s3 + $0x10] sm:$0xf] %vm1580, %v1486
  %1586 = vst.msk [vmem:[%s3 + $0x14] sm:$0xf] %vm1580, %v1487
  %1587 = vst.msk [vmem:[%s3 + $0x18] sm:$0xf] %vm1580, %v1488
  %1588 = vst.msk [vmem:[%s3 + $0x1c] sm:$0xf] %vm1580, %v1489
  %1589 = vst.msk [vmem:[%s3 + $0x20] sm:$0xf] %vm1580, %v1490
  %1590 = vst.msk [vmem:[%s3 + $0x24] sm:$0xf] %vm1580, %v1491
  %1591 = vst.msk [vmem:[%s3 + $0x28] sm:$0xf] %vm1580, %v1492
  %1592 = vst.msk [vmem:[%s3 + $0x2c] sm:$0xf] %vm1580, %v1493
  %1593 = vst.msk [vmem:[%s3 + $0x30] sm:$0xf] %vm1580, %v1494
  %1594 = vst.msk [vmem:[%s3 + $0x34] sm:$0xf] %vm1580, %v1495
  %1595 = vst.msk [vmem:[%s3 + $0x38] sm:$0xf] %vm1580, %v1496
  %1596 = vst.msk [vmem:[%s3 + $0x3c] sm:$0xf] %vm1580, %v1497
  %1597 = vst.msk [vmem:[%s3 + $0x40] sm:$0xf] %vm1580, %v1498
  %1598 = vst.msk [vmem:[%s3 + $0x44] sm:$0xf] %vm1580, %v1499
  %1599 = vst.msk [vmem:[%s3 + $0x48] sm:$0xf] %vm1580, %v1500
  %1600 = vst.msk [vmem:[%s3 + $0x4c] sm:$0xf] %vm1580, %v1501
  %1601 = vst.msk [vmem:[%s3 + $0x50] sm:$0xf] %vm1580, %v1502
  %1602 = vst.msk [vmem:[%s3 + $0x54] sm:$0xf] %vm1580, %v1503
  %1603 = vst.msk [vmem:[%s3 + $0x58] sm:$0xf] %vm1580, %v1504
  %1604 = vst.msk [vmem:[%s3 + $0x5c] sm:$0xf] %vm1580, %v1505
  %1605 = vst.msk [vmem:[%s3 + $0x60] sm:$0xf] %vm1580, %v1506
  %1606 = vst.msk [vmem:[%s3 + $0x64] sm:$0xf] %vm1580, %v1507
  %1607 = vst.msk [vmem:[%s3 + $0x68] sm:$0xf] %vm1580, %v1508
  %1608 = vst.msk [vmem:[%s3 + $0x6c] sm:$0xf] %vm1580, %v1509
  %1609 = vst.msk [vmem:[%s3 + $0x70] sm:$0xf] %vm1580, %v1510
  %1610 = vst.msk [vmem:[%s3 + $0x74] sm:$0xf] %vm1580, %v1511
  %1611 = vst.msk [vmem:[%s3 + $0x78] sm:$0xf] %vm1580, %v1512
  %1612 = vst.msk [vmem:[%s3 + $0x7c] sm:$0xf] %vm1580, %v1513
  %1613 = vst.msk [vmem:[%s3 + $0x80] sm:$0xf] %vm1580, %v1514
  %1614 = vst.msk [vmem:[%s3 + $0x84] sm:$0xf] %vm1580, %v1515
  %1615 = vst.msk [vmem:[%s3 + $0x88] sm:$0xf] %vm1580, %v1516
  %1616 = vst.msk [vmem:[%s3 + $0x8c] sm:$0xf] %vm1580, %v1517
  %1617 = vst.msk [vmem:[%s3 + $0x90] sm:$0xf] %vm1580, %v1518
  %1618 = vst.msk [vmem:[%s3 + $0x94] sm:$0xf] %vm1580, %v1519
  %1619 = vst.msk [vmem:[%s3 + $0x98] sm:$0xf] %vm1580, %v1520
  %1620 = vst.msk [vmem:[%s3 + $0x9c] sm:$0xf] %vm1580, %v1521
  %1621 = vst.msk [vmem:[%s3 + $0xa0] sm:$0xf] %vm1580, %v1522
  %1622 = vst.msk [vmem:[%s3 + $0xa4] sm:$0xf] %vm1580, %v1523
  %1623 = vst.msk [vmem:[%s3 + $0xa8] sm:$0xf] %vm1580, %v1524
  %1624 = vst.msk [vmem:[%s3 + $0xac] sm:$0xf] %vm1580, %v1525
  %1625 = vst.msk [vmem:[%s3 + $0xb0] sm:$0xf] %vm1580, %v1526
  %1626 = vst.msk [vmem:[%s3 + $0xb4] sm:$0xf] %vm1580, %v1527
  %1627 = vst.msk [vmem:[%s3 + $0xb8] sm:$0xf] %vm1580, %v1528
  %1628 = vst.msk [vmem:[%s3 + $0xbc] sm:$0xf] %vm1580, %v1529
  %1629 = vst.msk [vmem:[%s3 + $0xc0] sm:$0xf] %vm1580, %v1530
  // Predicated region
  $region14: #{encoder_forward.6} parent=0 // pred_check
    _
  $region15: #{encoder_forward.6} parent=0 // pred_check_branch
    %1631 = sbr.rel (0) target = $region17
  $region16: #{encoder_forward.6} parent=0 // pred_region
    _
  $region17: #{encoder_forward.6} parent=0 // pred_fallthru
    _
  // Predicated region
  $region18: #{encoder_forward.6} parent=0 // pred_check
    _
  $region19: #{encoder_forward.6} parent=0 // pred_check_branch
    %1633 = sbr.rel (0) target = $region21
  $region20: #{encoder_forward.6} parent=0 // pred_region
    _
  $region21: #{encoder_forward.6} parent=0 // pred_fallthru
    _

// kernel: encoder_forward.7
$region0: #{encoder_forward.7}
  #allocation0 [shape = 'u32[]', space=smem, size = 0x4, offset = 0x4, fixed_abs, tag = 'smem constant byte address 0x4 - core index']
  #allocation1 [shape = 'u32[144,128]{1,0:T(1,128)}', space=vmem, size = 0x12000, scoped, tag = 'internal scratch']
  %s0 = inlined_call_operand.vmem [shape: bf16[72,1024], index: 0, kind: input, shape index: {}]
  %s1 = inlined_call_operand.vmem [shape: bf16[1024,128], index: 1, kind: input, shape index: {}]
  %s2 = inlined_call_operand.vmem [shape: f32[1,128], index: 2, kind: input, shape index: {}]
  %s3 = inlined_call_operand.vmem [shape: bf16[72,128], index: 3, kind: output, shape index: {}]
  %s4 = sld [smem:[#allocation0]]
  $region22: #{encoder_forward.7} parent=0
    _
  %s6 = ssub.s32 1, %s4
  %s7 = scalar_select 0, %s6, %s4
  // Predicated region
  $region2: #{encoder_forward.7} parent=0 // pred_check
    _
  $region3: #{encoder_forward.7} parent=0 // pred_check_branch
    %9 = sbr.rel (0) target = $region5
  $region4: #{encoder_forward.7} parent=0 // pred_region
    _
  $region5: #{encoder_forward.7} parent=0 // pred_fallthru
    _
  // Predicated region
  $region6: #{encoder_forward.7} parent=0 // pred_check
    _
  $region7: #{encoder_forward.7} parent=0 // pred_check_branch
    %11 = sbr.rel (0) target = $region9
  $region8: #{encoder_forward.7} parent=0 // pred_region
    _
  $region9: #{encoder_forward.7} parent=0 // pred_fallthru
    _
  // Predicated region
  $region10: #{encoder_forward.7} parent=0 // pred_check
    _
  $region11: #{encoder_forward.7} parent=0 // pred_check_branch
    %13 = sbr.rel (0) target = $region13
  $region12: #{encoder_forward.7} parent=0 // pred_region
    _
  $region13: #{encoder_forward.7} parent=0 // pred_fallthru
    _
  %v15 = vld [vmem:[%s0] sm:$0xff]
  %v16 = vld [vmem:[%s0 + $0x8] sm:$0xff]
  %v17 = vld [vmem:[%s0 + $0x10] sm:$0xff]
  %v18 = vld [vmem:[%s0 + $0x18] sm:$0xff]
  %v19 = vld [vmem:[%s0 + $0x20] sm:$0xff]
  %v20 = vld [vmem:[%s0 + $0x28] sm:$0xff]
  %v21 = vld [vmem:[%s0 + $0x30] sm:$0xff]
  %v22 = vld [vmem:[%s0 + $0x38] sm:$0xff]
  %v23 = vld [vmem:[%s0 + $0x40] sm:$0xff]
  %v24 = vld [vmem:[%s0 + $0x48] sm:$0xff]
  %v25 = vld [vmem:[%s0 + $0x50] sm:$0xff]
  %v26 = vld [vmem:[%s0 + $0x58] sm:$0xff]
  %v27 = vld [vmem:[%s0 + $0x60] sm:$0xff]
  %v28 = vld [vmem:[%s0 + $0x68] sm:$0xff]
  %v29 = vld [vmem:[%s0 + $0x70] sm:$0xff]
  %v30 = vld [vmem:[%s0 + $0x78] sm:$0xff]
  %v31 = vld [vmem:[%s0 + $0x80] sm:$0xff]
  %v32 = vld [vmem:[%s0 + $0x88] sm:$0xff]
  %v33 = vld [vmem:[%s0 + $0x90] sm:$0xff]
  %v34 = vld [vmem:[%s0 + $0x98] sm:$0xff]
  %v35 = vld [vmem:[%s0 + $0xa0] sm:$0xff]
  %v36 = vld [vmem:[%s0 + $0xa8] sm:$0xff]
  %v37 = vld [vmem:[%s0 + $0xb0] sm:$0xff]
  %v38 = vld [vmem:[%s0 + $0xb8] sm:$0xff]
  %v39 = vld [vmem:[%s0 + $0xc0] sm:$0xff]
  %v40 = vld [vmem:[%s0 + $0xc8] sm:$0xff]
  %v41 = vld [vmem:[%s0 + $0xd0] sm:$0xff]
  %v42 = vld [vmem:[%s0 + $0xd8] sm:$0xff]
  %v43 = vld [vmem:[%s0 + $0xe0] sm:$0xff]
  %v44 = vld [vmem:[%s0 + $0xe8] sm:$0xff]
  %v45 = vld [vmem:[%s0 + $0xf0] sm:$0xff]
  %v46 = vld [vmem:[%s0 + $0xf8] sm:$0xff]
  %v47 = vld [vmem:[%s0 + $0x100] sm:$0xff]
  %v48 = vld [vmem:[%s0 + $0x108] sm:$0xff]
  %v49 = vld [vmem:[%s0 + $0x110] sm:$0xff]
  %v50 = vld [vmem:[%s0 + $0x118] sm:$0xff]
  %v51 = vld [vmem:[%s1] sm:$0xf]
  %v52 = vld [vmem:[%s1 + $0x4] sm:$0xf]
  %v53 = vld [vmem:[%s1 + $0x8] sm:$0xf]
  %v54 = vld [vmem:[%s1 + $0xc] sm:$0xf]
  %v55 = vld [vmem:[%s1 + $0x10] sm:$0xf]
  %v56 = vld [vmem:[%s1 + $0x14] sm:$0xf]
  %v57 = vld [vmem:[%s1 + $0x18] sm:$0xf]
  %v58 = vld [vmem:[%s1 + $0x1c] sm:$0xf]
  %v59 = vld [vmem:[%s1 + $0x20] sm:$0xf]
  %v60 = vld [vmem:[%s1 + $0x24] sm:$0xf]
  %v61 = vld [vmem:[%s1 + $0x28] sm:$0xf]
  %v62 = vld [vmem:[%s1 + $0x2c] sm:$0xf]
  %v63 = vld [vmem:[%s1 + $0x30] sm:$0xf]
  %v64 = vld [vmem:[%s1 + $0x34] sm:$0xf]
  %v65 = vld [vmem:[%s1 + $0x38] sm:$0xf]
  %v66 = vld [vmem:[%s1 + $0x3c] sm:$0xf]
  %v67 = vld [vmem:[%s1 + $0x40] sm:$0xf]
  %v68 = vld [vmem:[%s1 + $0x44] sm:$0xf]
  %v69 = vld [vmem:[%s1 + $0x48] sm:$0xf]
  %v70 = vld [vmem:[%s1 + $0x4c] sm:$0xf]
  %v71 = vld [vmem:[%s1 + $0x50] sm:$0xf]
  %v72 = vld [vmem:[%s1 + $0x54] sm:$0xf]
  %v73 = vld [vmem:[%s1 + $0x58] sm:$0xf]
  %v74 = vld [vmem:[%s1 + $0x5c] sm:$0xf]
  %v75 = vld [vmem:[%s1 + $0x60] sm:$0xf]
  %v76 = vld [vmem:[%s1 + $0x64] sm:$0xf]
  %v77 = vld [vmem:[%s1 + $0x68] sm:$0xf]
  %v78 = vld [vmem:[%s1 + $0x6c] sm:$0xf]
  %v79 = vld [vmem:[%s1 + $0x70] sm:$0xf]
  %v80 = vld [vmem:[%s1 + $0x74] sm:$0xf]
  %v81 = vld [vmem:[%s1 + $0x78] sm:$0xf]
  %v82 = vld [vmem:[%s1 + $0x7c] sm:$0xf]
  %v83 = vld [vmem:[%s1 + $0x80] sm:$0xf]
  %v84 = vld [vmem:[%s1 + $0x84] sm:$0xf]
  %v85 = vld [vmem:[%s1 + $0x88] sm:$0xf]
  %v86 = vld [vmem:[%s1 + $0x8c] sm:$0xf]
  %v87 = vld [vmem:[%s1 + $0x90] sm:$0xf]
  %v88 = vld [vmem:[%s1 + $0x94] sm:$0xf]
  %v89 = vld [vmem:[%s1 + $0x98] sm:$0xf]
  %v90 = vld [vmem:[%s1 + $0x9c] sm:$0xf]
  %v91 = vld [vmem:[%s1 + $0xa0] sm:$0xf]
  %v92 = vld [vmem:[%s1 + $0xa4] sm:$0xf]
  %v93 = vld [vmem:[%s1 + $0xa8] sm:$0xf]
  %v94 = vld [vmem:[%s1 + $0xac] sm:$0xf]
  %v95 = vld [vmem:[%s1 + $0xb0] sm:$0xf]
  %v96 = vld [vmem:[%s1 + $0xb4] sm:$0xf]
  %v97 = vld [vmem:[%s1 + $0xb8] sm:$0xf]
  %v98 = vld [vmem:[%s1 + $0xbc] sm:$0xf]
  %v99 = vld [vmem:[%s1 + $0xc0] sm:$0xf]
  %v100 = vld [vmem:[%s1 + $0xc4] sm:$0xf]
  %v101 = vld [vmem:[%s1 + $0xc8] sm:$0xf]
  %v102 = vld [vmem:[%s1 + $0xcc] sm:$0xf]
  %v103 = vld [vmem:[%s1 + $0xd0] sm:$0xf]
  %v104 = vld [vmem:[%s1 + $0xd4] sm:$0xf]
  %v105 = vld [vmem:[%s1 + $0xd8] sm:$0xf]
  %v106 = vld [vmem:[%s1 + $0xdc] sm:$0xf]
  %v107 = vld [vmem:[%s1 + $0xe0] sm:$0xf]
  %v108 = vld [vmem:[%s1 + $0xe4] sm:$0xf]
  %v109 = vld [vmem:[%s1 + $0xe8] sm:$0xf]
  %v110 = vld [vmem:[%s1 + $0xec] sm:$0xf]
  %v111 = vld [vmem:[%s1 + $0xf0] sm:$0xf]
  %v112 = vld [vmem:[%s1 + $0xf4] sm:$0xf]
  %v113 = vld [vmem:[%s1 + $0xf8] sm:$0xf]
  %v114 = vld [vmem:[%s1 + $0xfc] sm:$0xf]
  %v115 = vld [vmem:[%s1 + $0x100] sm:$0xf]
  %v116 = vld [vmem:[%s1 + $0x104] sm:$0xf]
  %v117 = vld [vmem:[%s1 + $0x108] sm:$0xf]
  %v118 = vld [vmem:[%s1 + $0x10c] sm:$0xf]
  %v119 = vld [vmem:[%s1 + $0x110] sm:$0xf]
  %v120 = vld [vmem:[%s1 + $0x114] sm:$0xf]
  %v121 = vld [vmem:[%s1 + $0x118] sm:$0xf]
  %v122 = vld [vmem:[%s1 + $0x11c] sm:$0xf]
  %v123 = vld [vmem:[%s1 + $0x120] sm:$0xf]
  %v124 = vld [vmem:[%s1 + $0x124] sm:$0xf]
  %v125 = vld [vmem:[%s1 + $0x128] sm:$0xf]
  %v126 = vld [vmem:[%s1 + $0x12c] sm:$0xf]
  %v127 = vld [vmem:[%s1 + $0x130] sm:$0xf]
  %v128 = vld [vmem:[%s1 + $0x134] sm:$0xf]
  %v129 = vld [vmem:[%s1 + $0x138] sm:$0xf]
  %v130 = vld [vmem:[%s1 + $0x13c] sm:$0xf]
  %v131 = vld [vmem:[%s1 + $0x140] sm:$0xf]
  %v132 = vld [vmem:[%s1 + $0x144] sm:$0xf]
  %v133 = vld [vmem:[%s1 + $0x148] sm:$0xf]
  %v134 = vld [vmem:[%s1 + $0x14c] sm:$0xf]
  %v135 = vld [vmem:[%s1 + $0x150] sm:$0xf]
  %v136 = vld [vmem:[%s1 + $0x154] sm:$0xf]
  %v137 = vld [vmem:[%s1 + $0x158] sm:$0xf]
  %v138 = vld [vmem:[%s1 + $0x15c] sm:$0xf]
  %v139 = vld [vmem:[%s1 + $0x160] sm:$0xf]
  %v140 = vld [vmem:[%s1 + $0x164] sm:$0xf]
  %v141 = vld [vmem:[%s1 + $0x168] sm:$0xf]
  %v142 = vld [vmem:[%s1 + $0x16c] sm:$0xf]
  %v143 = vld [vmem:[%s1 + $0x170] sm:$0xf]
  %v144 = vld [vmem:[%s1 + $0x174] sm:$0xf]
  %v145 = vld [vmem:[%s1 + $0x178] sm:$0xf]
  %v146 = vld [vmem:[%s1 + $0x17c] sm:$0xf]
  %v147 = vld [vmem:[%s1 + $0x180] sm:$0xf]
  %v148 = vld [vmem:[%s1 + $0x184] sm:$0xf]
  %v149 = vld [vmem:[%s1 + $0x188] sm:$0xf]
  %v150 = vld [vmem:[%s1 + $0x18c] sm:$0xf]
  %v151 = vld [vmem:[%s1 + $0x190] sm:$0xf]
  %v152 = vld [vmem:[%s1 + $0x194] sm:$0xf]
  %v153 = vld [vmem:[%s1 + $0x198] sm:$0xf]
  %v154 = vld [vmem:[%s1 + $0x19c] sm:$0xf]
  %v155 = vld [vmem:[%s1 + $0x1a0] sm:$0xf]
  %v156 = vld [vmem:[%s1 + $0x1a4] sm:$0xf]
  %v157 = vld [vmem:[%s1 + $0x1a8] sm:$0xf]
  %v158 = vld [vmem:[%s1 + $0x1ac] sm:$0xf]
  %v159 = vld [vmem:[%s1 + $0x1b0] sm:$0xf]
  %v160 = vld [vmem:[%s1 + $0x1b4] sm:$0xf]
  %v161 = vld [vmem:[%s1 + $0x1b8] sm:$0xf]
  %v162 = vld [vmem:[%s1 + $0x1bc] sm:$0xf]
  %v163 = vld [vmem:[%s1 + $0x1c0] sm:$0xf]
  %v164 = vld [vmem:[%s1 + $0x1c4] sm:$0xf]
  %v165 = vld [vmem:[%s1 + $0x1c8] sm:$0xf]
  %v166 = vld [vmem:[%s1 + $0x1cc] sm:$0xf]
  %v167 = vld [vmem:[%s1 + $0x1d0] sm:$0xf]
  %v168 = vld [vmem:[%s1 + $0x1d4] sm:$0xf]
  %v169 = vld [vmem:[%s1 + $0x1d8] sm:$0xf]
  %v170 = vld [vmem:[%s1 + $0x1dc] sm:$0xf]
  %v171 = vld [vmem:[%s1 + $0x1e0] sm:$0xf]
  %v172 = vld [vmem:[%s1 + $0x1e4] sm:$0xf]
  %v173 = vld [vmem:[%s1 + $0x1e8] sm:$0xf]
  %v174 = vld [vmem:[%s1 + $0x1ec] sm:$0xf]
  %v175 = vld [vmem:[%s1 + $0x1f0] sm:$0xf]
  %v176 = vld [vmem:[%s1 + $0x1f4] sm:$0xf]
  %v177 = vld [vmem:[%s1 + $0x1f8] sm:$0xf]
  %v178 = vld [vmem:[%s1 + $0x1fc] sm:$0xf]
  %v179 = vld [vmem:[%s2] sm:$0x1]
  %v181 = vlaneseq
  %v182 = vshrl.u32 %v181, 7
  %v183 = vsub.s32 0, %v182
  %v184 = vrot.slane %v179, %v183
  %v222 = vunpack.c.l.b16 %v15
  %v223 = vunpack.c.h.b16 %v15
  %v224 = vunpack.c.l.b16 %v16
  %v225 = vunpack.c.h.b16 %v16
  %v226 = vunpack.c.l.b16 %v17
  %v227 = vunpack.c.h.b16 %v17
  %v228 = vunpack.c.l.b16 %v18
  %v229 = vunpack.c.h.b16 %v18
  %v230 = vunpack.c.l.b16 %v19
  %v231 = vunpack.c.h.b16 %v19
  %v232 = vunpack.c.l.b16 %v20
  %v233 = vunpack.c.h.b16 %v20
  %v234 = vunpack.c.l.b16 %v21
  %v235 = vunpack.c.h.b16 %v21
  %v236 = vunpack.c.l.b16 %v22
  %v237 = vunpack.c.h.b16 %v22
  %v238 = vunpack.c.l.b16 %v23
  %v239 = vunpack.c.h.b16 %v23
  %v240 = vunpack.c.l.b16 %v24
  %v241 = vunpack.c.h.b16 %v24
  %v242 = vunpack.c.l.b16 %v25
  %v243 = vunpack.c.h.b16 %v25
  %v244 = vunpack.c.l.b16 %v26
  %v245 = vunpack.c.h.b16 %v26
  %v246 = vunpack.c.l.b16 %v27
  %v247 = vunpack.c.h.b16 %v27
  %v248 = vunpack.c.l.b16 %v28
  %v249 = vunpack.c.h.b16 %v28
  %v250 = vunpack.c.l.b16 %v29
  %v251 = vunpack.c.h.b16 %v29
  %v252 = vunpack.c.l.b16 %v30
  %v253 = vunpack.c.h.b16 %v30
  %v254 = vunpack.c.l.b16 %v31
  %v255 = vunpack.c.h.b16 %v31
  %v256 = vunpack.c.l.b16 %v32
  %v257 = vunpack.c.h.b16 %v32
  %v258 = vunpack.c.l.b16 %v33
  %v259 = vunpack.c.h.b16 %v33
  %v260 = vunpack.c.l.b16 %v34
  %v261 = vunpack.c.h.b16 %v34
  %v262 = vunpack.c.l.b16 %v35
  %v263 = vunpack.c.h.b16 %v35
  %v264 = vunpack.c.l.b16 %v36
  %v265 = vunpack.c.h.b16 %v36
  %v266 = vunpack.c.l.b16 %v37
  %v267 = vunpack.c.h.b16 %v37
  %v268 = vunpack.c.l.b16 %v38
  %v269 = vunpack.c.h.b16 %v38
  %v270 = vunpack.c.l.b16 %v39
  %v271 = vunpack.c.h.b16 %v39
  %v272 = vunpack.c.l.b16 %v40
  %v273 = vunpack.c.h.b16 %v40
  %v274 = vunpack.c.l.b16 %v41
  %v275 = vunpack.c.h.b16 %v41
  %v276 = vunpack.c.l.b16 %v42
  %v277 = vunpack.c.h.b16 %v42
  %v278 = vunpack.c.l.b16 %v43
  %v279 = vunpack.c.h.b16 %v43
  %v280 = vunpack.c.l.b16 %v44
  %v281 = vunpack.c.h.b16 %v44
  %v282 = vunpack.c.l.b16 %v45
  %v283 = vunpack.c.h.b16 %v45
  %v284 = vunpack.c.l.b16 %v46
  %v285 = vunpack.c.h.b16 %v46
  %v286 = vunpack.c.l.b16 %v47
  %v287 = vunpack.c.h.b16 %v47
  %v288 = vunpack.c.l.b16 %v48
  %v289 = vunpack.c.h.b16 %v48
  %v290 = vunpack.c.l.b16 %v49
  %v291 = vunpack.c.h.b16 %v49
  %v292 = vunpack.c.l.b16 %v50
  %v293 = vunpack.c.h.b16 %v50
  %v294 = vpack.c.b16 %v230, %v222
  %v295 = vpack.c.b16 %v231, %v223
  %v296 = vpack.c.b16 %v232, %v224
  %v297 = vpack.c.b16 %v233, %v225
  %v298 = vpack.c.b16 %v234, %v226
  %v299 = vpack.c.b16 %v235, %v227
  %v300 = vpack.c.b16 %v236, %v228
  %v301 = vpack.c.b16 %v237, %v229
  %v302 = vpack.c.b16 %v246, %v238
  %v303 = vpack.c.b16 %v247, %v239
  %v304 = vpack.c.b16 %v248, %v240
  %v305 = vpack.c.b16 %v249, %v241
  %v306 = vpack.c.b16 %v250, %v242
  %v307 = vpack.c.b16 %v251, %v243
  %v308 = vpack.c.b16 %v252, %v244
  %v309 = vpack.c.b16 %v253, %v245
  %v310 = vpack.c.b16 %v262, %v254
  %v311 = vpack.c.b16 %v263, %v255
  %v312 = vpack.c.b16 %v264, %v256
  %v313 = vpack.c.b16 %v265, %v257
  %v314 = vpack.c.b16 %v266, %v258
  %v315 = vpack.c.b16 %v267, %v259
  %v316 = vpack.c.b16 %v268, %v260
  %v317 = vpack.c.b16 %v269, %v261
  %v318 = vpack.c.b16 %v278, %v270
  %v319 = vpack.c.b16 %v279, %v271
  %v320 = vpack.c.b16 %v280, %v272
  %v321 = vpack.c.b16 %v281, %v273
  %v322 = vpack.c.b16 %v282, %v274
  %v323 = vpack.c.b16 %v283, %v275
  %v324 = vpack.c.b16 %v284, %v276
  %v325 = vpack.c.b16 %v285, %v277
  %v326 = vpack.c.b16 %v286, %v286
  %v327 = vpack.c.b16 %v287, %v287
  %v328 = vpack.c.b16 %v288, %v288
  %v329 = vpack.c.b16 %v289, %v289
  %v330 = vpack.c.b16 %v290, %v290
  %v331 = vpack.c.b16 %v291, %v291
  %v332 = vpack.c.b16 %v292, %v292
  %v333 = vpack.c.b16 %v293, %v293
  %v502 = vunpack.c.l.b16 %v51
  %v503 = vunpack.c.l.b16 %v52
  %v504 = vunpack.c.l.b16 %v53
  %v505 = vunpack.c.l.b16 %v54
  %v506 = vunpack.c.l.b16 %v55
  %v507 = vunpack.c.l.b16 %v56
  %v508 = vunpack.c.l.b16 %v57
  %v509 = vunpack.c.l.b16 %v58
  %v510 = vunpack.c.l.b16 %v59
  %v511 = vunpack.c.l.b16 %v60
  %v512 = vunpack.c.l.b16 %v61
  %v513 = vunpack.c.l.b16 %v62
  %v514 = vunpack.c.l.b16 %v63
  %v515 = vunpack.c.l.b16 %v64
  %v516 = vunpack.c.l.b16 %v65
  %v517 = vunpack.c.l.b16 %v66
  %v518 = vunpack.c.l.b16 %v67
  %v519 = vunpack.c.l.b16 %v68
  %v520 = vunpack.c.l.b16 %v69
  %v521 = vunpack.c.l.b16 %v70
  %v522 = vunpack.c.l.b16 %v71
  %v523 = vunpack.c.l.b16 %v72
  %v524 = vunpack.c.l.b16 %v73
  %v525 = vunpack.c.l.b16 %v74
  %v526 = vunpack.c.l.b16 %v75
  %v527 = vunpack.c.l.b16 %v76
  %v528 = vunpack.c.l.b16 %v77
  %v529 = vunpack.c.l.b16 %v78
  %v530 = vunpack.c.l.b16 %v79
  %v531 = vunpack.c.l.b16 %v80
  %v532 = vunpack.c.l.b16 %v81
  %v533 = vunpack.c.l.b16 %v82
  %v534 = vunpack.c.l.b16 %v83
  %v535 = vunpack.c.l.b16 %v84
  %v536 = vunpack.c.l.b16 %v85
  %v537 = vunpack.c.l.b16 %v86
  %v538 = vunpack.c.l.b16 %v87
  %v539 = vunpack.c.l.b16 %v88
  %v540 = vunpack.c.l.b16 %v89
  %v541 = vunpack.c.l.b16 %v90
  %v542 = vunpack.c.l.b16 %v91
  %v543 = vunpack.c.l.b16 %v92
  %v544 = vunpack.c.l.b16 %v93
  %v545 = vunpack.c.l.b16 %v94
  %v546 = vunpack.c.l.b16 %v95
  %v547 = vunpack.c.l.b16 %v96
  %v548 = vunpack.c.l.b16 %v97
  %v549 = vunpack.c.l.b16 %v98
  %v550 = vunpack.c.l.b16 %v99
  %v551 = vunpack.c.l.b16 %v100
  %v552 = vunpack.c.l.b16 %v101
  %v553 = vunpack.c.l.b16 %v102
  %v554 = vunpack.c.l.b16 %v103
  %v555 = vunpack.c.l.b16 %v104
  %v556 = vunpack.c.l.b16 %v105
  %v557 = vunpack.c.l.b16 %v106
  %v558 = vunpack.c.l.b16 %v107
  %v559 = vunpack.c.l.b16 %v108
  %v560 = vunpack.c.l.b16 %v109
  %v561 = vunpack.c.l.b16 %v110
  %v562 = vunpack.c.l.b16 %v111
  %v563 = vunpack.c.l.b16 %v112
  %v564 = vunpack.c.l.b16 %v113
  %v565 = vunpack.c.l.b16 %v114
  %v566 = vunpack.c.l.b16 %v115
  %v567 = vunpack.c.l.b16 %v116
  %v568 = vunpack.c.l.b16 %v117
  %v569 = vunpack.c.l.b16 %v118
  %v570 = vunpack.c.l.b16 %v119
  %v571 = vunpack.c.l.b16 %v120
  %v572 = vunpack.c.l.b16 %v121
  %v573 = vunpack.c.l.b16 %v122
  %v574 = vunpack.c.l.b16 %v123
  %v575 = vunpack.c.l.b16 %v124
  %v576 = vunpack.c.l.b16 %v125
  %v577 = vunpack.c.l.b16 %v126
  %v578 = vunpack.c.l.b16 %v127
  %v579 = vunpack.c.l.b16 %v128
  %v580 = vunpack.c.l.b16 %v129
  %v581 = vunpack.c.l.b16 %v130
  %v582 = vunpack.c.l.b16 %v131
  %v583 = vunpack.c.l.b16 %v132
  %v584 = vunpack.c.l.b16 %v133
  %v585 = vunpack.c.l.b16 %v134
  %v586 = vunpack.c.l.b16 %v135
  %v587 = vunpack.c.l.b16 %v136
  %v588 = vunpack.c.l.b16 %v137
  %v589 = vunpack.c.l.b16 %v138
  %v590 = vunpack.c.l.b16 %v139
  %v591 = vunpack.c.l.b16 %v140
  %v592 = vunpack.c.l.b16 %v141
  %v593 = vunpack.c.l.b16 %v142
  %v594 = vunpack.c.l.b16 %v143
  %v595 = vunpack.c.l.b16 %v144
  %v596 = vunpack.c.l.b16 %v145
  %v597 = vunpack.c.l.b16 %v146
  %v598 = vunpack.c.l.b16 %v147
  %v599 = vunpack.c.l.b16 %v148
  %v600 = vunpack.c.l.b16 %v149
  %v601 = vunpack.c.l.b16 %v150
  %v602 = vunpack.c.l.b16 %v151
  %v603 = vunpack.c.l.b16 %v152
  %v604 = vunpack.c.l.b16 %v153
  %v605 = vunpack.c.l.b16 %v154
  %v606 = vunpack.c.l.b16 %v155
  %v607 = vunpack.c.l.b16 %v156
  %v608 = vunpack.c.l.b16 %v157
  %v609 = vunpack.c.l.b16 %v158
  %v610 = vunpack.c.l.b16 %v159
  %v611 = vunpack.c.l.b16 %v160
  %v612 = vunpack.c.l.b16 %v161
  %v613 = vunpack.c.l.b16 %v162
  %v614 = vunpack.c.l.b16 %v163
  %v615 = vunpack.c.l.b16 %v164
  %v616 = vunpack.c.l.b16 %v165
  %v617 = vunpack.c.l.b16 %v166
  %v618 = vunpack.c.l.b16 %v167
  %v619 = vunpack.c.l.b16 %v168
  %v620 = vunpack.c.l.b16 %v169
  %v621 = vunpack.c.l.b16 %v170
  %v622 = vunpack.c.l.b16 %v171
  %v623 = vunpack.c.l.b16 %v172
  %v624 = vunpack.c.l.b16 %v173
  %v625 = vunpack.c.l.b16 %v174
  %v626 = vunpack.c.l.b16 %v175
  %v627 = vunpack.c.l.b16 %v176
  %v628 = vunpack.c.l.b16 %v177
  %v629 = vunpack.c.l.b16 %v178
  %v630 = vpack.c.b16 %v503, %v502
  %v631 = vpack.c.b16 %v505, %v504
  %v632 = vpack.c.b16 %v507, %v506
  %v633 = vpack.c.b16 %v509, %v508
  %v634 = vpack.c.b16 %v511, %v510
  %v635 = vpack.c.b16 %v513, %v512
  %v636 = vpack.c.b16 %v515, %v514
  %v637 = vpack.c.b16 %v517, %v516
  %v638 = vpack.c.b16 %v519, %v518
  %v639 = vpack.c.b16 %v521, %v520
  %v640 = vpack.c.b16 %v523, %v522
  %v641 = vpack.c.b16 %v525, %v524
  %v642 = vpack.c.b16 %v527, %v526
  %v643 = vpack.c.b16 %v529, %v528
  %v644 = vpack.c.b16 %v531, %v530
  %v645 = vpack.c.b16 %v533, %v532
  %v646 = vpack.c.b16 %v535, %v534
  %v647 = vpack.c.b16 %v537, %v536
  %v648 = vpack.c.b16 %v539, %v538
  %v649 = vpack.c.b16 %v541, %v540
  %v650 = vpack.c.b16 %v543, %v542
  %v651 = vpack.c.b16 %v545, %v544
  %v652 = vpack.c.b16 %v547, %v546
  %v653 = vpack.c.b16 %v549, %v548
  %v654 = vpack.c.b16 %v551, %v550
  %v655 = vpack.c.b16 %v553, %v552
  %v656 = vpack.c.b16 %v555, %v554
  %v657 = vpack.c.b16 %v557, %v556
  %v658 = vpack.c.b16 %v559, %v558
  %v659 = vpack.c.b16 %v561, %v560
  %v660 = vpack.c.b16 %v563, %v562
  %v661 = vpack.c.b16 %v565, %v564
  %v662 = vpack.c.b16 %v567, %v566
  %v663 = vpack.c.b16 %v569, %v568
  %v664 = vpack.c.b16 %v571, %v570
  %v665 = vpack.c.b16 %v573, %v572
  %v666 = vpack.c.b16 %v575, %v574
  %v667 = vpack.c.b16 %v577, %v576
  %v668 = vpack.c.b16 %v579, %v578
  %v669 = vpack.c.b16 %v581, %v580
  %v670 = vpack.c.b16 %v583, %v582
  %v671 = vpack.c.b16 %v585, %v584
  %v672 = vpack.c.b16 %v587, %v586
  %v673 = vpack.c.b16 %v589, %v588
  %v674 = vpack.c.b16 %v591, %v590
  %v675 = vpack.c.b16 %v593, %v592
  %v676 = vpack.c.b16 %v595, %v594
  %v677 = vpack.c.b16 %v597, %v596
  %v678 = vpack.c.b16 %v599, %v598
  %v679 = vpack.c.b16 %v601, %v600
  %v680 = vpack.c.b16 %v603, %v602
  %v681 = vpack.c.b16 %v605, %v604
  %v682 = vpack.c.b16 %v607, %v606
  %v683 = vpack.c.b16 %v609, %v608
  %v684 = vpack.c.b16 %v611, %v610
  %v685 = vpack.c.b16 %v613, %v612
  %v686 = vpack.c.b16 %v615, %v614
  %v687 = vpack.c.b16 %v617, %v616
  %v688 = vpack.c.b16 %v619, %v618
  %v689 = vpack.c.b16 %v621, %v620
  %v690 = vpack.c.b16 %v623, %v622
  %v691 = vpack.c.b16 %v625, %v624
  %v692 = vpack.c.b16 %v627, %v626
  %v693 = vpack.c.b16 %v629, %v628
  %758 = vmatprep.subr.bf16.mxu0 0
  %759 = vmatpush1.bf16.msra.mxu0 %v630
  %760 = vmatprep.subr.bf16.mxu0 0
  %761 = vmatpush1.bf16.msra.mxu0 %v631
  %762 = vmatprep.subr.bf16.mxu0 0
  %763 = vmatpush1.bf16.msra.mxu0 %v632
  %764 = vmatprep.subr.bf16.mxu0 0
  %765 = vmatpush1.bf16.msra.mxu0 %v633
  %766 = vmatprep.subr.bf16.mxu0 0
  %767 = vmatpush1.bf16.msra.mxu0 %v634
  %768 = vmatprep.subr.bf16.mxu0 0
  %769 = vmatpush1.bf16.msra.mxu0 %v635
  %770 = vmatprep.subr.bf16.mxu0 0
  %771 = vmatpush1.bf16.msra.mxu0 %v636
  %772 = vmatprep.subr.bf16.mxu0 0
  %773 = vmatpush1.bf16.msra.mxu0 %v637
  %774 = vmatprep.subr.bf16.mxu0 0
  %775 = vmatpush1.bf16.msra.mxu0 %v638
  %776 = vmatprep.subr.bf16.mxu0 0
  %777 = vmatpush1.bf16.msra.mxu0 %v639
  %778 = vmatprep.subr.bf16.mxu0 0
  %779 = vmatpush1.bf16.msra.mxu0 %v640
  %780 = vmatprep.subr.bf16.mxu0 0
  %781 = vmatpush1.bf16.msra.mxu0 %v641
  %782 = vmatprep.subr.bf16.mxu0 0
  %783 = vmatpush1.bf16.msra.mxu0 %v642
  %784 = vmatprep.subr.bf16.mxu0 0
  %785 = vmatpush1.bf16.msra.mxu0 %v643
  %786 = vmatprep.subr.bf16.mxu0 0
  %787 = vmatpush1.bf16.msra.mxu0 %v644
  %788 = vmatprep.subr.bf16.mxu0 0
  %789 = vmatpush1.bf16.msra.mxu0 %v645
  %790 = vmatprep.mubr.bf16.mxu0 %v295
  %791 = vmatmul.mubr.bf16.gmra.mrb[0].mxu0 %v294
  %v792 = vpop.f32.mrb[0].mxu0
  %v793 = vadd.f32 %v184, %v792
  %v794 = vpop.f32.mrb[0].mxu0
  %v795 = vpop.f32.mrb[0].mxu0
  %v796 = vadd.f32 %v184, %v795
  %v797 = vpop.f32.mrb[0].mxu0
  %798 = vmatprep.mubr.bf16.mxu0 %v303
  %799 = vmatmul.mubr.bf16.gmra.mrb[0].mxu0 %v302
  %v800 = vpop.f32.mrb[0].mxu0
  %v801 = vadd.f32 %v184, %v800
  %v802 = vpop.f32.mrb[0].mxu0
  %v803 = vpop.f32.mrb[0].mxu0
  %v804 = vadd.f32 %v184, %v803
  %v805 = vpop.f32.mrb[0].mxu0
  %806 = vmatprep.mubr.bf16.mxu0 %v311
  %807 = vmatmul.mubr.bf16.gmra.mrb[0].mxu0 %v310
  %v808 = vpop.f32.mrb[0].mxu0
  %v809 = vadd.f32 %v184, %v808
  %v810 = vpop.f32.mrb[0].mxu0
  %v811 = vpop.f32.mrb[0].mxu0
  %v812 = vadd.f32 %v184, %v811
  %v813 = vpop.f32.mrb[0].mxu0
  %814 = vmatprep.mubr.bf16.mxu0 %v319
  %815 = vmatmul.mubr.bf16.gmra.mrb[0].mxu0 %v318
  %v816 = vpop.f32.mrb[0].mxu0
  %v817 = vadd.f32 %v184, %v816
  %v818 = vpop.f32.mrb[0].mxu0
  %v819 = vpop.f32.mrb[0].mxu0
  %v820 = vadd.f32 %v184, %v819
  %v821 = vpop.f32.mrb[0].mxu0
  %822 = vmatprep.mubr.bf16.mxu0 %v327
  %823 = vmatmul.mubr.bf16.gmra.mrb[0].mxu0 %v326
  %v824 = vpop.f32.mrb[0].mxu0
  %v825 = vadd.f32 %v184, %v824
  %v826 = vpop.f32.mrb[0].mxu0
  %v827 = vpop.f32.mrb[0].mxu0
  %v828 = vpop.f32.mrb[0].mxu0
  %829 = vdwg.mxu0
  %830 = vmatprep.subr.bf16.mxu0 0
  %831 = vmatpush1.bf16.msra.mxu0 %v646
  %832 = vmatprep.subr.bf16.mxu0 0
  %833 = vmatpush1.bf16.msra.mxu0 %v647
  %834 = vmatprep.subr.bf16.mxu0 0
  %835 = vmatpush1.bf16.msra.mxu0 %v648
  %836 = vmatprep.subr.bf16.mxu0 0
  %837 = vmatpush1.bf16.msra.mxu0 %v649
  %838 = vmatprep.subr.bf16.mxu0 0
  %839 = vmatpush1.bf16.msra.mxu0 %v650
  %840 = vmatprep.subr.bf16.mxu0 0
  %841 = vmatpush1.bf16.msra.mxu0 %v651
  %842 = vmatprep.subr.bf16.mxu0 0
  %843 = vmatpush1.bf16.msra.mxu0 %v652
  %844 = vmatprep.subr.bf16.mxu0 0
  %845 = vmatpush1.bf16.msra.mxu0 %v653
  %846 = vmatprep.subr.bf16.mxu0 0
  %847 = vmatpush1.bf16.msra.mxu0 %v654
  %848 = vmatprep.subr.bf16.mxu0 0
  %849 = vmatpush1.bf16.msra.mxu0 %v655
  %850 = vmatprep.subr.bf16.mxu0 0
  %851 = vmatpush1.bf16.msra.mxu0 %v656
  %852 = vmatprep.subr.bf16.mxu0 0
  %853 = vmatpush1.bf16.msra.mxu0 %v657
  %854 = vmatprep.subr.bf16.mxu0 0
  %855 = vmatpush1.bf16.msra.mxu0 %v658
  %856 = vmatprep.subr.bf16.mxu0 0
  %857 = vmatpush1.bf16.msra.mxu0 %v659
  %858 = vmatprep.subr.bf16.mxu0 0
  %859 = vmatpush1.bf16.msra.mxu0 %v660
  %860 = vmatprep.subr.bf16.mxu0 0
  %861 = vmatpush1.bf16.msra.mxu0 %v661
  %862 = vmatprep.mubr.bf16.mxu0 %v297
  %863 = vmatmul.mubr.bf16.gmra.mrb[0].mxu0 %v296
  %v864 = vpop.f32.mrb[0].mxu0
  %v865 = vadd.f32 %v793, %v864
  %v866 = vpop.f32.mrb[0].mxu0
  %v867 = vpop.f32.mrb[0].mxu0
  %v868 = vadd.f32 %v796, %v867
  %v869 = vpop.f32.mrb[0].mxu0
  %870 = vmatprep.mubr.bf16.mxu0 %v305
  %871 = vmatmul.mubr.bf16.gmra.mrb[0].mxu0 %v304
  %v872 = vpop.f32.mrb[0].mxu0
  %v873 = vadd.f32 %v801, %v872
  %v874 = vpop.f32.mrb[0].mxu0
  %v875 = vpop.f32.mrb[0].mxu0
  %v876 = vadd.f32 %v804, %v875
  %v877 = vpop.f32.mrb[0].mxu0
  %878 = vmatprep.mubr.bf16.mxu0 %v313
  %879 = vmatmul.mubr.bf16.gmra.mrb[0].mxu0 %v312
  %v880 = vpop.f32.mrb[0].mxu0
  %v881 = vadd.f32 %v809, %v880
  %v882 = vpop.f32.mrb[0].mxu0
  %v883 = vpop.f32.mrb[0].mxu0
  %v884 = vadd.f32 %v812, %v883
  %v885 = vpop.f32.mrb[0].mxu0
  %886 = vmatprep.mubr.bf16.mxu0 %v321
  %887 = vmatmul.mubr.bf16.gmra.mrb[0].mxu0 %v320
  %v888 = vpop.f32.mrb[0].mxu0
  %v889 = vadd.f32 %v817, %v888
  %v890 = vpop.f32.mrb[0].mxu0
  %v891 = vpop.f32.mrb[0].mxu0
  %v892 = vadd.f32 %v820, %v891
  %v893 = vpop.f32.mrb[0].mxu0
  %894 = vmatprep.mubr.bf16.mxu0 %v329
  %895 = vmatmul.mubr.bf16.gmra.mrb[0].mxu0 %v328
  %v896 = vpop.f32.mrb[0].mxu0
  %v897 = vadd.f32 %v825, %v896
  %v898 = vpop.f32.mrb[0].mxu0
  %v899 = vpop.f32.mrb[0].mxu0
  %v900 = vpop.f32.mrb[0].mxu0
  %901 = vdwg.mxu0
  %902 = vmatprep.subr.bf16.mxu0 0
  %903 = vmatpush1.bf16.msra.mxu0 %v662
  %904 = vmatprep.subr.bf16.mxu0 0
  %905 = vmatpush1.bf16.msra.mxu0 %v663
  %906 = vmatprep.subr.bf16.mxu0 0
  %907 = vmatpush1.bf16.msra.mxu0 %v664
  %908 = vmatprep.subr.bf16.mxu0 0
  %909 = vmatpush1.bf16.msra.mxu0 %v665
  %910 = vmatprep.subr.bf16.mxu0 0
  %911 = vmatpush1.bf16.msra.mxu0 %v666
  %912 = vmatprep.subr.bf16.mxu0 0
  %913 = vmatpush1.bf16.msra.mxu0 %v667
  %914 = vmatprep.subr.bf16.mxu0 0
  %915 = vmatpush1.bf16.msra.mxu0 %v668
  %916 = vmatprep.subr.bf16.mxu0 0
  %917 = vmatpush1.bf16.msra.mxu0 %v669
  %918 = vmatprep.subr.bf16.mxu0 0
  %919 = vmatpush1.bf16.msra.mxu0 %v670
  %920 = vmatprep.subr.bf16.mxu0 0
  %921 = vmatpush1.bf16.msra.mxu0 %v671
  %922 = vmatprep.subr.bf16.mxu0 0
  %923 = vmatpush1.bf16.msra.mxu0 %v672
  %924 = vmatprep.subr.bf16.mxu0 0
  %925 = vmatpush1.bf16.msra.mxu0 %v673
  %926 = vmatprep.subr.bf16.mxu0 0
  %927 = vmatpush1.bf16.msra.mxu0 %v674
  %928 = vmatprep.subr.bf16.mxu0 0
  %929 = vmatpush1.bf16.msra.mxu0 %v675
  %930 = vmatprep.subr.bf16.mxu0 0
  %931 = vmatpush1.bf16.msra.mxu0 %v676
  %932 = vmatprep.subr.bf16.mxu0 0
  %933 = vmatpush1.bf16.msra.mxu0 %v677
  %934 = vmatprep.mubr.bf16.mxu0 %v299
  %935 = vmatmul.mubr.bf16.gmra.mrb[0].mxu0 %v298
  %v936 = vpop.f32.mrb[0].mxu0
  %v937 = vadd.f32 %v865, %v936
  %v938 = vpop.f32.mrb[0].mxu0
  %v939 = vpop.f32.mrb[0].mxu0
  %v940 = vadd.f32 %v868, %v939
  %v941 = vpop.f32.mrb[0].mxu0
  %942 = vmatprep.mubr.bf16.mxu0 %v307
  %943 = vmatmul.mubr.bf16.gmra.mrb[0].mxu0 %v306
  %v944 = vpop.f32.mrb[0].mxu0
  %v945 = vadd.f32 %v873, %v944
  %v946 = vpop.f32.mrb[0].mxu0
  %v947 = vpop.f32.mrb[0].mxu0
  %v948 = vadd.f32 %v876, %v947
  %v949 = vpop.f32.mrb[0].mxu0
  %950 = vmatprep.mubr.bf16.mxu0 %v315
  %951 = vmatmul.mubr.bf16.gmra.mrb[0].mxu0 %v314
  %v952 = vpop.f32.mrb[0].mxu0
  %v953 = vadd.f32 %v881, %v952
  %v954 = vpop.f32.mrb[0].mxu0
  %v955 = vpop.f32.mrb[0].mxu0
  %v956 = vadd.f32 %v884, %v955
  %v957 = vpop.f32.mrb[0].mxu0
  %958 = vmatprep.mubr.bf16.mxu0 %v323
  %959 = vmatmul.mubr.bf16.gmra.mrb[0].mxu0 %v322
  %v960 = vpop.f32.mrb[0].mxu0
  %v961 = vadd.f32 %v889, %v960
  %v962 = vpop.f32.mrb[0].mxu0
  %v963 = vpop.f32.mrb[0].mxu0
  %v964 = vadd.f32 %v892, %v963
  %v965 = vpop.f32.mrb[0].mxu0
  %966 = vmatprep.mubr.bf16.mxu0 %v331
  %967 = vmatmul.mubr.bf16.gmra.mrb[0].mxu0 %v330
  %v968 = vpop.f32.mrb[0].mxu0
  %v969 = vadd.f32 %v897, %v968
  %v970 = vpop.f32.mrb[0].mxu0
  %v971 = vpop.f32.mrb[0].mxu0
  %v972 = vpop.f32.mrb[0].mxu0
  %973 = vdwg.mxu0
  %974 = vmatprep.subr.bf16.mxu0 0
  %975 = vmatpush1.bf16.msra.mxu0 %v678
  %976 = vmatprep.subr.bf16.mxu0 0
  %977 = vmatpush1.bf16.msra.mxu0 %v679
  %978 = vmatprep.subr.bf16.mxu0 0
  %979 = vmatpush1.bf16.msra.mxu0 %v680
  %980 = vmatprep.subr.bf16.mxu0 0
  %981 = vmatpush1.bf16.msra.mxu0 %v681
  %982 = vmatprep.subr.bf16.mxu0 0
  %983 = vmatpush1.bf16.msra.mxu0 %v682
  %984 = vmatprep.subr.bf16.mxu0 0
  %985 = vmatpush1.bf16.msra.mxu0 %v683
  %986 = vmatprep.subr.bf16.mxu0 0
  %987 = vmatpush1.bf16.msra.mxu0 %v684
  %988 = vmatprep.subr.bf16.mxu0 0
  %989 = vmatpush1.bf16.msra.mxu0 %v685
  %990 = vmatprep.subr.bf16.mxu0 0
  %991 = vmatpush1.bf16.msra.mxu0 %v686
  %992 = vmatprep.subr.bf16.mxu0 0
  %993 = vmatpush1.bf16.msra.mxu0 %v687
  %994 = vmatprep.subr.bf16.mxu0 0
  %995 = vmatpush1.bf16.msra.mxu0 %v688
  %996 = vmatprep.subr.bf16.mxu0 0
  %997 = vmatpush1.bf16.msra.mxu0 %v689
  %998 = vmatprep.subr.bf16.mxu0 0
  %999 = vmatpush1.bf16.msra.mxu0 %v690
  %1000 = vmatprep.subr.bf16.mxu0 0
  %1001 = vmatpush1.bf16.msra.mxu0 %v691
  %1002 = vmatprep.subr.bf16.mxu0 0
  %1003 = vmatpush1.bf16.msra.mxu0 %v692
  %1004 = vmatprep.subr.bf16.mxu0 0
  %1005 = vmatpush1.bf16.msra.mxu0 %v693
  %1006 = vmatprep.mubr.bf16.mxu0 %v301
  %1007 = vmatmul.mubr.bf16.gmra.mrb[0].mxu0 %v300
  %v1008 = vpop.f32.mrb[0].mxu0
  %v1009 = vadd.f32 %v937, %v1008
  %v1010 = vpop.f32.mrb[0].mxu0
  %v1011 = vpop.f32.mrb[0].mxu0
  %v1012 = vadd.f32 %v940, %v1011
  %v1013 = vpop.f32.mrb[0].mxu0
  %1014 = vmatprep.mubr.bf16.mxu0 %v309
  %1015 = vmatmul.mubr.bf16.gmra.mrb[0].mxu0 %v308
  %v1016 = vpop.f32.mrb[0].mxu0
  %v1017 = vadd.f32 %v945, %v1016
  %v1018 = vpop.f32.mrb[0].mxu0
  %v1019 = vpop.f32.mrb[0].mxu0
  %v1020 = vadd.f32 %v948, %v1019
  %v1021 = vpop.f32.mrb[0].mxu0
  %1022 = vmatprep.mubr.bf16.mxu0 %v317
  %1023 = vmatmul.mubr.bf16.gmra.mrb[0].mxu0 %v316
  %v1024 = vpop.f32.mrb[0].mxu0
  %v1025 = vadd.f32 %v953, %v1024
  %v1026 = vpop.f32.mrb[0].mxu0
  %v1027 = vpop.f32.mrb[0].mxu0
  %v1028 = vadd.f32 %v956, %v1027
  %v1029 = vpop.f32.mrb[0].mxu0
  %1030 = vmatprep.mubr.bf16.mxu0 %v325
  %1031 = vmatmul.mubr.bf16.gmra.mrb[0].mxu0 %v324
  %v1032 = vpop.f32.mrb[0].mxu0
  %v1033 = vadd.f32 %v961, %v1032
  %v1034 = vpop.f32.mrb[0].mxu0
  %v1035 = vpop.f32.mrb[0].mxu0
  %v1036 = vadd.f32 %v964, %v1035
  %v1037 = vpop.f32.mrb[0].mxu0
  %1038 = vmatprep.mubr.bf16.mxu0 %v333
  %1039 = vmatmul.mubr.bf16.gmra.mrb[0].mxu0 %v332
  %v1040 = vpop.f32.mrb[0].mxu0
  %v1041 = vadd.f32 %v969, %v1040
  %v1042 = vpop.f32.mrb[0].mxu0
  %v1043 = vpop.f32.mrb[0].mxu0
  %v1044 = vpop.f32.mrb[0].mxu0
  %1045 = vdwg.mxu0
  %v1046 = vmax.f32 %v1009, 0.0
  %v1047 = vmax.f32 %v1012, 0.0
  %v1048 = vmax.f32 %v1017, 0.0
  %v1049 = vmax.f32 %v1020, 0.0
  %v1050 = vmax.f32 %v1025, 0.0
  %v1051 = vmax.f32 %v1028, 0.0
  %v1052 = vmax.f32 %v1033, 0.0
  %v1053 = vmax.f32 %v1036, 0.0
  %v1054 = vmax.f32 %v1041, 0.0
  %v1055 = vpack.c.bf16 %v1047, %v1046
  %v1056 = vpack.c.bf16 %v1049, %v1048
  %v1057 = vpack.c.bf16 %v1051, %v1050
  %v1058 = vpack.c.bf16 %v1053, %v1052
  %v1059 = vpack.c.bf16 %v1054, %v1054
  %v1065 = vunpack.c.l.b16 %v1055
  %v1066 = vunpack.c.h.b16 %v1055
  %v1067 = vunpack.c.l.b16 %v1056
  %v1068 = vunpack.c.h.b16 %v1056
  %v1069 = vunpack.c.l.b16 %v1057
  %v1070 = vunpack.c.h.b16 %v1057
  %v1071 = vunpack.c.l.b16 %v1058
  %v1072 = vunpack.c.h.b16 %v1058
  %v1073 = vunpack.c.l.b16 %v1059
  %v1074 = vpack.c.b16 %v1065, %v1065
  %v1075 = vpack.c.b16 %v1066, %v1066
  %v1076 = vpack.c.b16 %v1067, %v1067
  %v1077 = vpack.c.b16 %v1068, %v1068
  %v1078 = vpack.c.b16 %v1069, %v1069
  %v1079 = vpack.c.b16 %v1070, %v1070
  %v1080 = vpack.c.b16 %v1071, %v1071
  %v1081 = vpack.c.b16 %v1072, %v1072
  %v1082 = vpack.c.b16 %v1073, %v1073
  %1092 = vst [vmem:[%s3] sm:$0xf] %v1074
  %1093 = vst [vmem:[%s3 + $0x4] sm:$0xf] %v1075
  %1094 = vst [vmem:[%s3 + $0x8] sm:$0xf] %v1076
  %1095 = vst [vmem:[%s3 + $0xc] sm:$0xf] %v1077
  %1096 = vst [vmem:[%s3 + $0x10] sm:$0xf] %v1078
  %1097 = vst [vmem:[%s3 + $0x14] sm:$0xf] %v1079
  %1098 = vst [vmem:[%s3 + $0x18] sm:$0xf] %v1080
  %1099 = vst [vmem:[%s3 + $0x1c] sm:$0xf] %v1081
  %1100 = vst [vmem:[%s3 + $0x20] sm:$0xf] %v1082
  // Predicated region
  $region14: #{encoder_forward.7} parent=0 // pred_check
    _
  $region15: #{encoder_forward.7} parent=0 // pred_check_branch
    %1102 = sbr.rel (0) target = $region17
  $region16: #{encoder_forward.7} parent=0 // pred_region
    _
  $region17: #{encoder_forward.7} parent=0 // pred_fallthru
    _
  // Predicated region
  $region18: #{encoder_forward.7} parent=0 // pred_check
    _
  $region19: #{encoder_forward.7} parent=0 // pred_check_branch
    %1104 = sbr.rel (0) target = $region21
  $region20: #{encoder_forward.7} parent=0 // pred_region
    _
  $region21: #{encoder_forward.7} parent=0 // pred_fallthru
    _

// kernel: encoder_forward.8
$region0: #{encoder_forward.8}
  #allocation0 [shape = 'u32[]', space=smem, size = 0x4, offset = 0x4, fixed_abs, tag = 'smem constant byte address 0x4 - core index']
  #allocation1 [shape = 'u32[144,128]{1,0:T(1,128)}', space=vmem, size = 0x12000, scoped, tag = 'internal scratch']
  %s0 = inlined_call_operand.vmem [shape: bf16[8,2048], index: 0, kind: input, shape index: {}]
  %s1 = inlined_call_operand.vmem [shape: bf16[2048,256], index: 1, kind: input, shape index: {}]
  %s2 = inlined_call_operand.vmem [shape: f32[1,256], index: 2, kind: input, shape index: {}]
  %s3 = inlined_call_operand.vmem [shape: bf16[8,256], index: 3, kind: output, shape index: {}]
  %s4 = sld [smem:[#allocation0]]
  $region22: #{encoder_forward.8} parent=0
    _
  %s6 = ssub.s32 1, %s4
  %s7 = scalar_select 0, %s6, %s4
  // Predicated region
  $region2: #{encoder_forward.8} parent=0 // pred_check
    _
  $region3: #{encoder_forward.8} parent=0 // pred_check_branch
    %9 = sbr.rel (0) target = $region5
  $region4: #{encoder_forward.8} parent=0 // pred_region
    _
  $region5: #{encoder_forward.8} parent=0 // pred_fallthru
    _
  // Predicated region
  $region6: #{encoder_forward.8} parent=0 // pred_check
    _
  $region7: #{encoder_forward.8} parent=0 // pred_check_branch
    %11 = sbr.rel (0) target = $region9
  $region8: #{encoder_forward.8} parent=0 // pred_region
    _
  $region9: #{encoder_forward.8} parent=0 // pred_fallthru
    _
  // Predicated region
  $region10: #{encoder_forward.8} parent=0 // pred_check
    _
  $region11: #{encoder_forward.8} parent=0 // pred_check_branch
    %13 = sbr.rel (0) target = $region13
  $region12: #{encoder_forward.8} parent=0 // pred_region
    _
  $region13: #{encoder_forward.8} parent=0 // pred_fallthru
    _
  %v14 = vld [vmem:[%s0] sm:$0xff]
  %v15 = vld [vmem:[%s0 + $0x8] sm:$0xff]
  %v16 = vld [vmem:[%s0 + $0x10] sm:$0xff]
  %v17 = vld [vmem:[%s0 + $0x18] sm:$0xff]
  %v18 = vld [vmem:[%s0 + $0x20] sm:$0xff]
  %v19 = vld [vmem:[%s0 + $0x28] sm:$0xff]
  %v20 = vld [vmem:[%s0 + $0x30] sm:$0xff]
  %v21 = vld [vmem:[%s0 + $0x38] sm:$0xff]
  %v22 = vld [vmem:[%s1] sm:$0xff]
  %v23 = vld [vmem:[%s1 + $0x8] sm:$0xff]
  %v24 = vld [vmem:[%s1 + $0x10] sm:$0xff]
  %v25 = vld [vmem:[%s1 + $0x18] sm:$0xff]
  %v26 = vld [vmem:[%s1 + $0x20] sm:$0xff]
  %v27 = vld [vmem:[%s1 + $0x28] sm:$0xff]
  %v28 = vld [vmem:[%s1 + $0x30] sm:$0xff]
  %v29 = vld [vmem:[%s1 + $0x38] sm:$0xff]
  %v30 = vld [vmem:[%s1 + $0x40] sm:$0xff]
  %v31 = vld [vmem:[%s1 + $0x48] sm:$0xff]
  %v32 = vld [vmem:[%s1 + $0x50] sm:$0xff]
  %v33 = vld [vmem:[%s1 + $0x58] sm:$0xff]
  %v34 = vld [vmem:[%s1 + $0x60] sm:$0xff]
  %v35 = vld [vmem:[%s1 + $0x68] sm:$0xff]
  %v36 = vld [vmem:[%s1 + $0x70] sm:$0xff]
  %v37 = vld [vmem:[%s1 + $0x78] sm:$0xff]
  %v38 = vld [vmem:[%s1 + $0x80] sm:$0xff]
  %v39 = vld [vmem:[%s1 + $0x88] sm:$0xff]
  %v40 = vld [vmem:[%s1 + $0x90] sm:$0xff]
  %v41 = vld [vmem:[%s1 + $0x98] sm:$0xff]
  %v42 = vld [vmem:[%s1 + $0xa0] sm:$0xff]
  %v43 = vld [vmem:[%s1 + $0xa8] sm:$0xff]
  %v44 = vld [vmem:[%s1 + $0xb0] sm:$0xff]
  %v45 = vld [vmem:[%s1 + $0xb8] sm:$0xff]
  %v46 = vld [vmem:[%s1 + $0xc0] sm:$0xff]
  %v47 = vld [vmem:[%s1 + $0xc8] sm:$0xff]
  %v48 = vld [vmem:[%s1 + $0xd0] sm:$0xff]
  %v49 = vld [vmem:[%s1 + $0xd8] sm:$0xff]
  %v50 = vld [vmem:[%s1 + $0xe0] sm:$0xff]
  %v51 = vld [vmem:[%s1 + $0xe8] sm:$0xff]
  %v52 = vld [vmem:[%s1 + $0xf0] sm:$0xff]
  %v53 = vld [vmem:[%s1 + $0xf8] sm:$0xff]
  %v54 = vld [vmem:[%s1 + $0x100] sm:$0xff]
  %v55 = vld [vmem:[%s1 + $0x108] sm:$0xff]
  %v56 = vld [vmem:[%s1 + $0x110] sm:$0xff]
  %v57 = vld [vmem:[%s1 + $0x118] sm:$0xff]
  %v58 = vld [vmem:[%s1 + $0x120] sm:$0xff]
  %v59 = vld [vmem:[%s1 + $0x128] sm:$0xff]
  %v60 = vld [vmem:[%s1 + $0x130] sm:$0xff]
  %v61 = vld [vmem:[%s1 + $0x138] sm:$0xff]
  %v62 = vld [vmem:[%s1 + $0x140] sm:$0xff]
  %v63 = vld [vmem:[%s1 + $0x148] sm:$0xff]
  %v64 = vld [vmem:[%s1 + $0x150] sm:$0xff]
  %v65 = vld [vmem:[%s1 + $0x158] sm:$0xff]
  %v66 = vld [vmem:[%s1 + $0x160] sm:$0xff]
  %v67 = vld [vmem:[%s1 + $0x168] sm:$0xff]
  %v68 = vld [vmem:[%s1 + $0x170] sm:$0xff]
  %v69 = vld [vmem:[%s1 + $0x178] sm:$0xff]
  %v70 = vld [vmem:[%s1 + $0x180] sm:$0xff]
  %v71 = vld [vmem:[%s1 + $0x188] sm:$0xff]
  %v72 = vld [vmem:[%s1 + $0x190] sm:$0xff]
  %v73 = vld [vmem:[%s1 + $0x198] sm:$0xff]
  %v74 = vld [vmem:[%s1 + $0x1a0] sm:$0xff]
  %v75 = vld [vmem:[%s1 + $0x1a8] sm:$0xff]
  %v76 = vld [vmem:[%s1 + $0x1b0] sm:$0xff]
  %v77 = vld [vmem:[%s1 + $0x1b8] sm:$0xff]
  %v78 = vld [vmem:[%s1 + $0x1c0] sm:$0xff]
  %v79 = vld [vmem:[%s1 + $0x1c8] sm:$0xff]
  %v80 = vld [vmem:[%s1 + $0x1d0] sm:$0xff]
  %v81 = vld [vmem:[%s1 + $0x1d8] sm:$0xff]
  %v82 = vld [vmem:[%s1 + $0x1e0] sm:$0xff]
  %v83 = vld [vmem:[%s1 + $0x1e8] sm:$0xff]
  %v84 = vld [vmem:[%s1 + $0x1f0] sm:$0xff]
  %v85 = vld [vmem:[%s1 + $0x1f8] sm:$0xff]
  %v86 = vld [vmem:[%s1 + $0x200] sm:$0xff]
  %v87 = vld [vmem:[%s1 + $0x208] sm:$0xff]
  %v88 = vld [vmem:[%s1 + $0x210] sm:$0xff]
  %v89 = vld [vmem:[%s1 + $0x218] sm:$0xff]
  %v90 = vld [vmem:[%s1 + $0x220] sm:$0xff]
  %v91 = vld [vmem:[%s1 + $0x228] sm:$0xff]
  %v92 = vld [vmem:[%s1 + $0x230] sm:$0xff]
  %v93 = vld [vmem:[%s1 + $0x238] sm:$0xff]
  %v94 = vld [vmem:[%s1 + $0x240] sm:$0xff]
  %v95 = vld [vmem:[%s1 + $0x248] sm:$0xff]
  %v96 = vld [vmem:[%s1 + $0x250] sm:$0xff]
  %v97 = vld [vmem:[%s1 + $0x258] sm:$0xff]
  %v98 = vld [vmem:[%s1 + $0x260] sm:$0xff]
  %v99 = vld [vmem:[%s1 + $0x268] sm:$0xff]
  %v100 = vld [vmem:[%s1 + $0x270] sm:$0xff]
  %v101 = vld [vmem:[%s1 + $0x278] sm:$0xff]
  %v102 = vld [vmem:[%s1 + $0x280] sm:$0xff]
  %v103 = vld [vmem:[%s1 + $0x288] sm:$0xff]
  %v104 = vld [vmem:[%s1 + $0x290] sm:$0xff]
  %v105 = vld [vmem:[%s1 + $0x298] sm:$0xff]
  %v106 = vld [vmem:[%s1 + $0x2a0] sm:$0xff]
  %v107 = vld [vmem:[%s1 + $0x2a8] sm:$0xff]
  %v108 = vld [vmem:[%s1 + $0x2b0] sm:$0xff]
  %v109 = vld [vmem:[%s1 + $0x2b8] sm:$0xff]
  %v110 = vld [vmem:[%s1 + $0x2c0] sm:$0xff]
  %v111 = vld [vmem:[%s1 + $0x2c8] sm:$0xff]
  %v112 = vld [vmem:[%s1 + $0x2d0] sm:$0xff]
  %v113 = vld [vmem:[%s1 + $0x2d8] sm:$0xff]
  %v114 = vld [vmem:[%s1 + $0x2e0] sm:$0xff]
  %v115 = vld [vmem:[%s1 + $0x2e8] sm:$0xff]
  %v116 = vld [vmem:[%s1 + $0x2f0] sm:$0xff]
  %v117 = vld [vmem:[%s1 + $0x2f8] sm:$0xff]
  %v118 = vld [vmem:[%s1 + $0x300] sm:$0xff]
  %v119 = vld [vmem:[%s1 + $0x308] sm:$0xff]
  %v120 = vld [vmem:[%s1 + $0x310] sm:$0xff]
  %v121 = vld [vmem:[%s1 + $0x318] sm:$0xff]
  %v122 = vld [vmem:[%s1 + $0x320] sm:$0xff]
  %v123 = vld [vmem:[%s1 + $0x328] sm:$0xff]
  %v124 = vld [vmem:[%s1 + $0x330] sm:$0xff]
  %v125 = vld [vmem:[%s1 + $0x338] sm:$0xff]
  %v126 = vld [vmem:[%s1 + $0x340] sm:$0xff]
  %v127 = vld [vmem:[%s1 + $0x348] sm:$0xff]
  %v128 = vld [vmem:[%s1 + $0x350] sm:$0xff]
  %v129 = vld [vmem:[%s1 + $0x358] sm:$0xff]
  %v130 = vld [vmem:[%s1 + $0x360] sm:$0xff]
  %v131 = vld [vmem:[%s1 + $0x368] sm:$0xff]
  %v132 = vld [vmem:[%s1 + $0x370] sm:$0xff]
  %v133 = vld [vmem:[%s1 + $0x378] sm:$0xff]
  %v134 = vld [vmem:[%s1 + $0x380] sm:$0xff]
  %v135 = vld [vmem:[%s1 + $0x388] sm:$0xff]
  %v136 = vld [vmem:[%s1 + $0x390] sm:$0xff]
  %v137 = vld [vmem:[%s1 + $0x398] sm:$0xff]
  %v138 = vld [vmem:[%s1 + $0x3a0] sm:$0xff]
  %v139 = vld [vmem:[%s1 + $0x3a8] sm:$0xff]
  %v140 = vld [vmem:[%s1 + $0x3b0] sm:$0xff]
  %v141 = vld [vmem:[%s1 + $0x3b8] sm:$0xff]
  %v142 = vld [vmem:[%s1 + $0x3c0] sm:$0xff]
  %v143 = vld [vmem:[%s1 + $0x3c8] sm:$0xff]
  %v144 = vld [vmem:[%s1 + $0x3d0] sm:$0xff]
  %v145 = vld [vmem:[%s1 + $0x3d8] sm:$0xff]
  %v146 = vld [vmem:[%s1 + $0x3e0] sm:$0xff]
  %v147 = vld [vmem:[%s1 + $0x3e8] sm:$0xff]
  %v148 = vld [vmem:[%s1 + $0x3f0] sm:$0xff]
  %v149 = vld [vmem:[%s1 + $0x3f8] sm:$0xff]
  %v150 = vld [vmem:[%s1 + $0x400] sm:$0xff]
  %v151 = vld [vmem:[%s1 + $0x408] sm:$0xff]
  %v152 = vld [vmem:[%s1 + $0x410] sm:$0xff]
  %v153 = vld [vmem:[%s1 + $0x418] sm:$0xff]
  %v154 = vld [vmem:[%s1 + $0x420] sm:$0xff]
  %v155 = vld [vmem:[%s1 + $0x428] sm:$0xff]
  %v156 = vld [vmem:[%s1 + $0x430] sm:$0xff]
  %v157 = vld [vmem:[%s1 + $0x438] sm:$0xff]
  %v158 = vld [vmem:[%s1 + $0x440] sm:$0xff]
  %v159 = vld [vmem:[%s1 + $0x448] sm:$0xff]
  %v160 = vld [vmem:[%s1 + $0x450] sm:$0xff]
  %v161 = vld [vmem:[%s1 + $0x458] sm:$0xff]
  %v162 = vld [vmem:[%s1 + $0x460] sm:$0xff]
  %v163 = vld [vmem:[%s1 + $0x468] sm:$0xff]
  %v164 = vld [vmem:[%s1 + $0x470] sm:$0xff]
  %v165 = vld [vmem:[%s1 + $0x478] sm:$0xff]
  %v166 = vld [vmem:[%s1 + $0x480] sm:$0xff]
  %v167 = vld [vmem:[%s1 + $0x488] sm:$0xff]
  %v168 = vld [vmem:[%s1 + $0x490] sm:$0xff]
  %v169 = vld [vmem:[%s1 + $0x498] sm:$0xff]
  %v170 = vld [vmem:[%s1 + $0x4a0] sm:$0xff]
  %v171 = vld [vmem:[%s1 + $0x4a8] sm:$0xff]
  %v172 = vld [vmem:[%s1 + $0x4b0] sm:$0xff]
  %v173 = vld [vmem:[%s1 + $0x4b8] sm:$0xff]
  %v174 = vld [vmem:[%s1 + $0x4c0] sm:$0xff]
  %v175 = vld [vmem:[%s1 + $0x4c8] sm:$0xff]
  %v176 = vld [vmem:[%s1 + $0x4d0] sm:$0xff]
  %v177 = vld [vmem:[%s1 + $0x4d8] sm:$0xff]
  %v178 = vld [vmem:[%s1 + $0x4e0] sm:$0xff]
  %v179 = vld [vmem:[%s1 + $0x4e8] sm:$0xff]
  %v180 = vld [vmem:[%s1 + $0x4f0] sm:$0xff]
  %v181 = vld [vmem:[%s1 + $0x4f8] sm:$0xff]
  %v182 = vld [vmem:[%s1 + $0x500] sm:$0xff]
  %v183 = vld [vmem:[%s1 + $0x508] sm:$0xff]
  %v184 = vld [vmem:[%s1 + $0x510] sm:$0xff]
  %v185 = vld [vmem:[%s1 + $0x518] sm:$0xff]
  %v186 = vld [vmem:[%s1 + $0x520] sm:$0xff]
  %v187 = vld [vmem:[%s1 + $0x528] sm:$0xff]
  %v188 = vld [vmem:[%s1 + $0x530] sm:$0xff]
  %v189 = vld [vmem:[%s1 + $0x538] sm:$0xff]
  %v190 = vld [vmem:[%s1 + $0x540] sm:$0xff]
  %v191 = vld [vmem:[%s1 + $0x548] sm:$0xff]
  %v192 = vld [vmem:[%s1 + $0x550] sm:$0xff]
  %v193 = vld [vmem:[%s1 + $0x558] sm:$0xff]
  %v194 = vld [vmem:[%s1 + $0x560] sm:$0xff]
  %v195 = vld [vmem:[%s1 + $0x568] sm:$0xff]
  %v196 = vld [vmem:[%s1 + $0x570] sm:$0xff]
  %v197 = vld [vmem:[%s1 + $0x578] sm:$0xff]
  %v198 = vld [vmem:[%s1 + $0x580] sm:$0xff]
  %v199 = vld [vmem:[%s1 + $0x588] sm:$0xff]
  %v200 = vld [vmem:[%s1 + $0x590] sm:$0xff]
  %v201 = vld [vmem:[%s1 + $0x598] sm:$0xff]
  %v202 = vld [vmem:[%s1 + $0x5a0] sm:$0xff]
  %v203 = vld [vmem:[%s1 + $0x5a8] sm:$0xff]
  %v204 = vld [vmem:[%s1 + $0x5b0] sm:$0xff]
  %v205 = vld [vmem:[%s1 + $0x5b8] sm:$0xff]
  %v206 = vld [vmem:[%s1 + $0x5c0] sm:$0xff]
  %v207 = vld [vmem:[%s1 + $0x5c8] sm:$0xff]
  %v208 = vld [vmem:[%s1 + $0x5d0] sm:$0xff]
  %v209 = vld [vmem:[%s1 + $0x5d8] sm:$0xff]
  %v210 = vld [vmem:[%s1 + $0x5e0] sm:$0xff]
  %v211 = vld [vmem:[%s1 + $0x5e8] sm:$0xff]
  %v212 = vld [vmem:[%s1 + $0x5f0] sm:$0xff]
  %v213 = vld [vmem:[%s1 + $0x5f8] sm:$0xff]
  %v214 = vld [vmem:[%s1 + $0x600] sm:$0xff]
  %v215 = vld [vmem:[%s1 + $0x608] sm:$0xff]
  %v216 = vld [vmem:[%s1 + $0x610] sm:$0xff]
  %v217 = vld [vmem:[%s1 + $0x618] sm:$0xff]
  %v218 = vld [vmem:[%s1 + $0x620] sm:$0xff]
  %v219 = vld [vmem:[%s1 + $0x628] sm:$0xff]
  %v220 = vld [vmem:[%s1 + $0x630] sm:$0xff]
  %v221 = vld [vmem:[%s1 + $0x638] sm:$0xff]
  %v222 = vld [vmem:[%s1 + $0x640] sm:$0xff]
  %v223 = vld [vmem:[%s1 + $0x648] sm:$0xff]
  %v224 = vld [vmem:[%s1 + $0x650] sm:$0xff]
  %v225 = vld [vmem:[%s1 + $0x658] sm:$0xff]
  %v226 = vld [vmem:[%s1 + $0x660] sm:$0xff]
  %v227 = vld [vmem:[%s1 + $0x668] sm:$0xff]
  %v228 = vld [vmem:[%s1 + $0x670] sm:$0xff]
  %v229 = vld [vmem:[%s1 + $0x678] sm:$0xff]
  %v230 = vld [vmem:[%s1 + $0x680] sm:$0xff]
  %v231 = vld [vmem:[%s1 + $0x688] sm:$0xff]
  %v232 = vld [vmem:[%s1 + $0x690] sm:$0xff]
  %v233 = vld [vmem:[%s1 + $0x698] sm:$0xff]
  %v234 = vld [vmem:[%s1 + $0x6a0] sm:$0xff]
  %v235 = vld [vmem:[%s1 + $0x6a8] sm:$0xff]
  %v236 = vld [vmem:[%s1 + $0x6b0] sm:$0xff]
  %v237 = vld [vmem:[%s1 + $0x6b8] sm:$0xff]
  %v238 = vld [vmem:[%s1 + $0x6c0] sm:$0xff]
  %v239 = vld [vmem:[%s1 + $0x6c8] sm:$0xff]
  %v240 = vld [vmem:[%s1 + $0x6d0] sm:$0xff]
  %v241 = vld [vmem:[%s1 + $0x6d8] sm:$0xff]
  %v242 = vld [vmem:[%s1 + $0x6e0] sm:$0xff]
  %v243 = vld [vmem:[%s1 + $0x6e8] sm:$0xff]
  %v244 = vld [vmem:[%s1 + $0x6f0] sm:$0xff]
  %v245 = vld [vmem:[%s1 + $0x6f8] sm:$0xff]
  %v246 = vld [vmem:[%s1 + $0x700] sm:$0xff]
  %v247 = vld [vmem:[%s1 + $0x708] sm:$0xff]
  %v248 = vld [vmem:[%s1 + $0x710] sm:$0xff]
  %v249 = vld [vmem:[%s1 + $0x718] sm:$0xff]
  %v250 = vld [vmem:[%s1 + $0x720] sm:$0xff]
  %v251 = vld [vmem:[%s1 + $0x728] sm:$0xff]
  %v252 = vld [vmem:[%s1 + $0x730] sm:$0xff]
  %v253 = vld [vmem:[%s1 + $0x738] sm:$0xff]
  %v254 = vld [vmem:[%s1 + $0x740] sm:$0xff]
  %v255 = vld [vmem:[%s1 + $0x748] sm:$0xff]
  %v256 = vld [vmem:[%s1 + $0x750] sm:$0xff]
  %v257 = vld [vmem:[%s1 + $0x758] sm:$0xff]
  %v258 = vld [vmem:[%s1 + $0x760] sm:$0xff]
  %v259 = vld [vmem:[%s1 + $0x768] sm:$0xff]
  %v260 = vld [vmem:[%s1 + $0x770] sm:$0xff]
  %v261 = vld [vmem:[%s1 + $0x778] sm:$0xff]
  %v262 = vld [vmem:[%s1 + $0x780] sm:$0xff]
  %v263 = vld [vmem:[%s1 + $0x788] sm:$0xff]
  %v264 = vld [vmem:[%s1 + $0x790] sm:$0xff]
  %v265 = vld [vmem:[%s1 + $0x798] sm:$0xff]
  %v266 = vld [vmem:[%s1 + $0x7a0] sm:$0xff]
  %v267 = vld [vmem:[%s1 + $0x7a8] sm:$0xff]
  %v268 = vld [vmem:[%s1 + $0x7b0] sm:$0xff]
  %v269 = vld [vmem:[%s1 + $0x7b8] sm:$0xff]
  %v270 = vld [vmem:[%s1 + $0x7c0] sm:$0xff]
  %v271 = vld [vmem:[%s1 + $0x7c8] sm:$0xff]
  %v272 = vld [vmem:[%s1 + $0x7d0] sm:$0xff]
  %v273 = vld [vmem:[%s1 + $0x7d8] sm:$0xff]
  %v274 = vld [vmem:[%s1 + $0x7e0] sm:$0xff]
  %v275 = vld [vmem:[%s1 + $0x7e8] sm:$0xff]
  %v276 = vld [vmem:[%s1 + $0x7f0] sm:$0xff]
  %v277 = vld [vmem:[%s1 + $0x7f8] sm:$0xff]
  %v278 = vld [vmem:[%s2] sm:$0x3]
  %v280 = vlaneseq
  %v281 = vshrl.u32 %v280, 7
  %v282 = vsub.s32 0, %v281
  %v283 = vrot.slane %v278, %v282
  %v284 = vlaneseq
  %v285 = vshrl.u32 %v284, 7
  %v286 = vsub.s32 1, %v285
  %v287 = vrot.slane %v278, %v286
  %v298 = vunpack.c.l.b16 %v14
  %v299 = vunpack.c.h.b16 %v14
  %v300 = vunpack.c.l.b16 %v15
  %v301 = vunpack.c.h.b16 %v15
  %v302 = vunpack.c.l.b16 %v16
  %v303 = vunpack.c.h.b16 %v16
  %v304 = vunpack.c.l.b16 %v17
  %v305 = vunpack.c.h.b16 %v17
  %v306 = vunpack.c.l.b16 %v18
  %v307 = vunpack.c.h.b16 %v18
  %v308 = vunpack.c.l.b16 %v19
  %v309 = vunpack.c.h.b16 %v19
  %v310 = vunpack.c.l.b16 %v20
  %v311 = vunpack.c.h.b16 %v20
  %v312 = vunpack.c.l.b16 %v21
  %v313 = vunpack.c.h.b16 %v21
  %v314 = vpack.c.b16 %v298, %v298
  %v315 = vpack.c.b16 %v299, %v299
  %v316 = vpack.c.b16 %v300, %v300
  %v317 = vpack.c.b16 %v301, %v301
  %v318 = vpack.c.b16 %v302, %v302
  %v319 = vpack.c.b16 %v303, %v303
  %v320 = vpack.c.b16 %v304, %v304
  %v321 = vpack.c.b16 %v305, %v305
  %v322 = vpack.c.b16 %v306, %v306
  %v323 = vpack.c.b16 %v307, %v307
  %v324 = vpack.c.b16 %v308, %v308
  %v325 = vpack.c.b16 %v309, %v309
  %v326 = vpack.c.b16 %v310, %v310
  %v327 = vpack.c.b16 %v311, %v311
  %v328 = vpack.c.b16 %v312, %v312
  %v329 = vpack.c.b16 %v313, %v313
  %v602 = vunpack.c.l.b16 %v22
  %v603 = vunpack.c.h.b16 %v22
  %v604 = vunpack.c.l.b16 %v23
  %v605 = vunpack.c.h.b16 %v23
  %v606 = vunpack.c.l.b16 %v24
  %v607 = vunpack.c.h.b16 %v24
  %v608 = vunpack.c.l.b16 %v25
  %v609 = vunpack.c.h.b16 %v25
  %v610 = vunpack.c.l.b16 %v26
  %v611 = vunpack.c.h.b16 %v26
  %v612 = vunpack.c.l.b16 %v27
  %v613 = vunpack.c.h.b16 %v27
  %v614 = vunpack.c.l.b16 %v28
  %v615 = vunpack.c.h.b16 %v28
  %v616 = vunpack.c.l.b16 %v29
  %v617 = vunpack.c.h.b16 %v29
  %v618 = vunpack.c.l.b16 %v30
  %v619 = vunpack.c.h.b16 %v30
  %v620 = vunpack.c.l.b16 %v31
  %v621 = vunpack.c.h.b16 %v31
  %v622 = vunpack.c.l.b16 %v32
  %v623 = vunpack.c.h.b16 %v32
  %v624 = vunpack.c.l.b16 %v33
  %v625 = vunpack.c.h.b16 %v33
  %v626 = vunpack.c.l.b16 %v34
  %v627 = vunpack.c.h.b16 %v34
  %v628 = vunpack.c.l.b16 %v35
  %v629 = vunpack.c.h.b16 %v35
  %v630 = vunpack.c.l.b16 %v36
  %v631 = vunpack.c.h.b16 %v36
  %v632 = vunpack.c.l.b16 %v37
  %v633 = vunpack.c.h.b16 %v37
  %v634 = vunpack.c.l.b16 %v38
  %v635 = vunpack.c.h.b16 %v38
  %v636 = vunpack.c.l.b16 %v39
  %v637 = vunpack.c.h.b16 %v39
  %v638 = vunpack.c.l.b16 %v40
  %v639 = vunpack.c.h.b16 %v40
  %v640 = vunpack.c.l.b16 %v41
  %v641 = vunpack.c.h.b16 %v41
  %v642 = vunpack.c.l.b16 %v42
  %v643 = vunpack.c.h.b16 %v42
  %v644 = vunpack.c.l.b16 %v43
  %v645 = vunpack.c.h.b16 %v43
  %v646 = vunpack.c.l.b16 %v44
  %v647 = vunpack.c.h.b16 %v44
  %v648 = vunpack.c.l.b16 %v45
  %v649 = vunpack.c.h.b16 %v45
  %v650 = vunpack.c.l.b16 %v46
  %v651 = vunpack.c.h.b16 %v46
  %v652 = vunpack.c.l.b16 %v47
  %v653 = vunpack.c.h.b16 %v47
  %v654 = vunpack.c.l.b16 %v48
  %v655 = vunpack.c.h.b16 %v48
  %v656 = vunpack.c.l.b16 %v49
  %v657 = vunpack.c.h.b16 %v49
  %v658 = vunpack.c.l.b16 %v50
  %v659 = vunpack.c.h.b16 %v50
  %v660 = vunpack.c.l.b16 %v51
  %v661 = vunpack.c.h.b16 %v51
  %v662 = vunpack.c.l.b16 %v52
  %v663 = vunpack.c.h.b16 %v52
  %v664 = vunpack.c.l.b16 %v53
  %v665 = vunpack.c.h.b16 %v53
  %v666 = vunpack.c.l.b16 %v54
  %v667 = vunpack.c.h.b16 %v54
  %v668 = vunpack.c.l.b16 %v55
  %v669 = vunpack.c.h.b16 %v55
  %v670 = vunpack.c.l.b16 %v56
  %v671 = vunpack.c.h.b16 %v56
  %v672 = vunpack.c.l.b16 %v57
  %v673 = vunpack.c.h.b16 %v57
  %v674 = vunpack.c.l.b16 %v58
  %v675 = vunpack.c.h.b16 %v58
  %v676 = vunpack.c.l.b16 %v59
  %v677 = vunpack.c.h.b16 %v59
  %v678 = vunpack.c.l.b16 %v60
  %v679 = vunpack.c.h.b16 %v60
  %v680 = vunpack.c.l.b16 %v61
  %v681 = vunpack.c.h.b16 %v61
  %v682 = vunpack.c.l.b16 %v62
  %v683 = vunpack.c.h.b16 %v62
  %v684 = vunpack.c.l.b16 %v63
  %v685 = vunpack.c.h.b16 %v63
  %v686 = vunpack.c.l.b16 %v64
  %v687 = vunpack.c.h.b16 %v64
  %v688 = vunpack.c.l.b16 %v65
  %v689 = vunpack.c.h.b16 %v65
  %v690 = vunpack.c.l.b16 %v66
  %v691 = vunpack.c.h.b16 %v66
  %v692 = vunpack.c.l.b16 %v67
  %v693 = vunpack.c.h.b16 %v67
  %v694 = vunpack.c.l.b16 %v68
  %v695 = vunpack.c.h.b16 %v68
  %v696 = vunpack.c.l.b16 %v69
  %v697 = vunpack.c.h.b16 %v69
  %v698 = vunpack.c.l.b16 %v70
  %v699 = vunpack.c.h.b16 %v70
  %v700 = vunpack.c.l.b16 %v71
  %v701 = vunpack.c.h.b16 %v71
  %v702 = vunpack.c.l.b16 %v72
  %v703 = vunpack.c.h.b16 %v72
  %v704 = vunpack.c.l.b16 %v73
  %v705 = vunpack.c.h.b16 %v73
  %v706 = vunpack.c.l.b16 %v74
  %v707 = vunpack.c.h.b16 %v74
  %v708 = vunpack.c.l.b16 %v75
  %v709 = vunpack.c.h.b16 %v75
  %v710 = vunpack.c.l.b16 %v76
  %v711 = vunpack.c.h.b16 %v76
  %v712 = vunpack.c.l.b16 %v77
  %v713 = vunpack.c.h.b16 %v77
  %v714 = vunpack.c.l.b16 %v78
  %v715 = vunpack.c.h.b16 %v78
  %v716 = vunpack.c.l.b16 %v79
  %v717 = vunpack.c.h.b16 %v79
  %v718 = vunpack.c.l.b16 %v80
  %v719 = vunpack.c.h.b16 %v80
  %v720 = vunpack.c.l.b16 %v81
  %v721 = vunpack.c.h.b16 %v81
  %v722 = vunpack.c.l.b16 %v82
  %v723 = vunpack.c.h.b16 %v82
  %v724 = vunpack.c.l.b16 %v83
  %v725 = vunpack.c.h.b16 %v83
  %v726 = vunpack.c.l.b16 %v84
  %v727 = vunpack.c.h.b16 %v84
  %v728 = vunpack.c.l.b16 %v85
  %v729 = vunpack.c.h.b16 %v85
  %v730 = vunpack.c.l.b16 %v86
  %v731 = vunpack.c.h.b16 %v86
  %v732 = vunpack.c.l.b16 %v87
  %v733 = vunpack.c.h.b16 %v87
  %v734 = vunpack.c.l.b16 %v88
  %v735 = vunpack.c.h.b16 %v88
  %v736 = vunpack.c.l.b16 %v89
  %v737 = vunpack.c.h.b16 %v89
  %v738 = vunpack.c.l.b16 %v90
  %v739 = vunpack.c.h.b16 %v90
  %v740 = vunpack.c.l.b16 %v91
  %v741 = vunpack.c.h.b16 %v91
  %v742 = vunpack.c.l.b16 %v92
  %v743 = vunpack.c.h.b16 %v92
  %v744 = vunpack.c.l.b16 %v93
  %v745 = vunpack.c.h.b16 %v93
  %v746 = vunpack.c.l.b16 %v94
  %v747 = vunpack.c.h.b16 %v94
  %v748 = vunpack.c.l.b16 %v95
  %v749 = vunpack.c.h.b16 %v95
  %v750 = vunpack.c.l.b16 %v96
  %v751 = vunpack.c.h.b16 %v96
  %v752 = vunpack.c.l.b16 %v97
  %v753 = vunpack.c.h.b16 %v97
  %v754 = vunpack.c.l.b16 %v98
  %v755 = vunpack.c.h.b16 %v98
  %v756 = vunpack.c.l.b16 %v99
  %v757 = vunpack.c.h.b16 %v99
  %v758 = vunpack.c.l.b16 %v100
  %v759 = vunpack.c.h.b16 %v100
  %v760 = vunpack.c.l.b16 %v101
  %v761 = vunpack.c.h.b16 %v101
  %v762 = vunpack.c.l.b16 %v102
  %v763 = vunpack.c.h.b16 %v102
  %v764 = vunpack.c.l.b16 %v103
  %v765 = vunpack.c.h.b16 %v103
  %v766 = vunpack.c.l.b16 %v104
  %v767 = vunpack.c.h.b16 %v104
  %v768 = vunpack.c.l.b16 %v105
  %v769 = vunpack.c.h.b16 %v105
  %v770 = vunpack.c.l.b16 %v106
  %v771 = vunpack.c.h.b16 %v106
  %v772 = vunpack.c.l.b16 %v107
  %v773 = vunpack.c.h.b16 %v107
  %v774 = vunpack.c.l.b16 %v108
  %v775 = vunpack.c.h.b16 %v108
  %v776 = vunpack.c.l.b16 %v109
  %v777 = vunpack.c.h.b16 %v109
  %v778 = vunpack.c.l.b16 %v110
  %v779 = vunpack.c.h.b16 %v110
  %v780 = vunpack.c.l.b16 %v111
  %v781 = vunpack.c.h.b16 %v111
  %v782 = vunpack.c.l.b16 %v112
  %v783 = vunpack.c.h.b16 %v112
  %v784 = vunpack.c.l.b16 %v113
  %v785 = vunpack.c.h.b16 %v113
  %v786 = vunpack.c.l.b16 %v114
  %v787 = vunpack.c.h.b16 %v114
  %v788 = vunpack.c.l.b16 %v115
  %v789 = vunpack.c.h.b16 %v115
  %v790 = vunpack.c.l.b16 %v116
  %v791 = vunpack.c.h.b16 %v116
  %v792 = vunpack.c.l.b16 %v117
  %v793 = vunpack.c.h.b16 %v117
  %v794 = vunpack.c.l.b16 %v118
  %v795 = vunpack.c.h.b16 %v118
  %v796 = vunpack.c.l.b16 %v119
  %v797 = vunpack.c.h.b16 %v119
  %v798 = vunpack.c.l.b16 %v120
  %v799 = vunpack.c.h.b16 %v120
  %v800 = vunpack.c.l.b16 %v121
  %v801 = vunpack.c.h.b16 %v121
  %v802 = vunpack.c.l.b16 %v122
  %v803 = vunpack.c.h.b16 %v122
  %v804 = vunpack.c.l.b16 %v123
  %v805 = vunpack.c.h.b16 %v123
  %v806 = vunpack.c.l.b16 %v124
  %v807 = vunpack.c.h.b16 %v124
  %v808 = vunpack.c.l.b16 %v125
  %v809 = vunpack.c.h.b16 %v125
  %v810 = vunpack.c.l.b16 %v126
  %v811 = vunpack.c.h.b16 %v126
  %v812 = vunpack.c.l.b16 %v127
  %v813 = vunpack.c.h.b16 %v127
  %v814 = vunpack.c.l.b16 %v128
  %v815 = vunpack.c.h.b16 %v128
  %v816 = vunpack.c.l.b16 %v129
  %v817 = vunpack.c.h.b16 %v129
  %v818 = vunpack.c.l.b16 %v130
  %v819 = vunpack.c.h.b16 %v130
  %v820 = vunpack.c.l.b16 %v131
  %v821 = vunpack.c.h.b16 %v131
  %v822 = vunpack.c.l.b16 %v132
  %v823 = vunpack.c.h.b16 %v132
  %v824 = vunpack.c.l.b16 %v133
  %v825 = vunpack.c.h.b16 %v133
  %v826 = vunpack.c.l.b16 %v134
  %v827 = vunpack.c.h.b16 %v134
  %v828 = vunpack.c.l.b16 %v135
  %v829 = vunpack.c.h.b16 %v135
  %v830 = vunpack.c.l.b16 %v136
  %v831 = vunpack.c.h.b16 %v136
  %v832 = vunpack.c.l.b16 %v137
  %v833 = vunpack.c.h.b16 %v137
  %v834 = vunpack.c.l.b16 %v138
  %v835 = vunpack.c.h.b16 %v138
  %v836 = vunpack.c.l.b16 %v139
  %v837 = vunpack.c.h.b16 %v139
  %v838 = vunpack.c.l.b16 %v140
  %v839 = vunpack.c.h.b16 %v140
  %v840 = vunpack.c.l.b16 %v141
  %v841 = vunpack.c.h.b16 %v141
  %v842 = vunpack.c.l.b16 %v142
  %v843 = vunpack.c.h.b16 %v142
  %v844 = vunpack.c.l.b16 %v143
  %v845 = vunpack.c.h.b16 %v143
  %v846 = vunpack.c.l.b16 %v144
  %v847 = vunpack.c.h.b16 %v144
  %v848 = vunpack.c.l.b16 %v145
  %v849 = vunpack.c.h.b16 %v145
  %v850 = vunpack.c.l.b16 %v146
  %v851 = vunpack.c.h.b16 %v146
  %v852 = vunpack.c.l.b16 %v147
  %v853 = vunpack.c.h.b16 %v147
  %v854 = vunpack.c.l.b16 %v148
  %v855 = vunpack.c.h.b16 %v148
  %v856 = vunpack.c.l.b16 %v149
  %v857 = vunpack.c.h.b16 %v149
  %v858 = vunpack.c.l.b16 %v150
  %v859 = vunpack.c.h.b16 %v150
  %v860 = vunpack.c.l.b16 %v151
  %v861 = vunpack.c.h.b16 %v151
  %v862 = vunpack.c.l.b16 %v152
  %v863 = vunpack.c.h.b16 %v152
  %v864 = vunpack.c.l.b16 %v153
  %v865 = vunpack.c.h.b16 %v153
  %v866 = vunpack.c.l.b16 %v154
  %v867 = vunpack.c.h.b16 %v154
  %v868 = vunpack.c.l.b16 %v155
  %v869 = vunpack.c.h.b16 %v155
  %v870 = vunpack.c.l.b16 %v156
  %v871 = vunpack.c.h.b16 %v156
  %v872 = vunpack.c.l.b16 %v157
  %v873 = vunpack.c.h.b16 %v157
  %v874 = vunpack.c.l.b16 %v158
  %v875 = vunpack.c.h.b16 %v158
  %v876 = vunpack.c.l.b16 %v159
  %v877 = vunpack.c.h.b16 %v159
  %v878 = vunpack.c.l.b16 %v160
  %v879 = vunpack.c.h.b16 %v160
  %v880 = vunpack.c.l.b16 %v161
  %v881 = vunpack.c.h.b16 %v161
  %v882 = vunpack.c.l.b16 %v162
  %v883 = vunpack.c.h.b16 %v162
  %v884 = vunpack.c.l.b16 %v163
  %v885 = vunpack.c.h.b16 %v163
  %v886 = vunpack.c.l.b16 %v164
  %v887 = vunpack.c.h.b16 %v164
  %v888 = vunpack.c.l.b16 %v165
  %v889 = vunpack.c.h.b16 %v165
  %v890 = vunpack.c.l.b16 %v166
  %v891 = vunpack.c.h.b16 %v166
  %v892 = vunpack.c.l.b16 %v167
  %v893 = vunpack.c.h.b16 %v167
  %v894 = vunpack.c.l.b16 %v168
  %v895 = vunpack.c.h.b16 %v168
  %v896 = vunpack.c.l.b16 %v169
  %v897 = vunpack.c.h.b16 %v169
  %v898 = vunpack.c.l.b16 %v170
  %v899 = vunpack.c.h.b16 %v170
  %v900 = vunpack.c.l.b16 %v171
  %v901 = vunpack.c.h.b16 %v171
  %v902 = vunpack.c.l.b16 %v172
  %v903 = vunpack.c.h.b16 %v172
  %v904 = vunpack.c.l.b16 %v173
  %v905 = vunpack.c.h.b16 %v173
  %v906 = vunpack.c.l.b16 %v174
  %v907 = vunpack.c.h.b16 %v174
  %v908 = vunpack.c.l.b16 %v175
  %v909 = vunpack.c.h.b16 %v175
  %v910 = vunpack.c.l.b16 %v176
  %v911 = vunpack.c.h.b16 %v176
  %v912 = vunpack.c.l.b16 %v177
  %v913 = vunpack.c.h.b16 %v177
  %v914 = vunpack.c.l.b16 %v178
  %v915 = vunpack.c.h.b16 %v178
  %v916 = vunpack.c.l.b16 %v179
  %v917 = vunpack.c.h.b16 %v179
  %v918 = vunpack.c.l.b16 %v180
  %v919 = vunpack.c.h.b16 %v180
  %v920 = vunpack.c.l.b16 %v181
  %v921 = vunpack.c.h.b16 %v181
  %v922 = vunpack.c.l.b16 %v182
  %v923 = vunpack.c.h.b16 %v182
  %v924 = vunpack.c.l.b16 %v183
  %v925 = vunpack.c.h.b16 %v183
  %v926 = vunpack.c.l.b16 %v184
  %v927 = vunpack.c.h.b16 %v184
  %v928 = vunpack.c.l.b16 %v185
  %v929 = vunpack.c.h.b16 %v185
  %v930 = vunpack.c.l.b16 %v186
  %v931 = vunpack.c.h.b16 %v186
  %v932 = vunpack.c.l.b16 %v187
  %v933 = vunpack.c.h.b16 %v187
  %v934 = vunpack.c.l.b16 %v188
  %v935 = vunpack.c.h.b16 %v188
  %v936 = vunpack.c.l.b16 %v189
  %v937 = vunpack.c.h.b16 %v189
  %v938 = vunpack.c.l.b16 %v190
  %v939 = vunpack.c.h.b16 %v190
  %v940 = vunpack.c.l.b16 %v191
  %v941 = vunpack.c.h.b16 %v191
  %v942 = vunpack.c.l.b16 %v192
  %v943 = vunpack.c.h.b16 %v192
  %v944 = vunpack.c.l.b16 %v193
  %v945 = vunpack.c.h.b16 %v193
  %v946 = vunpack.c.l.b16 %v194
  %v947 = vunpack.c.h.b16 %v194
  %v948 = vunpack.c.l.b16 %v195
  %v949 = vunpack.c.h.b16 %v195
  %v950 = vunpack.c.l.b16 %v196
  %v951 = vunpack.c.h.b16 %v196
  %v952 = vunpack.c.l.b16 %v197
  %v953 = vunpack.c.h.b16 %v197
  %v954 = vunpack.c.l.b16 %v198
  %v955 = vunpack.c.h.b16 %v198
  %v956 = vunpack.c.l.b16 %v199
  %v957 = vunpack.c.h.b16 %v199
  %v958 = vunpack.c.l.b16 %v200
  %v959 = vunpack.c.h.b16 %v200
  %v960 = vunpack.c.l.b16 %v201
  %v961 = vunpack.c.h.b16 %v201
  %v962 = vunpack.c.l.b16 %v202
  %v963 = vunpack.c.h.b16 %v202
  %v964 = vunpack.c.l.b16 %v203
  %v965 = vunpack.c.h.b16 %v203
  %v966 = vunpack.c.l.b16 %v204
  %v967 = vunpack.c.h.b16 %v204
  %v968 = vunpack.c.l.b16 %v205
  %v969 = vunpack.c.h.b16 %v205
  %v970 = vunpack.c.l.b16 %v206
  %v971 = vunpack.c.h.b16 %v206
  %v972 = vunpack.c.l.b16 %v207
  %v973 = vunpack.c.h.b16 %v207
  %v974 = vunpack.c.l.b16 %v208
  %v975 = vunpack.c.h.b16 %v208
  %v976 = vunpack.c.l.b16 %v209
  %v977 = vunpack.c.h.b16 %v209
  %v978 = vunpack.c.l.b16 %v210
  %v979 = vunpack.c.h.b16 %v210
  %v980 = vunpack.c.l.b16 %v211
  %v981 = vunpack.c.h.b16 %v211
  %v982 = vunpack.c.l.b16 %v212
  %v983 = vunpack.c.h.b16 %v212
  %v984 = vunpack.c.l.b16 %v213
  %v985 = vunpack.c.h.b16 %v213
  %v986 = vunpack.c.l.b16 %v214
  %v987 = vunpack.c.h.b16 %v214
  %v988 = vunpack.c.l.b16 %v215
  %v989 = vunpack.c.h.b16 %v215
  %v990 = vunpack.c.l.b16 %v216
  %v991 = vunpack.c.h.b16 %v216
  %v992 = vunpack.c.l.b16 %v217
  %v993 = vunpack.c.h.b16 %v217
  %v994 = vunpack.c.l.b16 %v218
  %v995 = vunpack.c.h.b16 %v218
  %v996 = vunpack.c.l.b16 %v219
  %v997 = vunpack.c.h.b16 %v219
  %v998 = vunpack.c.l.b16 %v220
  %v999 = vunpack.c.h.b16 %v220
  %v1000 = vunpack.c.l.b16 %v221
  %v1001 = vunpack.c.h.b16 %v221
  %v1002 = vunpack.c.l.b16 %v222
  %v1003 = vunpack.c.h.b16 %v222
  %v1004 = vunpack.c.l.b16 %v223
  %v1005 = vunpack.c.h.b16 %v223
  %v1006 = vunpack.c.l.b16 %v224
  %v1007 = vunpack.c.h.b16 %v224
  %v1008 = vunpack.c.l.b16 %v225
  %v1009 = vunpack.c.h.b16 %v225
  %v1010 = vunpack.c.l.b16 %v226
  %v1011 = vunpack.c.h.b16 %v226
  %v1012 = vunpack.c.l.b16 %v227
  %v1013 = vunpack.c.h.b16 %v227
  %v1014 = vunpack.c.l.b16 %v228
  %v1015 = vunpack.c.h.b16 %v228
  %v1016 = vunpack.c.l.b16 %v229
  %v1017 = vunpack.c.h.b16 %v229
  %v1018 = vunpack.c.l.b16 %v230
  %v1019 = vunpack.c.h.b16 %v230
  %v1020 = vunpack.c.l.b16 %v231
  %v1021 = vunpack.c.h.b16 %v231
  %v1022 = vunpack.c.l.b16 %v232
  %v1023 = vunpack.c.h.b16 %v232
  %v1024 = vunpack.c.l.b16 %v233
  %v1025 = vunpack.c.h.b16 %v233
  %v1026 = vunpack.c.l.b16 %v234
  %v1027 = vunpack.c.h.b16 %v234
  %v1028 = vunpack.c.l.b16 %v235
  %v1029 = vunpack.c.h.b16 %v235
  %v1030 = vunpack.c.l.b16 %v236
  %v1031 = vunpack.c.h.b16 %v236
  %v1032 = vunpack.c.l.b16 %v237
  %v1033 = vunpack.c.h.b16 %v237
  %v1034 = vunpack.c.l.b16 %v238
  %v1035 = vunpack.c.h.b16 %v238
  %v1036 = vunpack.c.l.b16 %v239
  %v1037 = vunpack.c.h.b16 %v239
  %v1038 = vunpack.c.l.b16 %v240
  %v1039 = vunpack.c.h.b16 %v240
  %v1040 = vunpack.c.l.b16 %v241
  %v1041 = vunpack.c.h.b16 %v241
  %v1042 = vunpack.c.l.b16 %v242
  %v1043 = vunpack.c.h.b16 %v242
  %v1044 = vunpack.c.l.b16 %v243
  %v1045 = vunpack.c.h.b16 %v243
  %v1046 = vunpack.c.l.b16 %v244
  %v1047 = vunpack.c.h.b16 %v244
  %v1048 = vunpack.c.l.b16 %v245
  %v1049 = vunpack.c.h.b16 %v245
  %v1050 = vunpack.c.l.b16 %v246
  %v1051 = vunpack.c.h.b16 %v246
  %v1052 = vunpack.c.l.b16 %v247
  %v1053 = vunpack.c.h.b16 %v247
  %v1054 = vunpack.c.l.b16 %v248
  %v1055 = vunpack.c.h.b16 %v248
  %v1056 = vunpack.c.l.b16 %v249
  %v1057 = vunpack.c.h.b16 %v249
  %v1058 = vunpack.c.l.b16 %v250
  %v1059 = vunpack.c.h.b16 %v250
  %v1060 = vunpack.c.l.b16 %v251
  %v1061 = vunpack.c.h.b16 %v251
  %v1062 = vunpack.c.l.b16 %v252
  %v1063 = vunpack.c.h.b16 %v252
  %v1064 = vunpack.c.l.b16 %v253
  %v1065 = vunpack.c.h.b16 %v253
  %v1066 = vunpack.c.l.b16 %v254
  %v1067 = vunpack.c.h.b16 %v254
  %v1068 = vunpack.c.l.b16 %v255
  %v1069 = vunpack.c.h.b16 %v255
  %v1070 = vunpack.c.l.b16 %v256
  %v1071 = vunpack.c.h.b16 %v256
  %v1072 = vunpack.c.l.b16 %v257
  %v1073 = vunpack.c.h.b16 %v257
  %v1074 = vunpack.c.l.b16 %v258
  %v1075 = vunpack.c.h.b16 %v258
  %v1076 = vunpack.c.l.b16 %v259
  %v1077 = vunpack.c.h.b16 %v259
  %v1078 = vunpack.c.l.b16 %v260
  %v1079 = vunpack.c.h.b16 %v260
  %v1080 = vunpack.c.l.b16 %v261
  %v1081 = vunpack.c.h.b16 %v261
  %v1082 = vunpack.c.l.b16 %v262
  %v1083 = vunpack.c.h.b16 %v262
  %v1084 = vunpack.c.l.b16 %v263
  %v1085 = vunpack.c.h.b16 %v263
  %v1086 = vunpack.c.l.b16 %v264
  %v1087 = vunpack.c.h.b16 %v264
  %v1088 = vunpack.c.l.b16 %v265
  %v1089 = vunpack.c.h.b16 %v265
  %v1090 = vunpack.c.l.b16 %v266
  %v1091 = vunpack.c.h.b16 %v266
  %v1092 = vunpack.c.l.b16 %v267
  %v1093 = vunpack.c.h.b16 %v267
  %v1094 = vunpack.c.l.b16 %v268
  %v1095 = vunpack.c.h.b16 %v268
  %v1096 = vunpack.c.l.b16 %v269
  %v1097 = vunpack.c.h.b16 %v269
  %v1098 = vunpack.c.l.b16 %v270
  %v1099 = vunpack.c.h.b16 %v270
  %v1100 = vunpack.c.l.b16 %v271
  %v1101 = vunpack.c.h.b16 %v271
  %v1102 = vunpack.c.l.b16 %v272
  %v1103 = vunpack.c.h.b16 %v272
  %v1104 = vunpack.c.l.b16 %v273
  %v1105 = vunpack.c.h.b16 %v273
  %v1106 = vunpack.c.l.b16 %v274
  %v1107 = vunpack.c.h.b16 %v274
  %v1108 = vunpack.c.l.b16 %v275
  %v1109 = vunpack.c.h.b16 %v275
  %v1110 = vunpack.c.l.b16 %v276
  %v1111 = vunpack.c.h.b16 %v276
  %v1112 = vunpack.c.l.b16 %v277
  %v1113 = vunpack.c.h.b16 %v277
  %v1114 = vpack.c.b16 %v604, %v602
  %v1115 = vpack.c.b16 %v605, %v603
  %v1116 = vpack.c.b16 %v608, %v606
  %v1117 = vpack.c.b16 %v609, %v607
  %v1118 = vpack.c.b16 %v612, %v610
  %v1119 = vpack.c.b16 %v613, %v611
  %v1120 = vpack.c.b16 %v616, %v614
  %v1121 = vpack.c.b16 %v617, %v615
  %v1122 = vpack.c.b16 %v620, %v618
  %v1123 = vpack.c.b16 %v621, %v619
  %v1124 = vpack.c.b16 %v624, %v622
  %v1125 = vpack.c.b16 %v625, %v623
  %v1126 = vpack.c.b16 %v628, %v626
  %v1127 = vpack.c.b16 %v629, %v627
  %v1128 = vpack.c.b16 %v632, %v630
  %v1129 = vpack.c.b16 %v633, %v631
  %v1130 = vpack.c.b16 %v636, %v634
  %v1131 = vpack.c.b16 %v637, %v635
  %v1132 = vpack.c.b16 %v640, %v638
  %v1133 = vpack.c.b16 %v641, %v639
  %v1134 = vpack.c.b16 %v644, %v642
  %v1135 = vpack.c.b16 %v645, %v643
  %v1136 = vpack.c.b16 %v648, %v646
  %v1137 = vpack.c.b16 %v649, %v647
  %v1138 = vpack.c.b16 %v652, %v650
  %v1139 = vpack.c.b16 %v653, %v651
  %v1140 = vpack.c.b16 %v656, %v654
  %v1141 = vpack.c.b16 %v657, %v655
  %v1142 = vpack.c.b16 %v660, %v658
  %v1143 = vpack.c.b16 %v661, %v659
  %v1144 = vpack.c.b16 %v664, %v662
  %v1145 = vpack.c.b16 %v665, %v663
  %v1146 = vpack.c.b16 %v668, %v666
  %v1147 = vpack.c.b16 %v669, %v667
  %v1148 = vpack.c.b16 %v672, %v670
  %v1149 = vpack.c.b16 %v673, %v671
  %v1150 = vpack.c.b16 %v676, %v674
  %v1151 = vpack.c.b16 %v677, %v675
  %v1152 = vpack.c.b16 %v680, %v678
  %v1153 = vpack.c.b16 %v681, %v679
  %v1154 = vpack.c.b16 %v684, %v682
  %v1155 = vpack.c.b16 %v685, %v683
  %v1156 = vpack.c.b16 %v688, %v686
  %v1157 = vpack.c.b16 %v689, %v687
  %v1158 = vpack.c.b16 %v692, %v690
  %v1159 = vpack.c.b16 %v693, %v691
  %v1160 = vpack.c.b16 %v696, %v694
  %v1161 = vpack.c.b16 %v697, %v695
  %v1162 = vpack.c.b16 %v700, %v698
  %v1163 = vpack.c.b16 %v701, %v699
  %v1164 = vpack.c.b16 %v704, %v702
  %v1165 = vpack.c.b16 %v705, %v703
  %v1166 = vpack.c.b16 %v708, %v706
  %v1167 = vpack.c.b16 %v709, %v707
  %v1168 = vpack.c.b16 %v712, %v710
  %v1169 = vpack.c.b16 %v713, %v711
  %v1170 = vpack.c.b16 %v716, %v714
  %v1171 = vpack.c.b16 %v717, %v715
  %v1172 = vpack.c.b16 %v720, %v718
  %v1173 = vpack.c.b16 %v721, %v719
  %v1174 = vpack.c.b16 %v724, %v722
  %v1175 = vpack.c.b16 %v725, %v723
  %v1176 = vpack.c.b16 %v728, %v726
  %v1177 = vpack.c.b16 %v729, %v727
  %v1178 = vpack.c.b16 %v732, %v730
  %v1179 = vpack.c.b16 %v733, %v731
  %v1180 = vpack.c.b16 %v736, %v734
  %v1181 = vpack.c.b16 %v737, %v735
  %v1182 = vpack.c.b16 %v740, %v738
  %v1183 = vpack.c.b16 %v741, %v739
  %v1184 = vpack.c.b16 %v744, %v742
  %v1185 = vpack.c.b16 %v745, %v743
  %v1186 = vpack.c.b16 %v748, %v746
  %v1187 = vpack.c.b16 %v749, %v747
  %v1188 = vpack.c.b16 %v752, %v750
  %v1189 = vpack.c.b16 %v753, %v751
  %v1190 = vpack.c.b16 %v756, %v754
  %v1191 = vpack.c.b16 %v757, %v755
  %v1192 = vpack.c.b16 %v760, %v758
  %v1193 = vpack.c.b16 %v761, %v759
  %v1194 = vpack.c.b16 %v764, %v762
  %v1195 = vpack.c.b16 %v765, %v763
  %v1196 = vpack.c.b16 %v768, %v766
  %v1197 = vpack.c.b16 %v769, %v767
  %v1198 = vpack.c.b16 %v772, %v770
  %v1199 = vpack.c.b16 %v773, %v771
  %v1200 = vpack.c.b16 %v776, %v774
  %v1201 = vpack.c.b16 %v777, %v775
  %v1202 = vpack.c.b16 %v780, %v778
  %v1203 = vpack.c.b16 %v781, %v779
  %v1204 = vpack.c.b16 %v784, %v782
  %v1205 = vpack.c.b16 %v785, %v783
  %v1206 = vpack.c.b16 %v788, %v786
  %v1207 = vpack.c.b16 %v789, %v787
  %v1208 = vpack.c.b16 %v792, %v790
  %v1209 = vpack.c.b16 %v793, %v791
  %v1210 = vpack.c.b16 %v796, %v794
  %v1211 = vpack.c.b16 %v797, %v795
  %v1212 = vpack.c.b16 %v800, %v798
  %v1213 = vpack.c.b16 %v801, %v799
  %v1214 = vpack.c.b16 %v804, %v802
  %v1215 = vpack.c.b16 %v805, %v803
  %v1216 = vpack.c.b16 %v808, %v806
  %v1217 = vpack.c.b16 %v809, %v807
  %v1218 = vpack.c.b16 %v812, %v810
  %v1219 = vpack.c.b16 %v813, %v811
  %v1220 = vpack.c.b16 %v816, %v814
  %v1221 = vpack.c.b16 %v817, %v815
  %v1222 = vpack.c.b16 %v820, %v818
  %v1223 = vpack.c.b16 %v821, %v819
  %v1224 = vpack.c.b16 %v824, %v822
  %v1225 = vpack.c.b16 %v825, %v823
  %v1226 = vpack.c.b16 %v828, %v826
  %v1227 = vpack.c.b16 %v829, %v827
  %v1228 = vpack.c.b16 %v832, %v830
  %v1229 = vpack.c.b16 %v833, %v831
  %v1230 = vpack.c.b16 %v836, %v834
  %v1231 = vpack.c.b16 %v837, %v835
  %v1232 = vpack.c.b16 %v840, %v838
  %v1233 = vpack.c.b16 %v841, %v839
  %v1234 = vpack.c.b16 %v844, %v842
  %v1235 = vpack.c.b16 %v845, %v843
  %v1236 = vpack.c.b16 %v848, %v846
  %v1237 = vpack.c.b16 %v849, %v847
  %v1238 = vpack.c.b16 %v852, %v850
  %v1239 = vpack.c.b16 %v853, %v851
  %v1240 = vpack.c.b16 %v856, %v854
  %v1241 = vpack.c.b16 %v857, %v855
  %v1242 = vpack.c.b16 %v860, %v858
  %v1243 = vpack.c.b16 %v861, %v859
  %v1244 = vpack.c.b16 %v864, %v862
  %v1245 = vpack.c.b16 %v865, %v863
  %v1246 = vpack.c.b16 %v868, %v866
  %v1247 = vpack.c.b16 %v869, %v867
  %v1248 = vpack.c.b16 %v872, %v870
  %v1249 = vpack.c.b16 %v873, %v871
  %v1250 = vpack.c.b16 %v876, %v874
  %v1251 = vpack.c.b16 %v877, %v875
  %v1252 = vpack.c.b16 %v880, %v878
  %v1253 = vpack.c.b16 %v881, %v879
  %v1254 = vpack.c.b16 %v884, %v882
  %v1255 = vpack.c.b16 %v885, %v883
  %v1256 = vpack.c.b16 %v888, %v886
  %v1257 = vpack.c.b16 %v889, %v887
  %v1258 = vpack.c.b16 %v892, %v890
  %v1259 = vpack.c.b16 %v893, %v891
  %v1260 = vpack.c.b16 %v896, %v894
  %v1261 = vpack.c.b16 %v897, %v895
  %v1262 = vpack.c.b16 %v900, %v898
  %v1263 = vpack.c.b16 %v901, %v899
  %v1264 = vpack.c.b16 %v904, %v902
  %v1265 = vpack.c.b16 %v905, %v903
  %v1266 = vpack.c.b16 %v908, %v906
  %v1267 = vpack.c.b16 %v909, %v907
  %v1268 = vpack.c.b16 %v912, %v910
  %v1269 = vpack.c.b16 %v913, %v911
  %v1270 = vpack.c.b16 %v916, %v914
  %v1271 = vpack.c.b16 %v917, %v915
  %v1272 = vpack.c.b16 %v920, %v918
  %v1273 = vpack.c.b16 %v921, %v919
  %v1274 = vpack.c.b16 %v924, %v922
  %v1275 = vpack.c.b16 %v925, %v923
  %v1276 = vpack.c.b16 %v928, %v926
  %v1277 = vpack.c.b16 %v929, %v927
  %v1278 = vpack.c.b16 %v932, %v930
  %v1279 = vpack.c.b16 %v933, %v931
  %v1280 = vpack.c.b16 %v936, %v934
  %v1281 = vpack.c.b16 %v937, %v935
  %v1282 = vpack.c.b16 %v940, %v938
  %v1283 = vpack.c.b16 %v941, %v939
  %v1284 = vpack.c.b16 %v944, %v942
  %v1285 = vpack.c.b16 %v945, %v943
  %v1286 = vpack.c.b16 %v948, %v946
  %v1287 = vpack.c.b16 %v949, %v947
  %v1288 = vpack.c.b16 %v952, %v950
  %v1289 = vpack.c.b16 %v953, %v951
  %v1290 = vpack.c.b16 %v956, %v954
  %v1291 = vpack.c.b16 %v957, %v955
  %v1292 = vpack.c.b16 %v960, %v958
  %v1293 = vpack.c.b16 %v961, %v959
  %v1294 = vpack.c.b16 %v964, %v962
  %v1295 = vpack.c.b16 %v965, %v963
  %v1296 = vpack.c.b16 %v968, %v966
  %v1297 = vpack.c.b16 %v969, %v967
  %v1298 = vpack.c.b16 %v972, %v970
  %v1299 = vpack.c.b16 %v973, %v971
  %v1300 = vpack.c.b16 %v976, %v974
  %v1301 = vpack.c.b16 %v977, %v975
  %v1302 = vpack.c.b16 %v980, %v978
  %v1303 = vpack.c.b16 %v981, %v979
  %v1304 = vpack.c.b16 %v984, %v982
  %v1305 = vpack.c.b16 %v985, %v983
  %v1306 = vpack.c.b16 %v988, %v986
  %v1307 = vpack.c.b16 %v989, %v987
  %v1308 = vpack.c.b16 %v992, %v990
  %v1309 = vpack.c.b16 %v993, %v991
  %v1310 = vpack.c.b16 %v996, %v994
  %v1311 = vpack.c.b16 %v997, %v995
  %v1312 = vpack.c.b16 %v1000, %v998
  %v1313 = vpack.c.b16 %v1001, %v999
  %v1314 = vpack.c.b16 %v1004, %v1002
  %v1315 = vpack.c.b16 %v1005, %v1003
  %v1316 = vpack.c.b16 %v1008, %v1006
  %v1317 = vpack.c.b16 %v1009, %v1007
  %v1318 = vpack.c.b16 %v1012, %v1010
  %v1319 = vpack.c.b16 %v1013, %v1011
  %v1320 = vpack.c.b16 %v1016, %v1014
  %v1321 = vpack.c.b16 %v1017, %v1015
  %v1322 = vpack.c.b16 %v1020, %v1018
  %v1323 = vpack.c.b16 %v1021, %v1019
  %v1324 = vpack.c.b16 %v1024, %v1022
  %v1325 = vpack.c.b16 %v1025, %v1023
  %v1326 = vpack.c.b16 %v1028, %v1026
  %v1327 = vpack.c.b16 %v1029, %v1027
  %v1328 = vpack.c.b16 %v1032, %v1030
  %v1329 = vpack.c.b16 %v1033, %v1031
  %v1330 = vpack.c.b16 %v1036, %v1034
  %v1331 = vpack.c.b16 %v1037, %v1035
  %v1332 = vpack.c.b16 %v1040, %v1038
  %v1333 = vpack.c.b16 %v1041, %v1039
  %v1334 = vpack.c.b16 %v1044, %v1042
  %v1335 = vpack.c.b16 %v1045, %v1043
  %v1336 = vpack.c.b16 %v1048, %v1046
  %v1337 = vpack.c.b16 %v1049, %v1047
  %v1338 = vpack.c.b16 %v1052, %v1050
  %v1339 = vpack.c.b16 %v1053, %v1051
  %v1340 = vpack.c.b16 %v1056, %v1054
  %v1341 = vpack.c.b16 %v1057, %v1055
  %v1342 = vpack.c.b16 %v1060, %v1058
  %v1343 = vpack.c.b16 %v1061, %v1059
  %v1344 = vpack.c.b16 %v1064, %v1062
  %v1345 = vpack.c.b16 %v1065, %v1063
  %v1346 = vpack.c.b16 %v1068, %v1066
  %v1347 = vpack.c.b16 %v1069, %v1067
  %v1348 = vpack.c.b16 %v1072, %v1070
  %v1349 = vpack.c.b16 %v1073, %v1071
  %v1350 = vpack.c.b16 %v1076, %v1074
  %v1351 = vpack.c.b16 %v1077, %v1075
  %v1352 = vpack.c.b16 %v1080, %v1078
  %v1353 = vpack.c.b16 %v1081, %v1079
  %v1354 = vpack.c.b16 %v1084, %v1082
  %v1355 = vpack.c.b16 %v1085, %v1083
  %v1356 = vpack.c.b16 %v1088, %v1086
  %v1357 = vpack.c.b16 %v1089, %v1087
  %v1358 = vpack.c.b16 %v1092, %v1090
  %v1359 = vpack.c.b16 %v1093, %v1091
  %v1360 = vpack.c.b16 %v1096, %v1094
  %v1361 = vpack.c.b16 %v1097, %v1095
  %v1362 = vpack.c.b16 %v1100, %v1098
  %v1363 = vpack.c.b16 %v1101, %v1099
  %v1364 = vpack.c.b16 %v1104, %v1102
  %v1365 = vpack.c.b16 %v1105, %v1103
  %v1366 = vpack.c.b16 %v1108, %v1106
  %v1367 = vpack.c.b16 %v1109, %v1107
  %v1368 = vpack.c.b16 %v1112, %v1110
  %v1369 = vpack.c.b16 %v1113, %v1111
  %1626 = vmatprep.subr.bf16.mxu0 %v1115
  %1627 = vmatpush1.bf16.msra.mxu0 %v1114
  %1628 = vmatprep.subr.bf16.mxu0 %v1117
  %1629 = vmatpush1.bf16.msra.mxu0 %v1116
  %1630 = vmatprep.subr.bf16.mxu0 %v1119
  %1631 = vmatpush1.bf16.msra.mxu0 %v1118
  %1632 = vmatprep.subr.bf16.mxu0 %v1121
  %1633 = vmatpush1.bf16.msra.mxu0 %v1120
  %1634 = vmatprep.subr.bf16.mxu0 %v1123
  %1635 = vmatpush1.bf16.msra.mxu0 %v1122
  %1636 = vmatprep.subr.bf16.mxu0 %v1125
  %1637 = vmatpush1.bf16.msra.mxu0 %v1124
  %1638 = vmatprep.subr.bf16.mxu0 %v1127
  %1639 = vmatpush1.bf16.msra.mxu0 %v1126
  %1640 = vmatprep.subr.bf16.mxu0 %v1129
  %1641 = vmatpush1.bf16.msra.mxu0 %v1128
  %1642 = vmatprep.subr.bf16.mxu0 %v1131
  %1643 = vmatpush1.bf16.msra.mxu0 %v1130
  %1644 = vmatprep.subr.bf16.mxu0 %v1133
  %1645 = vmatpush1.bf16.msra.mxu0 %v1132
  %1646 = vmatprep.subr.bf16.mxu0 %v1135
  %1647 = vmatpush1.bf16.msra.mxu0 %v1134
  %1648 = vmatprep.subr.bf16.mxu0 %v1137
  %1649 = vmatpush1.bf16.msra.mxu0 %v1136
  %1650 = vmatprep.subr.bf16.mxu0 %v1139
  %1651 = vmatpush1.bf16.msra.mxu0 %v1138
  %1652 = vmatprep.subr.bf16.mxu0 %v1141
  %1653 = vmatpush1.bf16.msra.mxu0 %v1140
  %1654 = vmatprep.subr.bf16.mxu0 %v1143
  %1655 = vmatpush1.bf16.msra.mxu0 %v1142
  %1656 = vmatprep.subr.bf16.mxu0 %v1145
  %1657 = vmatpush1.bf16.msra.mxu0 %v1144
  %1658 = vmatprep.mubr.bf16.mxu0 %v315
  %1659 = vmatmul.mubr.bf16.gmra.mrb[0].mxu0 %v314
  %v1660 = vpop.f32.mrb[0].mxu0
  %v1661 = vadd.f32 %v283, %v1660
  %v1662 = vpop.f32.mrb[0].mxu0
  %v1663 = vadd.f32 %v287, %v1662
  %v1664 = vpop.f32.mrb[0].mxu0
  %v1665 = vpop.f32.mrb[0].mxu0
  %1666 = vdwg.mxu0
  %1667 = vmatprep.subr.bf16.mxu0 %v1147
  %1668 = vmatpush1.bf16.msra.mxu0 %v1146
  %1669 = vmatprep.subr.bf16.mxu0 %v1149
  %1670 = vmatpush1.bf16.msra.mxu0 %v1148
  %1671 = vmatprep.subr.bf16.mxu0 %v1151
  %1672 = vmatpush1.bf16.msra.mxu0 %v1150
  %1673 = vmatprep.subr.bf16.mxu0 %v1153
  %1674 = vmatpush1.bf16.msra.mxu0 %v1152
  %1675 = vmatprep.subr.bf16.mxu0 %v1155
  %1676 = vmatpush1.bf16.msra.mxu0 %v1154
  %1677 = vmatprep.subr.bf16.mxu0 %v1157
  %1678 = vmatpush1.bf16.msra.mxu0 %v1156
  %1679 = vmatprep.subr.bf16.mxu0 %v1159
  %1680 = vmatpush1.bf16.msra.mxu0 %v1158
  %1681 = vmatprep.subr.bf16.mxu0 %v1161
  %1682 = vmatpush1.bf16.msra.mxu0 %v1160
  %1683 = vmatprep.subr.bf16.mxu0 %v1163
  %1684 = vmatpush1.bf16.msra.mxu0 %v1162
  %1685 = vmatprep.subr.bf16.mxu0 %v1165
  %1686 = vmatpush1.bf16.msra.mxu0 %v1164
  %1687 = vmatprep.subr.bf16.mxu0 %v1167
  %1688 = vmatpush1.bf16.msra.mxu0 %v1166
  %1689 = vmatprep.subr.bf16.mxu0 %v1169
  %1690 = vmatpush1.bf16.msra.mxu0 %v1168
  %1691 = vmatprep.subr.bf16.mxu0 %v1171
  %1692 = vmatpush1.bf16.msra.mxu0 %v1170
  %1693 = vmatprep.subr.bf16.mxu0 %v1173
  %1694 = vmatpush1.bf16.msra.mxu0 %v1172
  %1695 = vmatprep.subr.bf16.mxu0 %v1175
  %1696 = vmatpush1.bf16.msra.mxu0 %v1174
  %1697 = vmatprep.subr.bf16.mxu0 %v1177
  %1698 = vmatpush1.bf16.msra.mxu0 %v1176
  %1699 = vmatprep.mubr.bf16.mxu0 %v317
  %1700 = vmatmul.mubr.bf16.gmra.mrb[0].mxu0 %v316
  %v1701 = vpop.f32.mrb[0].mxu0
  %v1702 = vadd.f32 %v1661, %v1701
  %v1703 = vpop.f32.mrb[0].mxu0
  %v1704 = vadd.f32 %v1663, %v1703
  %v1705 = vpop.f32.mrb[0].mxu0
  %v1706 = vpop.f32.mrb[0].mxu0
  %1707 = vdwg.mxu0
  %1708 = vmatprep.subr.bf16.mxu0 %v1179
  %1709 = vmatpush1.bf16.msra.mxu0 %v1178
  %1710 = vmatprep.subr.bf16.mxu0 %v1181
  %1711 = vmatpush1.bf16.msra.mxu0 %v1180
  %1712 = vmatprep.subr.bf16.mxu0 %v1183
  %1713 = vmatpush1.bf16.msra.mxu0 %v1182
  %1714 = vmatprep.subr.bf16.mxu0 %v1185
  %1715 = vmatpush1.bf16.msra.mxu0 %v1184
  %1716 = vmatprep.subr.bf16.mxu0 %v1187
  %1717 = vmatpush1.bf16.msra.mxu0 %v1186
  %1718 = vmatprep.subr.bf16.mxu0 %v1189
  %1719 = vmatpush1.bf16.msra.mxu0 %v1188
  %1720 = vmatprep.subr.bf16.mxu0 %v1191
  %1721 = vmatpush1.bf16.msra.mxu0 %v1190
  %1722 = vmatprep.subr.bf16.mxu0 %v1193
  %1723 = vmatpush1.bf16.msra.mxu0 %v1192
  %1724 = vmatprep.subr.bf16.mxu0 %v1195
  %1725 = vmatpush1.bf16.msra.mxu0 %v1194
  %1726 = vmatprep.subr.bf16.mxu0 %v1197
  %1727 = vmatpush1.bf16.msra.mxu0 %v1196
  %1728 = vmatprep.subr.bf16.mxu0 %v1199
  %1729 = vmatpush1.bf16.msra.mxu0 %v1198
  %1730 = vmatprep.subr.bf16.mxu0 %v1201
  %1731 = vmatpush1.bf16.msra.mxu0 %v1200
  %1732 = vmatprep.subr.bf16.mxu0 %v1203
  %1733 = vmatpush1.bf16.msra.mxu0 %v1202
  %1734 = vmatprep.subr.bf16.mxu0 %v1205
  %1735 = vmatpush1.bf16.msra.mxu0 %v1204
  %1736 = vmatprep.subr.bf16.mxu0 %v1207
  %1737 = vmatpush1.bf16.msra.mxu0 %v1206
  %1738 = vmatprep.subr.bf16.mxu0 %v1209
  %1739 = vmatpush1.bf16.msra.mxu0 %v1208
  %1740 = vmatprep.mubr.bf16.mxu0 %v319
  %1741 = vmatmul.mubr.bf16.gmra.mrb[0].mxu0 %v318
  %v1742 = vpop.f32.mrb[0].mxu0
  %v1743 = vadd.f32 %v1702, %v1742
  %v1744 = vpop.f32.mrb[0].mxu0
  %v1745 = vadd.f32 %v1704, %v1744
  %v1746 = vpop.f32.mrb[0].mxu0
  %v1747 = vpop.f32.mrb[0].mxu0
  %1748 = vdwg.mxu0
  %1749 = vmatprep.subr.bf16.mxu0 %v1211
  %1750 = vmatpush1.bf16.msra.mxu0 %v1210
  %1751 = vmatprep.subr.bf16.mxu0 %v1213
  %1752 = vmatpush1.bf16.msra.mxu0 %v1212
  %1753 = vmatprep.subr.bf16.mxu0 %v1215
  %1754 = vmatpush1.bf16.msra.mxu0 %v1214
  %1755 = vmatprep.subr.bf16.mxu0 %v1217
  %1756 = vmatpush1.bf16.msra.mxu0 %v1216
  %1757 = vmatprep.subr.bf16.mxu0 %v1219
  %1758 = vmatpush1.bf16.msra.mxu0 %v1218
  %1759 = vmatprep.subr.bf16.mxu0 %v1221
  %1760 = vmatpush1.bf16.msra.mxu0 %v1220
  %1761 = vmatprep.subr.bf16.mxu0 %v1223
  %1762 = vmatpush1.bf16.msra.mxu0 %v1222
  %1763 = vmatprep.subr.bf16.mxu0 %v1225
  %1764 = vmatpush1.bf16.msra.mxu0 %v1224
  %1765 = vmatprep.subr.bf16.mxu0 %v1227
  %1766 = vmatpush1.bf16.msra.mxu0 %v1226
  %1767 = vmatprep.subr.bf16.mxu0 %v1229
  %1768 = vmatpush1.bf16.msra.mxu0 %v1228
  %1769 = vmatprep.subr.bf16.mxu0 %v1231
  %1770 = vmatpush1.bf16.msra.mxu0 %v1230
  %1771 = vmatprep.subr.bf16.mxu0 %v1233
  %1772 = vmatpush1.bf16.msra.mxu0 %v1232
  %1773 = vmatprep.subr.bf16.mxu0 %v1235
  %1774 = vmatpush1.bf16.msra.mxu0 %v1234
  %1775 = vmatprep.subr.bf16.mxu0 %v1237
  %1776 = vmatpush1.bf16.msra.mxu0 %v1236
  %1777 = vmatprep.subr.bf16.mxu0 %v1239
  %1778 = vmatpush1.bf16.msra.mxu0 %v1238
  %1779 = vmatprep.subr.bf16.mxu0 %v1241
  %1780 = vmatpush1.bf16.msra.mxu0 %v1240
  %1781 = vmatprep.mubr.bf16.mxu0 %v321
  %1782 = vmatmul.mubr.bf16.gmra.mrb[0].mxu0 %v320
  %v1783 = vpop.f32.mrb[0].mxu0
  %v1784 = vadd.f32 %v1743, %v1783
  %v1785 = vpop.f32.mrb[0].mxu0
  %v1786 = vadd.f32 %v1745, %v1785
  %v1787 = vpop.f32.mrb[0].mxu0
  %v1788 = vpop.f32.mrb[0].mxu0
  %1789 = vdwg.mxu0
  %1790 = vmatprep.subr.bf16.mxu0 %v1243
  %1791 = vmatpush1.bf16.msra.mxu0 %v1242
  %1792 = vmatprep.subr.bf16.mxu0 %v1245
  %1793 = vmatpush1.bf16.msra.mxu0 %v1244
  %1794 = vmatprep.subr.bf16.mxu0 %v1247
  %1795 = vmatpush1.bf16.msra.mxu0 %v1246
  %1796 = vmatprep.subr.bf16.mxu0 %v1249
  %1797 = vmatpush1.bf16.msra.mxu0 %v1248
  %1798 = vmatprep.subr.bf16.mxu0 %v1251
  %1799 = vmatpush1.bf16.msra.mxu0 %v1250
  %1800 = vmatprep.subr.bf16.mxu0 %v1253
  %1801 = vmatpush1.bf16.msra.mxu0 %v1252
  %1802 = vmatprep.subr.bf16.mxu0 %v1255
  %1803 = vmatpush1.bf16.msra.mxu0 %v1254
  %1804 = vmatprep.subr.bf16.mxu0 %v1257
  %1805 = vmatpush1.bf16.msra.mxu0 %v1256
  %1806 = vmatprep.subr.bf16.mxu0 %v1259
  %1807 = vmatpush1.bf16.msra.mxu0 %v1258
  %1808 = vmatprep.subr.bf16.mxu0 %v1261
  %1809 = vmatpush1.bf16.msra.mxu0 %v1260
  %1810 = vmatprep.subr.bf16.mxu0 %v1263
  %1811 = vmatpush1.bf16.msra.mxu0 %v1262
  %1812 = vmatprep.subr.bf16.mxu0 %v1265
  %1813 = vmatpush1.bf16.msra.mxu0 %v1264
  %1814 = vmatprep.subr.bf16.mxu0 %v1267
  %1815 = vmatpush1.bf16.msra.mxu0 %v1266
  %1816 = vmatprep.subr.bf16.mxu0 %v1269
  %1817 = vmatpush1.bf16.msra.mxu0 %v1268
  %1818 = vmatprep.subr.bf16.mxu0 %v1271
  %1819 = vmatpush1.bf16.msra.mxu0 %v1270
  %1820 = vmatprep.subr.bf16.mxu0 %v1273
  %1821 = vmatpush1.bf16.msra.mxu0 %v1272
  %1822 = vmatprep.mubr.bf16.mxu0 %v323
  %1823 = vmatmul.mubr.bf16.gmra.mrb[0].mxu0 %v322
  %v1824 = vpop.f32.mrb[0].mxu0
  %v1825 = vadd.f32 %v1784, %v1824
  %v1826 = vpop.f32.mrb[0].mxu0
  %v1827 = vadd.f32 %v1786, %v1826
  %v1828 = vpop.f32.mrb[0].mxu0
  %v1829 = vpop.f32.mrb[0].mxu0
  %1830 = vdwg.mxu0
  %1831 = vmatprep.subr.bf16.mxu0 %v1275
  %1832 = vmatpush1.bf16.msra.mxu0 %v1274
  %1833 = vmatprep.subr.bf16.mxu0 %v1277
  %1834 = vmatpush1.bf16.msra.mxu0 %v1276
  %1835 = vmatprep.subr.bf16.mxu0 %v1279
  %1836 = vmatpush1.bf16.msra.mxu0 %v1278
  %1837 = vmatprep.subr.bf16.mxu0 %v1281
  %1838 = vmatpush1.bf16.msra.mxu0 %v1280
  %1839 = vmatprep.subr.bf16.mxu0 %v1283
  %1840 = vmatpush1.bf16.msra.mxu0 %v1282
  %1841 = vmatprep.subr.bf16.mxu0 %v1285
  %1842 = vmatpush1.bf16.msra.mxu0 %v1284
  %1843 = vmatprep.subr.bf16.mxu0 %v1287
  %1844 = vmatpush1.bf16.msra.mxu0 %v1286
  %1845 = vmatprep.subr.bf16.mxu0 %v1289
  %1846 = vmatpush1.bf16.msra.mxu0 %v1288
  %1847 = vmatprep.subr.bf16.mxu0 %v1291
  %1848 = vmatpush1.bf16.msra.mxu0 %v1290
  %1849 = vmatprep.subr.bf16.mxu0 %v1293
  %1850 = vmatpush1.bf16.msra.mxu0 %v1292
  %1851 = vmatprep.subr.bf16.mxu0 %v1295
  %1852 = vmatpush1.bf16.msra.mxu0 %v1294
  %1853 = vmatprep.subr.bf16.mxu0 %v1297
  %1854 = vmatpush1.bf16.msra.mxu0 %v1296
  %1855 = vmatprep.subr.bf16.mxu0 %v1299
  %1856 = vmatpush1.bf16.msra.mxu0 %v1298
  %1857 = vmatprep.subr.bf16.mxu0 %v1301
  %1858 = vmatpush1.bf16.msra.mxu0 %v1300
  %1859 = vmatprep.subr.bf16.mxu0 %v1303
  %1860 = vmatpush1.bf16.msra.mxu0 %v1302
  %1861 = vmatprep.subr.bf16.mxu0 %v1305
  %1862 = vmatpush1.bf16.msra.mxu0 %v1304
  %1863 = vmatprep.mubr.bf16.mxu0 %v325
  %1864 = vmatmul.mubr.bf16.gmra.mrb[0].mxu0 %v324
  %v1865 = vpop.f32.mrb[0].mxu0
  %v1866 = vadd.f32 %v1825, %v1865
  %v1867 = vpop.f32.mrb[0].mxu0
  %v1868 = vadd.f32 %v1827, %v1867
  %v1869 = vpop.f32.mrb[0].mxu0
  %v1870 = vpop.f32.mrb[0].mxu0
  %1871 = vdwg.mxu0
  %1872 = vmatprep.subr.bf16.mxu0 %v1307
  %1873 = vmatpush1.bf16.msra.mxu0 %v1306
  %1874 = vmatprep.subr.bf16.mxu0 %v1309
  %1875 = vmatpush1.bf16.msra.mxu0 %v1308
  %1876 = vmatprep.subr.bf16.mxu0 %v1311
  %1877 = vmatpush1.bf16.msra.mxu0 %v1310
  %1878 = vmatprep.subr.bf16.mxu0 %v1313
  %1879 = vmatpush1.bf16.msra.mxu0 %v1312
  %1880 = vmatprep.subr.bf16.mxu0 %v1315
  %1881 = vmatpush1.bf16.msra.mxu0 %v1314
  %1882 = vmatprep.subr.bf16.mxu0 %v1317
  %1883 = vmatpush1.bf16.msra.mxu0 %v1316
  %1884 = vmatprep.subr.bf16.mxu0 %v1319
  %1885 = vmatpush1.bf16.msra.mxu0 %v1318
  %1886 = vmatprep.subr.bf16.mxu0 %v1321
  %1887 = vmatpush1.bf16.msra.mxu0 %v1320
  %1888 = vmatprep.subr.bf16.mxu0 %v1323
  %1889 = vmatpush1.bf16.msra.mxu0 %v1322
  %1890 = vmatprep.subr.bf16.mxu0 %v1325
  %1891 = vmatpush1.bf16.msra.mxu0 %v1324
  %1892 = vmatprep.subr.bf16.mxu0 %v1327
  %1893 = vmatpush1.bf16.msra.mxu0 %v1326
  %1894 = vmatprep.subr.bf16.mxu0 %v1329
  %1895 = vmatpush1.bf16.msra.mxu0 %v1328
  %1896 = vmatprep.subr.bf16.mxu0 %v1331
  %1897 = vmatpush1.bf16.msra.mxu0 %v1330
  %1898 = vmatprep.subr.bf16.mxu0 %v1333
  %1899 = vmatpush1.bf16.msra.mxu0 %v1332
  %1900 = vmatprep.subr.bf16.mxu0 %v1335
  %1901 = vmatpush1.bf16.msra.mxu0 %v1334
  %1902 = vmatprep.subr.bf16.mxu0 %v1337
  %1903 = vmatpush1.bf16.msra.mxu0 %v1336
  %1904 = vmatprep.mubr.bf16.mxu0 %v327
  %1905 = vmatmul.mubr.bf16.gmra.mrb[0].mxu0 %v326
  %v1906 = vpop.f32.mrb[0].mxu0
  %v1907 = vadd.f32 %v1866, %v1906
  %v1908 = vpop.f32.mrb[0].mxu0
  %v1909 = vadd.f32 %v1868, %v1908
  %v1910 = vpop.f32.mrb[0].mxu0
  %v1911 = vpop.f32.mrb[0].mxu0
  %1912 = vdwg.mxu0
  %1913 = vmatprep.subr.bf16.mxu0 %v1339
  %1914 = vmatpush1.bf16.msra.mxu0 %v1338
  %1915 = vmatprep.subr.bf16.mxu0 %v1341
  %1916 = vmatpush1.bf16.msra.mxu0 %v1340
  %1917 = vmatprep.subr.bf16.mxu0 %v1343
  %1918 = vmatpush1.bf16.msra.mxu0 %v1342
  %1919 = vmatprep.subr.bf16.mxu0 %v1345
  %1920 = vmatpush1.bf16.msra.mxu0 %v1344
  %1921 = vmatprep.subr.bf16.mxu0 %v1347
  %1922 = vmatpush1.bf16.msra.mxu0 %v1346
  %1923 = vmatprep.subr.bf16.mxu0 %v1349
  %1924 = vmatpush1.bf16.msra.mxu0 %v1348
  %1925 = vmatprep.subr.bf16.mxu0 %v1351
  %1926 = vmatpush1.bf16.msra.mxu0 %v1350
  %1927 = vmatprep.subr.bf16.mxu0 %v1353
  %1928 = vmatpush1.bf16.msra.mxu0 %v1352
  %1929 = vmatprep.subr.bf16.mxu0 %v1355
  %1930 = vmatpush1.bf16.msra.mxu0 %v1354
  %1931 = vmatprep.subr.bf16.mxu0 %v1357
  %1932 = vmatpush1.bf16.msra.mxu0 %v1356
  %1933 = vmatprep.subr.bf16.mxu0 %v1359
  %1934 = vmatpush1.bf16.msra.mxu0 %v1358
  %1935 = vmatprep.subr.bf16.mxu0 %v1361
  %1936 = vmatpush1.bf16.msra.mxu0 %v1360
  %1937 = vmatprep.subr.bf16.mxu0 %v1363
  %1938 = vmatpush1.bf16.msra.mxu0 %v1362
  %1939 = vmatprep.subr.bf16.mxu0 %v1365
  %1940 = vmatpush1.bf16.msra.mxu0 %v1364
  %1941 = vmatprep.subr.bf16.mxu0 %v1367
  %1942 = vmatpush1.bf16.msra.mxu0 %v1366
  %1943 = vmatprep.subr.bf16.mxu0 %v1369
  %1944 = vmatpush1.bf16.msra.mxu0 %v1368
  %1945 = vmatprep.mubr.bf16.mxu0 %v329
  %1946 = vmatmul.mubr.bf16.gmra.mrb[0].mxu0 %v328
  %v1947 = vpop.f32.mrb[0].mxu0
  %v1948 = vadd.f32 %v1907, %v1947
  %v1949 = vpop.f32.mrb[0].mxu0
  %v1950 = vadd.f32 %v1909, %v1949
  %v1951 = vpop.f32.mrb[0].mxu0
  %v1952 = vpop.f32.mrb[0].mxu0
  %1953 = vdwg.mxu0
  %v1954 = vmax.f32 %v1948, 0.0
  %v1955 = vmax.f32 %v1950, 0.0
  %v1956 = vpack.c.bf16 %v1954, %v1954
  %v1957 = vpack.c.bf16 %v1955, %v1955
  %v1960 = vunpack.c.l.b16 %v1956
  %v1961 = vunpack.c.l.b16 %v1957
  %v1962 = vpack.c.b16 %v1961, %v1960
  %1964 = vst [vmem:[%s3] sm:$0xff] %v1962
  // Predicated region
  $region14: #{encoder_forward.8} parent=0 // pred_check
    _
  $region15: #{encoder_forward.8} parent=0 // pred_check_branch
    %1966 = sbr.rel (0) target = $region17
  $region16: #{encoder_forward.8} parent=0 // pred_region
    _
  $region17: #{encoder_forward.8} parent=0 // pred_fallthru
    _
  // Predicated region
  $region18: #{encoder_forward.8} parent=0 // pred_check
    _
  $region19: #{encoder_forward.8} parent=0 // pred_check_branch
    %1968 = sbr.rel (0) target = $region21
  $region20: #{encoder_forward.8} parent=0 // pred_region
    _
  $region21: #{encoder_forward.8} parent=0 // pred_fallthru
    _

// kernel: encoder_forward.9
$region0: #{encoder_forward.9}
  #allocation0 [shape = 'u32[]', space=smem, size = 0x4, offset = 0x4, fixed_abs, tag = 'smem constant byte address 0x4 - core index']
  #allocation1 [shape = 'u32[144,128]{1,0:T(1,128)}', space=vmem, size = 0x12000, scoped, tag = 'internal scratch']
  %s0 = inlined_call_operand.vmem [shape: bf16[8,1024], index: 0, kind: input, shape index: {}]
  %s1 = inlined_call_operand.vmem [shape: bf16[1024,64], index: 1, kind: input, shape index: {}]
  %s2 = inlined_call_operand.vmem [shape: f32[1,64], index: 2, kind: input, shape index: {}]
  %s3 = inlined_call_operand.vmem [shape: f32[8,32], index: 3, kind: input, shape index: {}]
  %s4 = inlined_call_operand.vmem [shape: f32[8,32], index: 4, kind: output, shape index: {0}]
  %s5 = inlined_call_operand.vmem [shape: f32[8,32], index: 5, kind: output, shape index: {1}]
  %s6 = inlined_call_operand.vmem [shape: f32[8,32], index: 6, kind: output, shape index: {2}]
  %7 = xla_tuple %s4, %s5, %s6
  %s8 = sld [smem:[#allocation0]]
  $region42: #{encoder_forward.9} parent=0
    _
  %s10 = ssub.s32 1, %s8
  %s11 = scalar_select 0, %s10, %s8
  // Predicated region
  $region2: #{encoder_forward.9} parent=0 // pred_check
    _
  $region3: #{encoder_forward.9} parent=0 // pred_check_branch
    %13 = sbr.rel (0) target = $region5
  $region4: #{encoder_forward.9} parent=0 // pred_region
    _
  $region5: #{encoder_forward.9} parent=0 // pred_fallthru
    _
  // Predicated region
  $region6: #{encoder_forward.9} parent=0 // pred_check
    _
  $region7: #{encoder_forward.9} parent=0 // pred_check_branch
    %15 = sbr.rel (0) target = $region9
  $region8: #{encoder_forward.9} parent=0 // pred_region
    _
  $region9: #{encoder_forward.9} parent=0 // pred_fallthru
    _
  // Predicated region
  $region10: #{encoder_forward.9} parent=0 // pred_check
    _
  $region11: #{encoder_forward.9} parent=0 // pred_check_branch
    %17 = sbr.rel (0) target = $region13
  $region12: #{encoder_forward.9} parent=0 // pred_region
    _
  $region13: #{encoder_forward.9} parent=0 // pred_fallthru
    _
  // Predicated region
  $region14: #{encoder_forward.9} parent=0 // pred_check
    _
  $region15: #{encoder_forward.9} parent=0 // pred_check_branch
    %19 = sbr.rel (0) target = $region17
  $region16: #{encoder_forward.9} parent=0 // pred_region
    _
  $region17: #{encoder_forward.9} parent=0 // pred_fallthru
    _
  %v21 = vld [vmem:[%s0] sm:$0xff]
  %v22 = vld [vmem:[%s0 + $0x8] sm:$0xff]
  %v23 = vld [vmem:[%s0 + $0x10] sm:$0xff]
  %v24 = vld [vmem:[%s0 + $0x18] sm:$0xff]
  %v25 = vld [vmem:[%s1] sm:$0xf]
  %v26 = vld [vmem:[%s1 + $0x4] sm:$0xf]
  %v27 = vld [vmem:[%s1 + $0x8] sm:$0xf]
  %v28 = vld [vmem:[%s1 + $0xc] sm:$0xf]
  %v29 = vld [vmem:[%s1 + $0x10] sm:$0xf]
  %v30 = vld [vmem:[%s1 + $0x14] sm:$0xf]
  %v31 = vld [vmem:[%s1 + $0x18] sm:$0xf]
  %v32 = vld [vmem:[%s1 + $0x1c] sm:$0xf]
  %v33 = vld [vmem:[%s1 + $0x20] sm:$0xf]
  %v34 = vld [vmem:[%s1 + $0x24] sm:$0xf]
  %v35 = vld [vmem:[%s1 + $0x28] sm:$0xf]
  %v36 = vld [vmem:[%s1 + $0x2c] sm:$0xf]
  %v37 = vld [vmem:[%s1 + $0x30] sm:$0xf]
  %v38 = vld [vmem:[%s1 + $0x34] sm:$0xf]
  %v39 = vld [vmem:[%s1 + $0x38] sm:$0xf]
  %v40 = vld [vmem:[%s1 + $0x3c] sm:$0xf]
  %v41 = vld [vmem:[%s1 + $0x40] sm:$0xf]
  %v42 = vld [vmem:[%s1 + $0x44] sm:$0xf]
  %v43 = vld [vmem:[%s1 + $0x48] sm:$0xf]
  %v44 = vld [vmem:[%s1 + $0x4c] sm:$0xf]
  %v45 = vld [vmem:[%s1 + $0x50] sm:$0xf]
  %v46 = vld [vmem:[%s1 + $0x54] sm:$0xf]
  %v47 = vld [vmem:[%s1 + $0x58] sm:$0xf]
  %v48 = vld [vmem:[%s1 + $0x5c] sm:$0xf]
  %v49 = vld [vmem:[%s1 + $0x60] sm:$0xf]
  %v50 = vld [vmem:[%s1 + $0x64] sm:$0xf]
  %v51 = vld [vmem:[%s1 + $0x68] sm:$0xf]
  %v52 = vld [vmem:[%s1 + $0x6c] sm:$0xf]
  %v53 = vld [vmem:[%s1 + $0x70] sm:$0xf]
  %v54 = vld [vmem:[%s1 + $0x74] sm:$0xf]
  %v55 = vld [vmem:[%s1 + $0x78] sm:$0xf]
  %v56 = vld [vmem:[%s1 + $0x7c] sm:$0xf]
  %v57 = vld [vmem:[%s1 + $0x80] sm:$0xf]
  %v58 = vld [vmem:[%s1 + $0x84] sm:$0xf]
  %v59 = vld [vmem:[%s1 + $0x88] sm:$0xf]
  %v60 = vld [vmem:[%s1 + $0x8c] sm:$0xf]
  %v61 = vld [vmem:[%s1 + $0x90] sm:$0xf]
  %v62 = vld [vmem:[%s1 + $0x94] sm:$0xf]
  %v63 = vld [vmem:[%s1 + $0x98] sm:$0xf]
  %v64 = vld [vmem:[%s1 + $0x9c] sm:$0xf]
  %v65 = vld [vmem:[%s1 + $0xa0] sm:$0xf]
  %v66 = vld [vmem:[%s1 + $0xa4] sm:$0xf]
  %v67 = vld [vmem:[%s1 + $0xa8] sm:$0xf]
  %v68 = vld [vmem:[%s1 + $0xac] sm:$0xf]
  %v69 = vld [vmem:[%s1 + $0xb0] sm:$0xf]
  %v70 = vld [vmem:[%s1 + $0xb4] sm:$0xf]
  %v71 = vld [vmem:[%s1 + $0xb8] sm:$0xf]
  %v72 = vld [vmem:[%s1 + $0xbc] sm:$0xf]
  %v73 = vld [vmem:[%s1 + $0xc0] sm:$0xf]
  %v74 = vld [vmem:[%s1 + $0xc4] sm:$0xf]
  %v75 = vld [vmem:[%s1 + $0xc8] sm:$0xf]
  %v76 = vld [vmem:[%s1 + $0xcc] sm:$0xf]
  %v77 = vld [vmem:[%s1 + $0xd0] sm:$0xf]
  %v78 = vld [vmem:[%s1 + $0xd4] sm:$0xf]
  %v79 = vld [vmem:[%s1 + $0xd8] sm:$0xf]
  %v80 = vld [vmem:[%s1 + $0xdc] sm:$0xf]
  %v81 = vld [vmem:[%s1 + $0xe0] sm:$0xf]
  %v82 = vld [vmem:[%s1 + $0xe4] sm:$0xf]
  %v83 = vld [vmem:[%s1 + $0xe8] sm:$0xf]
  %v84 = vld [vmem:[%s1 + $0xec] sm:$0xf]
  %v85 = vld [vmem:[%s1 + $0xf0] sm:$0xf]
  %v86 = vld [vmem:[%s1 + $0xf4] sm:$0xf]
  %v87 = vld [vmem:[%s1 + $0xf8] sm:$0xf]
  %v88 = vld [vmem:[%s1 + $0xfc] sm:$0xf]
  %v89 = vld [vmem:[%s1 + $0x100] sm:$0xf]
  %v90 = vld [vmem:[%s1 + $0x104] sm:$0xf]
  %v91 = vld [vmem:[%s1 + $0x108] sm:$0xf]
  %v92 = vld [vmem:[%s1 + $0x10c] sm:$0xf]
  %v93 = vld [vmem:[%s1 + $0x110] sm:$0xf]
  %v94 = vld [vmem:[%s1 + $0x114] sm:$0xf]
  %v95 = vld [vmem:[%s1 + $0x118] sm:$0xf]
  %v96 = vld [vmem:[%s1 + $0x11c] sm:$0xf]
  %v97 = vld [vmem:[%s1 + $0x120] sm:$0xf]
  %v98 = vld [vmem:[%s1 + $0x124] sm:$0xf]
  %v99 = vld [vmem:[%s1 + $0x128] sm:$0xf]
  %v100 = vld [vmem:[%s1 + $0x12c] sm:$0xf]
  %v101 = vld [vmem:[%s1 + $0x130] sm:$0xf]
  %v102 = vld [vmem:[%s1 + $0x134] sm:$0xf]
  %v103 = vld [vmem:[%s1 + $0x138] sm:$0xf]
  %v104 = vld [vmem:[%s1 + $0x13c] sm:$0xf]
  %v105 = vld [vmem:[%s1 + $0x140] sm:$0xf]
  %v106 = vld [vmem:[%s1 + $0x144] sm:$0xf]
  %v107 = vld [vmem:[%s1 + $0x148] sm:$0xf]
  %v108 = vld [vmem:[%s1 + $0x14c] sm:$0xf]
  %v109 = vld [vmem:[%s1 + $0x150] sm:$0xf]
  %v110 = vld [vmem:[%s1 + $0x154] sm:$0xf]
  %v111 = vld [vmem:[%s1 + $0x158] sm:$0xf]
  %v112 = vld [vmem:[%s1 + $0x15c] sm:$0xf]
  %v113 = vld [vmem:[%s1 + $0x160] sm:$0xf]
  %v114 = vld [vmem:[%s1 + $0x164] sm:$0xf]
  %v115 = vld [vmem:[%s1 + $0x168] sm:$0xf]
  %v116 = vld [vmem:[%s1 + $0x16c] sm:$0xf]
  %v117 = vld [vmem:[%s1 + $0x170] sm:$0xf]
  %v118 = vld [vmem:[%s1 + $0x174] sm:$0xf]
  %v119 = vld [vmem:[%s1 + $0x178] sm:$0xf]
  %v120 = vld [vmem:[%s1 + $0x17c] sm:$0xf]
  %v121 = vld [vmem:[%s1 + $0x180] sm:$0xf]
  %v122 = vld [vmem:[%s1 + $0x184] sm:$0xf]
  %v123 = vld [vmem:[%s1 + $0x188] sm:$0xf]
  %v124 = vld [vmem:[%s1 + $0x18c] sm:$0xf]
  %v125 = vld [vmem:[%s1 + $0x190] sm:$0xf]
  %v126 = vld [vmem:[%s1 + $0x194] sm:$0xf]
  %v127 = vld [vmem:[%s1 + $0x198] sm:$0xf]
  %v128 = vld [vmem:[%s1 + $0x19c] sm:$0xf]
  %v129 = vld [vmem:[%s1 + $0x1a0] sm:$0xf]
  %v130 = vld [vmem:[%s1 + $0x1a4] sm:$0xf]
  %v131 = vld [vmem:[%s1 + $0x1a8] sm:$0xf]
  %v132 = vld [vmem:[%s1 + $0x1ac] sm:$0xf]
  %v133 = vld [vmem:[%s1 + $0x1b0] sm:$0xf]
  %v134 = vld [vmem:[%s1 + $0x1b4] sm:$0xf]
  %v135 = vld [vmem:[%s1 + $0x1b8] sm:$0xf]
  %v136 = vld [vmem:[%s1 + $0x1bc] sm:$0xf]
  %v137 = vld [vmem:[%s1 + $0x1c0] sm:$0xf]
  %v138 = vld [vmem:[%s1 + $0x1c4] sm:$0xf]
  %v139 = vld [vmem:[%s1 + $0x1c8] sm:$0xf]
  %v140 = vld [vmem:[%s1 + $0x1cc] sm:$0xf]
  %v141 = vld [vmem:[%s1 + $0x1d0] sm:$0xf]
  %v142 = vld [vmem:[%s1 + $0x1d4] sm:$0xf]
  %v143 = vld [vmem:[%s1 + $0x1d8] sm:$0xf]
  %v144 = vld [vmem:[%s1 + $0x1dc] sm:$0xf]
  %v145 = vld [vmem:[%s1 + $0x1e0] sm:$0xf]
  %v146 = vld [vmem:[%s1 + $0x1e4] sm:$0xf]
  %v147 = vld [vmem:[%s1 + $0x1e8] sm:$0xf]
  %v148 = vld [vmem:[%s1 + $0x1ec] sm:$0xf]
  %v149 = vld [vmem:[%s1 + $0x1f0] sm:$0xf]
  %v150 = vld [vmem:[%s1 + $0x1f4] sm:$0xf]
  %v151 = vld [vmem:[%s1 + $0x1f8] sm:$0xf]
  %v152 = vld [vmem:[%s1 + $0x1fc] sm:$0xf]
  %v153 = vld [vmem:[%s2] sm:$0x1]
  %v155 = vlaneseq
  %v156 = vshrl.u32 %v155, 7
  %v157 = vsub.s32 0, %v156
  %v158 = vrot.slane %v153, %v157
  %v164 = vunpack.c.l.b16 %v21
  %v165 = vunpack.c.h.b16 %v21
  %v166 = vunpack.c.l.b16 %v22
  %v167 = vunpack.c.h.b16 %v22
  %v168 = vunpack.c.l.b16 %v23
  %v169 = vunpack.c.h.b16 %v23
  %v170 = vunpack.c.l.b16 %v24
  %v171 = vunpack.c.h.b16 %v24
  %v172 = vpack.c.b16 %v164, %v164
  %v173 = vpack.c.b16 %v165, %v165
  %v174 = vpack.c.b16 %v166, %v166
  %v175 = vpack.c.b16 %v167, %v167
  %v176 = vpack.c.b16 %v168, %v168
  %v177 = vpack.c.b16 %v169, %v169
  %v178 = vpack.c.b16 %v170, %v170
  %v179 = vpack.c.b16 %v171, %v171
  %v316 = vunpack.c.l.b16 %v25
  %v317 = vunpack.c.l.b16 %v26
  %v318 = vunpack.c.l.b16 %v27
  %v319 = vunpack.c.l.b16 %v28
  %v320 = vunpack.c.l.b16 %v29
  %v321 = vunpack.c.l.b16 %v30
  %v322 = vunpack.c.l.b16 %v31
  %v323 = vunpack.c.l.b16 %v32
  %v324 = vunpack.c.l.b16 %v33
  %v325 = vunpack.c.l.b16 %v34
  %v326 = vunpack.c.l.b16 %v35
  %v327 = vunpack.c.l.b16 %v36
  %v328 = vunpack.c.l.b16 %v37
  %v329 = vunpack.c.l.b16 %v38
  %v330 = vunpack.c.l.b16 %v39
  %v331 = vunpack.c.l.b16 %v40
  %v332 = vunpack.c.l.b16 %v41
  %v333 = vunpack.c.l.b16 %v42
  %v334 = vunpack.c.l.b16 %v43
  %v335 = vunpack.c.l.b16 %v44
  %v336 = vunpack.c.l.b16 %v45
  %v337 = vunpack.c.l.b16 %v46
  %v338 = vunpack.c.l.b16 %v47
  %v339 = vunpack.c.l.b16 %v48
  %v340 = vunpack.c.l.b16 %v49
  %v341 = vunpack.c.l.b16 %v50
  %v342 = vunpack.c.l.b16 %v51
  %v343 = vunpack.c.l.b16 %v52
  %v344 = vunpack.c.l.b16 %v53
  %v345 = vunpack.c.l.b16 %v54
  %v346 = vunpack.c.l.b16 %v55
  %v347 = vunpack.c.l.b16 %v56
  %v348 = vunpack.c.l.b16 %v57
  %v349 = vunpack.c.l.b16 %v58
  %v350 = vunpack.c.l.b16 %v59
  %v351 = vunpack.c.l.b16 %v60
  %v352 = vunpack.c.l.b16 %v61
  %v353 = vunpack.c.l.b16 %v62
  %v354 = vunpack.c.l.b16 %v63
  %v355 = vunpack.c.l.b16 %v64
  %v356 = vunpack.c.l.b16 %v65
  %v357 = vunpack.c.l.b16 %v66
  %v358 = vunpack.c.l.b16 %v67
  %v359 = vunpack.c.l.b16 %v68
  %v360 = vunpack.c.l.b16 %v69
  %v361 = vunpack.c.l.b16 %v70
  %v362 = vunpack.c.l.b16 %v71
  %v363 = vunpack.c.l.b16 %v72
  %v364 = vunpack.c.l.b16 %v73
  %v365 = vunpack.c.l.b16 %v74
  %v366 = vunpack.c.l.b16 %v75
  %v367 = vunpack.c.l.b16 %v76
  %v368 = vunpack.c.l.b16 %v77
  %v369 = vunpack.c.l.b16 %v78
  %v370 = vunpack.c.l.b16 %v79
  %v371 = vunpack.c.l.b16 %v80
  %v372 = vunpack.c.l.b16 %v81
  %v373 = vunpack.c.l.b16 %v82
  %v374 = vunpack.c.l.b16 %v83
  %v375 = vunpack.c.l.b16 %v84
  %v376 = vunpack.c.l.b16 %v85
  %v377 = vunpack.c.l.b16 %v86
  %v378 = vunpack.c.l.b16 %v87
  %v379 = vunpack.c.l.b16 %v88
  %v380 = vunpack.c.l.b16 %v89
  %v381 = vunpack.c.l.b16 %v90
  %v382 = vunpack.c.l.b16 %v91
  %v383 = vunpack.c.l.b16 %v92
  %v384 = vunpack.c.l.b16 %v93
  %v385 = vunpack.c.l.b16 %v94
  %v386 = vunpack.c.l.b16 %v95
  %v387 = vunpack.c.l.b16 %v96
  %v388 = vunpack.c.l.b16 %v97
  %v389 = vunpack.c.l.b16 %v98
  %v390 = vunpack.c.l.b16 %v99
  %v391 = vunpack.c.l.b16 %v100
  %v392 = vunpack.c.l.b16 %v101
  %v393 = vunpack.c.l.b16 %v102
  %v394 = vunpack.c.l.b16 %v103
  %v395 = vunpack.c.l.b16 %v104
  %v396 = vunpack.c.l.b16 %v105
  %v397 = vunpack.c.l.b16 %v106
  %v398 = vunpack.c.l.b16 %v107
  %v399 = vunpack.c.l.b16 %v108
  %v400 = vunpack.c.l.b16 %v109
  %v401 = vunpack.c.l.b16 %v110
  %v402 = vunpack.c.l.b16 %v111
  %v403 = vunpack.c.l.b16 %v112
  %v404 = vunpack.c.l.b16 %v113
  %v405 = vunpack.c.l.b16 %v114
  %v406 = vunpack.c.l.b16 %v115
  %v407 = vunpack.c.l.b16 %v116
  %v408 = vunpack.c.l.b16 %v117
  %v409 = vunpack.c.l.b16 %v118
  %v410 = vunpack.c.l.b16 %v119
  %v411 = vunpack.c.l.b16 %v120
  %v412 = vunpack.c.l.b16 %v121
  %v413 = vunpack.c.l.b16 %v122
  %v414 = vunpack.c.l.b16 %v123
  %v415 = vunpack.c.l.b16 %v124
  %v416 = vunpack.c.l.b16 %v125
  %v417 = vunpack.c.l.b16 %v126
  %v418 = vunpack.c.l.b16 %v127
  %v419 = vunpack.c.l.b16 %v128
  %v420 = vunpack.c.l.b16 %v129
  %v421 = vunpack.c.l.b16 %v130
  %v422 = vunpack.c.l.b16 %v131
  %v423 = vunpack.c.l.b16 %v132
  %v424 = vunpack.c.l.b16 %v133
  %v425 = vunpack.c.l.b16 %v134
  %v426 = vunpack.c.l.b16 %v135
  %v427 = vunpack.c.l.b16 %v136
  %v428 = vunpack.c.l.b16 %v137
  %v429 = vunpack.c.l.b16 %v138
  %v430 = vunpack.c.l.b16 %v139
  %v431 = vunpack.c.l.b16 %v140
  %v432 = vunpack.c.l.b16 %v141
  %v433 = vunpack.c.l.b16 %v142
  %v434 = vunpack.c.l.b16 %v143
  %v435 = vunpack.c.l.b16 %v144
  %v436 = vunpack.c.l.b16 %v145
  %v437 = vunpack.c.l.b16 %v146
  %v438 = vunpack.c.l.b16 %v147
  %v439 = vunpack.c.l.b16 %v148
  %v440 = vunpack.c.l.b16 %v149
  %v441 = vunpack.c.l.b16 %v150
  %v442 = vunpack.c.l.b16 %v151
  %v443 = vunpack.c.l.b16 %v152
  %v444 = vpack.c.b16 %v317, %v316
  %v445 = vpack.c.b16 %v319, %v318
  %v446 = vpack.c.b16 %v321, %v320
  %v447 = vpack.c.b16 %v323, %v322
  %v448 = vpack.c.b16 %v325, %v324
  %v449 = vpack.c.b16 %v327, %v326
  %v450 = vpack.c.b16 %v329, %v328
  %v451 = vpack.c.b16 %v331, %v330
  %v452 = vpack.c.b16 %v333, %v332
  %v453 = vpack.c.b16 %v335, %v334
  %v454 = vpack.c.b16 %v337, %v336
  %v455 = vpack.c.b16 %v339, %v338
  %v456 = vpack.c.b16 %v341, %v340
  %v457 = vpack.c.b16 %v343, %v342
  %v458 = vpack.c.b16 %v345, %v344
  %v459 = vpack.c.b16 %v347, %v346
  %v460 = vpack.c.b16 %v349, %v348
  %v461 = vpack.c.b16 %v351, %v350
  %v462 = vpack.c.b16 %v353, %v352
  %v463 = vpack.c.b16 %v355, %v354
  %v464 = vpack.c.b16 %v357, %v356
  %v465 = vpack.c.b16 %v359, %v358
  %v466 = vpack.c.b16 %v361, %v360
  %v467 = vpack.c.b16 %v363, %v362
  %v468 = vpack.c.b16 %v365, %v364
  %v469 = vpack.c.b16 %v367, %v366
  %v470 = vpack.c.b16 %v369, %v368
  %v471 = vpack.c.b16 %v371, %v370
  %v472 = vpack.c.b16 %v373, %v372
  %v473 = vpack.c.b16 %v375, %v374
  %v474 = vpack.c.b16 %v377, %v376
  %v475 = vpack.c.b16 %v379, %v378
  %v476 = vpack.c.b16 %v381, %v380
  %v477 = vpack.c.b16 %v383, %v382
  %v478 = vpack.c.b16 %v385, %v384
  %v479 = vpack.c.b16 %v387, %v386
  %v480 = vpack.c.b16 %v389, %v388
  %v481 = vpack.c.b16 %v391, %v390
  %v482 = vpack.c.b16 %v393, %v392
  %v483 = vpack.c.b16 %v395, %v394
  %v484 = vpack.c.b16 %v397, %v396
  %v485 = vpack.c.b16 %v399, %v398
  %v486 = vpack.c.b16 %v401, %v400
  %v487 = vpack.c.b16 %v403, %v402
  %v488 = vpack.c.b16 %v405, %v404
  %v489 = vpack.c.b16 %v407, %v406
  %v490 = vpack.c.b16 %v409, %v408
  %v491 = vpack.c.b16 %v411, %v410
  %v492 = vpack.c.b16 %v413, %v412
  %v493 = vpack.c.b16 %v415, %v414
  %v494 = vpack.c.b16 %v417, %v416
  %v495 = vpack.c.b16 %v419, %v418
  %v496 = vpack.c.b16 %v421, %v420
  %v497 = vpack.c.b16 %v423, %v422
  %v498 = vpack.c.b16 %v425, %v424
  %v499 = vpack.c.b16 %v427, %v426
  %v500 = vpack.c.b16 %v429, %v428
  %v501 = vpack.c.b16 %v431, %v430
  %v502 = vpack.c.b16 %v433, %v432
  %v503 = vpack.c.b16 %v435, %v434
  %v504 = vpack.c.b16 %v437, %v436
  %v505 = vpack.c.b16 %v439, %v438
  %v506 = vpack.c.b16 %v441, %v440
  %v507 = vpack.c.b16 %v443, %v442
  %572 = vmatprep.subr.bf16.mxu0 0
  %573 = vmatpush1.bf16.msra.mxu0 %v444
  %574 = vmatprep.subr.bf16.mxu0 0
  %575 = vmatpush1.bf16.msra.mxu0 %v445
  %576 = vmatprep.subr.bf16.mxu0 0
  %577 = vmatpush1.bf16.msra.mxu0 %v446
  %578 = vmatprep.subr.bf16.mxu0 0
  %579 = vmatpush1.bf16.msra.mxu0 %v447
  %580 = vmatprep.subr.bf16.mxu0 0
  %581 = vmatpush1.bf16.msra.mxu0 %v448
  %582 = vmatprep.subr.bf16.mxu0 0
  %583 = vmatpush1.bf16.msra.mxu0 %v449
  %584 = vmatprep.subr.bf16.mxu0 0
  %585 = vmatpush1.bf16.msra.mxu0 %v450
  %586 = vmatprep.subr.bf16.mxu0 0
  %587 = vmatpush1.bf16.msra.mxu0 %v451
  %588 = vmatprep.subr.bf16.mxu0 0
  %589 = vmatpush1.bf16.msra.mxu0 %v452
  %590 = vmatprep.subr.bf16.mxu0 0
  %591 = vmatpush1.bf16.msra.mxu0 %v453
  %592 = vmatprep.subr.bf16.mxu0 0
  %593 = vmatpush1.bf16.msra.mxu0 %v454
  %594 = vmatprep.subr.bf16.mxu0 0
  %595 = vmatpush1.bf16.msra.mxu0 %v455
  %596 = vmatprep.subr.bf16.mxu0 0
  %597 = vmatpush1.bf16.msra.mxu0 %v456
  %598 = vmatprep.subr.bf16.mxu0 0
  %599 = vmatpush1.bf16.msra.mxu0 %v457
  %600 = vmatprep.subr.bf16.mxu0 0
  %601 = vmatpush1.bf16.msra.mxu0 %v458
  %602 = vmatprep.subr.bf16.mxu0 0
  %603 = vmatpush1.bf16.msra.mxu0 %v459
  %604 = vmatprep.mubr.bf16.mxu0 %v173
  %605 = vmatmul.mubr.bf16.gmra.mrb[0].mxu0 %v172
  %v606 = vpop.f32.mrb[0].mxu0
  %v607 = vadd.f32 %v158, %v606
  %v608 = vpop.f32.mrb[0].mxu0
  %v609 = vpop.f32.mrb[0].mxu0
  %v610 = vpop.f32.mrb[0].mxu0
  %611 = vdwg.mxu0
  %612 = vmatprep.subr.bf16.mxu0 0
  %613 = vmatpush1.bf16.msra.mxu0 %v460
  %614 = vmatprep.subr.bf16.mxu0 0
  %615 = vmatpush1.bf16.msra.mxu0 %v461
  %616 = vmatprep.subr.bf16.mxu0 0
  %617 = vmatpush1.bf16.msra.mxu0 %v462
  %618 = vmatprep.subr.bf16.mxu0 0
  %619 = vmatpush1.bf16.msra.mxu0 %v463
  %620 = vmatprep.subr.bf16.mxu0 0
  %621 = vmatpush1.bf16.msra.mxu0 %v464
  %622 = vmatprep.subr.bf16.mxu0 0
  %623 = vmatpush1.bf16.msra.mxu0 %v465
  %624 = vmatprep.subr.bf16.mxu0 0
  %625 = vmatpush1.bf16.msra.mxu0 %v466
  %626 = vmatprep.subr.bf16.mxu0 0
  %627 = vmatpush1.bf16.msra.mxu0 %v467
  %628 = vmatprep.subr.bf16.mxu0 0
  %629 = vmatpush1.bf16.msra.mxu0 %v468
  %630 = vmatprep.subr.bf16.mxu0 0
  %631 = vmatpush1.bf16.msra.mxu0 %v469
  %632 = vmatprep.subr.bf16.mxu0 0
  %633 = vmatpush1.bf16.msra.mxu0 %v470
  %634 = vmatprep.subr.bf16.mxu0 0
  %635 = vmatpush1.bf16.msra.mxu0 %v471
  %636 = vmatprep.subr.bf16.mxu0 0
  %637 = vmatpush1.bf16.msra.mxu0 %v472
  %638 = vmatprep.subr.bf16.mxu0 0
  %639 = vmatpush1.bf16.msra.mxu0 %v473
  %640 = vmatprep.subr.bf16.mxu0 0
  %641 = vmatpush1.bf16.msra.mxu0 %v474
  %642 = vmatprep.subr.bf16.mxu0 0
  %643 = vmatpush1.bf16.msra.mxu0 %v475
  %644 = vmatprep.mubr.bf16.mxu0 %v175
  %645 = vmatmul.mubr.bf16.gmra.mrb[0].mxu0 %v174
  %v646 = vpop.f32.mrb[0].mxu0
  %v647 = vadd.f32 %v607, %v646
  %v648 = vpop.f32.mrb[0].mxu0
  %v649 = vpop.f32.mrb[0].mxu0
  %v650 = vpop.f32.mrb[0].mxu0
  %651 = vdwg.mxu0
  %652 = vmatprep.subr.bf16.mxu0 0
  %653 = vmatpush1.bf16.msra.mxu0 %v476
  %654 = vmatprep.subr.bf16.mxu0 0
  %655 = vmatpush1.bf16.msra.mxu0 %v477
  %656 = vmatprep.subr.bf16.mxu0 0
  %657 = vmatpush1.bf16.msra.mxu0 %v478
  %658 = vmatprep.subr.bf16.mxu0 0
  %659 = vmatpush1.bf16.msra.mxu0 %v479
  %660 = vmatprep.subr.bf16.mxu0 0
  %661 = vmatpush1.bf16.msra.mxu0 %v480
  %662 = vmatprep.subr.bf16.mxu0 0
  %663 = vmatpush1.bf16.msra.mxu0 %v481
  %664 = vmatprep.subr.bf16.mxu0 0
  %665 = vmatpush1.bf16.msra.mxu0 %v482
  %666 = vmatprep.subr.bf16.mxu0 0
  %667 = vmatpush1.bf16.msra.mxu0 %v483
  %668 = vmatprep.subr.bf16.mxu0 0
  %669 = vmatpush1.bf16.msra.mxu0 %v484
  %670 = vmatprep.subr.bf16.mxu0 0
  %671 = vmatpush1.bf16.msra.mxu0 %v485
  %672 = vmatprep.subr.bf16.mxu0 0
  %673 = vmatpush1.bf16.msra.mxu0 %v486
  %674 = vmatprep.subr.bf16.mxu0 0
  %675 = vmatpush1.bf16.msra.mxu0 %v487
  %676 = vmatprep.subr.bf16.mxu0 0
  %677 = vmatpush1.bf16.msra.mxu0 %v488
  %678 = vmatprep.subr.bf16.mxu0 0
  %679 = vmatpush1.bf16.msra.mxu0 %v489
  %680 = vmatprep.subr.bf16.mxu0 0
  %681 = vmatpush1.bf16.msra.mxu0 %v490
  %682 = vmatprep.subr.bf16.mxu0 0
  %683 = vmatpush1.bf16.msra.mxu0 %v491
  %684 = vmatprep.mubr.bf16.mxu0 %v177
  %685 = vmatmul.mubr.bf16.gmra.mrb[0].mxu0 %v176
  %v686 = vpop.f32.mrb[0].mxu0
  %v687 = vadd.f32 %v647, %v686
  %v688 = vpop.f32.mrb[0].mxu0
  %v689 = vpop.f32.mrb[0].mxu0
  %v690 = vpop.f32.mrb[0].mxu0
  %691 = vdwg.mxu0
  %692 = vmatprep.subr.bf16.mxu0 0
  %693 = vmatpush1.bf16.msra.mxu0 %v492
  %694 = vmatprep.subr.bf16.mxu0 0
  %695 = vmatpush1.bf16.msra.mxu0 %v493
  %696 = vmatprep.subr.bf16.mxu0 0
  %697 = vmatpush1.bf16.msra.mxu0 %v494
  %698 = vmatprep.subr.bf16.mxu0 0
  %699 = vmatpush1.bf16.msra.mxu0 %v495
  %700 = vmatprep.subr.bf16.mxu0 0
  %701 = vmatpush1.bf16.msra.mxu0 %v496
  %702 = vmatprep.subr.bf16.mxu0 0
  %703 = vmatpush1.bf16.msra.mxu0 %v497
  %704 = vmatprep.subr.bf16.mxu0 0
  %705 = vmatpush1.bf16.msra.mxu0 %v498
  %706 = vmatprep.subr.bf16.mxu0 0
  %707 = vmatpush1.bf16.msra.mxu0 %v499
  %708 = vmatprep.subr.bf16.mxu0 0
  %709 = vmatpush1.bf16.msra.mxu0 %v500
  %710 = vmatprep.subr.bf16.mxu0 0
  %711 = vmatpush1.bf16.msra.mxu0 %v501
  %712 = vmatprep.subr.bf16.mxu0 0
  %713 = vmatpush1.bf16.msra.mxu0 %v502
  %714 = vmatprep.subr.bf16.mxu0 0
  %715 = vmatpush1.bf16.msra.mxu0 %v503
  %716 = vmatprep.subr.bf16.mxu0 0
  %717 = vmatpush1.bf16.msra.mxu0 %v504
  %718 = vmatprep.subr.bf16.mxu0 0
  %719 = vmatpush1.bf16.msra.mxu0 %v505
  %720 = vmatprep.subr.bf16.mxu0 0
  %721 = vmatpush1.bf16.msra.mxu0 %v506
  %722 = vmatprep.subr.bf16.mxu0 0
  %723 = vmatpush1.bf16.msra.mxu0 %v507
  %724 = vmatprep.mubr.bf16.mxu0 %v179
  %725 = vmatmul.mubr.bf16.gmra.mrb[0].mxu0 %v178
  %v726 = vpop.f32.mrb[0].mxu0
  %v727 = vadd.f32 %v687, %v726
  %v728 = vpop.f32.mrb[0].mxu0
  %v729 = vpop.f32.mrb[0].mxu0
  %v730 = vpop.f32.mrb[0].mxu0
  %731 = vdwg.mxu0
  %v732 = vld [vmem:[%s3] sm:$0xff]
  %v733 = vmul.f32 %v727, 0.5
  %v734 = vmul.f32 %v733, 1.442695
  %v735 = vpow.pop %v734
  %737 = vrot.lane.b32.xlu0 %v735, 96
  %v738 = vpop.permute.xlu0 %737
  %v740 = vmul.f32 %v732, %v738
  %v741 = vadd.f32 %v727, %v740
  %vm742 = vcmask 261120
  %743 = vst.msk [vmem:[%s4] sm:$0xff] %vm742, %v727
  %745 = vrot.lane.b32.xlu0 %v727, 96
  %v746 = vpop.permute.xlu0 %745
  %748 = vst.msk [vmem:[%s5] sm:$0xff] %vm742, %v746
  %749 = vst.msk [vmem:[%s6] sm:$0xff] %vm742, %v741
  // Predicated region
  $region18: #{encoder_forward.9} parent=0 // pred_check
    _
  $region19: #{encoder_forward.9} parent=0 // pred_check_branch
    %751 = sbr.rel (0) target = $region21
  $region20: #{encoder_forward.9} parent=0 // pred_region
    _
  $region21: #{encoder_forward.9} parent=0 // pred_fallthru
    _
  // Predicated region
  $region22: #{encoder_forward.9} parent=0 // pred_check
    _
  $region23: #{encoder_forward.9} parent=0 // pred_check_branch
    %753 = sbr.rel (0) target = $region25
  $region24: #{encoder_forward.9} parent=0 // pred_region
    _
  $region25: #{encoder_forward.9} parent=0 // pred_fallthru
    _
  // Predicated region
  $region26: #{encoder_forward.9} parent=0 // pred_check
    _
  $region27: #{encoder_forward.9} parent=0 // pred_check_branch
    %755 = sbr.rel (0) target = $region29
  $region28: #{encoder_forward.9} parent=0 // pred_region
    _
  $region29: #{encoder_forward.9} parent=0 // pred_fallthru
    _
  // Predicated region
  $region30: #{encoder_forward.9} parent=0 // pred_check
    _
  $region31: #{encoder_forward.9} parent=0 // pred_check_branch
    %757 = sbr.rel (0) target = $region33
  $region32: #{encoder_forward.9} parent=0 // pred_region
    _
  $region33: #{encoder_forward.9} parent=0 // pred_fallthru
    _
  // Predicated region
  $region34: #{encoder_forward.9} parent=0 // pred_check
    _
  $region35: #{encoder_forward.9} parent=0 // pred_check_branch
    %759 = sbr.rel (0) target = $region37
  $region36: #{encoder_forward.9} parent=0 // pred_region
    _
  $region37: #{encoder_forward.9} parent=0 // pred_fallthru
    _
  // Predicated region
  $region38: #{encoder_forward.9} parent=0 // pred_check
    _
  $region39: #{encoder_forward.9} parent=0 // pred_check_branch
    %761 = sbr.rel (0) target = $region41
  $region40: #{encoder_forward.9} parent=0 // pred_region
    _
  $region41: #{encoder_forward.9} parent=0 // pred_fallthru
    _

</llo_original>
